<compile_context>
chip_gen: v6e
topology: v6e:2x2x1
jax: 0.10.0
libtpu: 0.0.40
codegen_flags: <defaults>
</compile_context>

<pallas_src>
import functools
import math

import jax
import jax.numpy as jnp
from jax.experimental import pallas as pl
from jax.experimental.pallas import tpu as pltpu


# ---------------------------------------------------------------------------
# Small, module-consistent configuration
# ---------------------------------------------------------------------------
BATCH = 2
SEQ = 8
HIDDEN = 32          # config.hidden_size
NUM_HEADS = 4        # config.transformer['num_heads']
HEAD_DIM = HIDDEN // NUM_HEADS
MLP_DIM = 64         # config.transformer['mlp_dim']
NUM_LAYERS = 2       # config.transformer['num_layers']
LN_EPS = 1e-6


# ---------------------------------------------------------------------------
# Shared math helpers (used both inside the Pallas kernel and in the reference)
# ---------------------------------------------------------------------------
def _layer_norm(x, g, b, eps=LN_EPS):
    mu = jnp.mean(x, axis=-1, keepdims=True)
    var = jnp.mean(jnp.square(x - mu), axis=-1, keepdims=True)
    return (x - mu) * jax.lax.rsqrt(var + eps) * g + b


def _gelu_tanh(x):
    # TODO(synk): PyTorch F.gelu default is the exact erf GELU; the tanh
    # approximation is used here (tanh is a Mosaic-safe EUP transcendental).
    c = math.sqrt(2.0 / math.pi)
    return 0.5 * x * (1.0 + jnp.tanh(c * (x + 0.044715 * x * x * x)))


# ---------------------------------------------------------------------------
# Fused encoder kernel: one grid step == one transformer Block
# ---------------------------------------------------------------------------
def _encoder_kernel(x_ref,
                    ln1g_ref, ln1b_ref,
                    wq_ref, bq_ref, wk_ref, bk_ref, wv_ref, bv_ref,
                    wo_ref, bo_ref,
                    ln2g_ref, ln2b_ref,
                    w1_ref, b1_ref, w2_ref, b2_ref,
                    encg_ref, encb_ref,
                    o_ref,
                    *, num_heads, head_dim):
    layer = pl.program_id(0)
    last = pl.num_programs(0) - 1

    # Seed the VMEM-resident carried state with the input on the first step.
    @pl.when(layer == 0)
    def _():
        o_ref[...] = x_ref[...]

    x = o_ref[...]                                   # (B, S, H), f32, in VMEM
    b, s, hdim = x.shape

    # ------------------ attention sub-block (pre-LN) ------------------------
    xn = _layer_norm(x, ln1g_ref[...], ln1b_ref[...])      # (B, S, H)
    xn2d = xn.reshape(b * s, hdim)                          # (B*S, H)
    inv_sqrt_d = 1.0 / math.sqrt(head_dim)

    attn_out = jnp.zeros((b * s, hdim), jnp.float32)
    for h in range(num_heads):                              # static unroll
        q = (jnp.dot(xn2d, wq_ref[0, h], preferred_element_type=jnp.float32)
             + bq_ref[0, h]).reshape(b, s, head_dim)
        k = (jnp.dot(xn2d, wk_ref[0, h], preferred_element_type=jnp.float32)
             + bk_ref[0, h]).reshape(b, s, head_dim)
        v = (jnp.dot(xn2d, wv_ref[0, h], preferred_element_type=jnp.float32)
             + bv_ref[0, h]).reshape(b, s, head_dim)

        sc = jnp.einsum('bqd,bkd->bqk', q, k,
                        preferred_element_type=jnp.float32) * inv_sqrt_d
        sc = sc - jnp.max(sc, axis=-1, keepdims=True)       # stable softmax
        p = jnp.exp(sc)
        p = p / jnp.sum(p, axis=-1, keepdims=True)

        ctx = jnp.einsum('bqk,bkd->bqd', p, v,
                         preferred_element_type=jnp.float32)
        # out-projection is accumulated per head (avoids head concat)
        attn_out = attn_out + jnp.dot(ctx.reshape(b * s, head_dim),
                                      wo_ref[0, h],
                                      preferred_element_type=jnp.float32)

    x = x + attn_out.reshape(b, s, hdim) + bo_ref[...]      # residual add

    # ------------------ MLP sub-block (pre-LN) -------------------------------
    xn2 = _layer_norm(x, ln2g_ref[...], ln2b_ref[...])
    hmid = (jnp.dot(xn2.reshape(b * s, hdim), w1_ref[0],
                    preferred_element_type=jnp.float32) + b1_ref[0])
    hmid = _gelu_tanh(hmid)
    ffn = (jnp.dot(hmid, w2_ref[0],
                   preferred_element_type=jnp.float32) + b2_ref[0])
    x = x + ffn.reshape(b, s, hdim)                          # residual add

    # ------------------ write back (fuse final encoder_norm) ----------------
    @pl.when(layer < last)
    def _():
        o_ref[...] = x

    @pl.when(layer == last)
    def _():
        o_ref[...] = _layer_norm(x, encg_ref[...], encb_ref[...])


# ---------------------------------------------------------------------------
# Wrapper: one pallas_call for the whole Encoder
# ---------------------------------------------------------------------------
def encoder_forward(x, params):
    """x: (B, S, H) f32 hidden states. Returns encoded (B, S, H)."""
    b, s, hdim = x.shape
    num_layers = params['wq'].shape[0]

    kernel = functools.partial(_encoder_kernel,
                               num_heads=NUM_HEADS, head_dim=HEAD_DIM)

    def full_spec(shape):
        # whole array, resident across the layer grid
        return pl.BlockSpec(shape, lambda l: (0,) * len(shape))

    def per_layer_spec(shape):
        # one layer slice per grid step: block (1, ...), index_map (l, 0, ...)
        blk = (1,) + tuple(shape[1:])
        return pl.BlockSpec(blk, lambda l: (l,) + (0,) * (len(shape) - 1))

    in_specs = [
        full_spec((b, s, hdim)),                                    # x
        per_layer_spec(params['ln1_g'].shape),                      # (L,1,H)
        per_layer_spec(params['ln1_b'].shape),
        per_layer_spec(params['wq'].shape),                         # (L,nh,H,hd)
        per_layer_spec(params['bq'].shape),                         # (L,nh,hd)
        per_layer_spec(params['wk'].shape),
        per_layer_spec(params['bk'].shape),
        per_layer_spec(params['wv'].shape),
        per_layer_spec(params['bv'].shape),
        per_layer_spec(params['wo'].shape),                         # (L,nh,hd,H)
        per_layer_spec(params['bo'].shape),                         # (L,1,H)
        per_layer_spec(params['ln2_g'].shape),
        per_layer_spec(params['ln2_b'].shape),
        per_layer_spec(params['w1'].shape),                         # (L,H,M)
        per_layer_spec(params['b1'].shape),                         # (L,1,M)
        per_layer_spec(params['w2'].shape),                         # (L,M,H)
        per_layer_spec(params['b2'].shape),                         # (L,1,H)
        full_spec(params['enc_g'].shape),                           # (1,H)
        full_spec(params['enc_b'].shape),
    ]

    return pl.pallas_call(
        kernel,
        out_shape=jax.ShapeDtypeStruct((b, s, hdim), jnp.float32),
        grid_spec=pltpu.PrefetchScalarGridSpec(
            num_scalar_prefetch=0,
            grid=(num_layers,),
            in_specs=in_specs,
            out_specs=full_spec((b, s, hdim)),
        ),
        compiler_params=pltpu.CompilerParams(
            # layers are strictly sequential (state carried in VMEM)
            dimension_semantics=("arbitrary",),
            # small footprint; safely below v7x's 64 MiB per-core VMEM
            vmem_limit_bytes=32 * 1024 * 1024,
        ),
    )(x,
      params['ln1_g'], params['ln1_b'],
      params['wq'], params['bq'], params['wk'], params['bk'],
      params['wv'], params['bv'], params['wo'], params['bo'],
      params['ln2_g'], params['ln2_b'],
      params['w1'], params['b1'], params['w2'], params['b2'],
      params['enc_g'], params['enc_b'])


# ---------------------------------------------------------------------------
# Deterministic synthetic parameters (weights pre-split/stacked ONCE here)
# ---------------------------------------------------------------------------
def init_params(key):
    kiter = iter(jax.random.split(key, 64))

    def nxt():
        return next(kiter)

    def dense(cin, cout):
        w = jax.random.normal(nxt(), (cin, cout), jnp.float32) / math.sqrt(cin)
        bias = 0.02 * jax.random.normal(nxt(), (cout,), jnp.float32)
        return w, bias

    def layer_norm_params(c):
        g = 1.0 + 0.1 * jax.random.normal(nxt(), (c,), jnp.float32)
        bb = 0.1 * jax.random.normal(nxt(), (c,), jnp.float32)
        return g.reshape(1, c), bb.reshape(1, c)

    acc = {k: [] for k in ('ln1_g', 'ln1_b', 'wq', 'bq', 'wk', 'bk', 'wv', 'bv',
                           'wo', 'bo', 'ln2_g', 'ln2_b', 'w1', 'b1', 'w2', 'b2')}
    for _ in range(NUM_LAYERS):
        g1, be1 = layer_norm_params(HIDDEN)
        wq, bq = dense(HIDDEN, HIDDEN)
        wk, bk = dense(HIDDEN, HIDDEN)
        wv, bv = dense(HIDDEN, HIDDEN)
        wo, bo = dense(HIDDEN, HIDDEN)
        g2, be2 = layer_norm_params(HIDDEN)
        w1, b1 = dense(HIDDEN, MLP_DIM)
        w2, b2 = dense(MLP_DIM, HIDDEN)

        acc['ln1_g'].append(g1); acc['ln1_b'].append(be1)
        # head-split once at init (column index c -> head c//hd, dim c%hd)
        acc['wq'].append(wq.reshape(HIDDEN, NUM_HEADS, HEAD_DIM).transpose(1, 0, 2))
        acc['bq'].append(bq.reshape(NUM_HEADS, HEAD_DIM))
        acc['wk'].append(wk.reshape(HIDDEN, NUM_HEADS, HEAD_DIM).transpose(1, 0, 2))
        acc['bk'].append(bk.reshape(NUM_HEADS, HEAD_DIM))
        acc['wv'].append(wv.reshape(HIDDEN, NUM_HEADS, HEAD_DIM).transpose(1, 0, 2))
        acc['bv'].append(bv.reshape(NUM_HEADS, HEAD_DIM))
        acc['wo'].append(wo.reshape(NUM_HEADS, HEAD_DIM, HIDDEN))
        acc['bo'].append(bo.reshape(1, HIDDEN))
        acc['ln2_g'].append(g2); acc['ln2_b'].append(be2)
        acc['w1'].append(w1); acc['b1'].append(b1.reshape(1, MLP_DIM))
        acc['w2'].append(w2); acc['b2'].append(b2.reshape(1, HIDDEN))

    params = {k: jnp.stack(v, axis=0) for k, v in acc.items()}
    eg, eb = layer_norm_params(HIDDEN)
    params['enc_g'] = eg
    params['enc_b'] = eb
    return params


# ---------------------------------------------------------------------------
# Pure-JAX reference (same math, same parameters) for correctness checking
# ---------------------------------------------------------------------------
def encoder_reference(x, params):
    b, s, hdim = x.shape
    num_layers = params['wq'].shape[0]
    for l in range(num_layers):
        res = x
        xn = _layer_norm(x, params['ln1_g'][l, 0], params['ln1_b'][l, 0])
        xn2d = xn.reshape(b * s, hdim)
        attn = jnp.zeros((b * s, hdim), jnp.float32)
        for h in range(NUM_HEADS):
            q = (xn2d @ params['wq'][l, h] + params['bq'][l, h]).reshape(b, s, HEAD_DIM)
            k = (xn2d @ params['wk'][l, h] + params['bk'][l, h]).reshape(b, s, HEAD_DIM)
            v = (xn2d @ params['wv'][l, h] + params['bv'][l, h]).reshape(b, s, HEAD_DIM)
            sc = jnp.einsum('bqd,bkd->bqk', q, k) / math.sqrt(HEAD_DIM)
            p = jax.nn.softmax(sc, axis=-1)
            ctx = jnp.einsum('bqk,bkd->bqd', p, v)
            attn = attn + ctx.reshape(b * s, HEAD_DIM) @ params['wo'][l, h]
        x = res + attn.reshape(b, s, hdim) + params['bo'][l, 0]

        res = x
        xn2 = _layer_norm(x, params['ln2_g'][l, 0], params['ln2_b'][l, 0])
        mid = _gelu_tanh(xn2.reshape(b * s, hdim) @ params['w1'][l] + params['b1'][l, 0])
        ffn = (mid @ params['w2'][l] + params['b2'][l, 0]).reshape(b, s, hdim)
        x = res + ffn
    return _layer_norm(x, params['enc_g'][0], params['enc_b'][0])


# ---------------------------------------------------------------------------
if __name__ == "__main__":
    key = jax.random.PRNGKey(0)
    k_param, k_in = jax.random.split(key)

    params = init_params(k_param)
    # Encoder.forward input: hidden_states (batch, seq, hidden)
    x = jax.random.normal(k_in, (BATCH, SEQ, HIDDEN), jnp.float32)

    out = jax.jit(encoder_forward)(x, params)
    out = jax.block_until_ready(out)

    assert out.shape == (BATCH, SEQ, HIDDEN), out.shape
    assert bool(jnp.all(jnp.isfinite(out)))

    with jax.default_matmul_precision("highest"):
        ref = jax.block_until_ready(encoder_reference(x, params))
    max_err = float(jnp.max(jnp.abs(out - ref)))
    assert max_err < 5e-2, f"max abs error vs reference: {max_err}"

    print("KERNEL_OK")
</pallas_src>

<mosaic_0001>
module attributes {stable_mosaic.version = 11 : i64} {
  func.func @_encoder_kernel(%arg0: i32, %arg1: memref<2x8x32xf32, #tpu.memory_space<vmem>>, %arg2: memref<1x1x32xf32, #tpu.memory_space<vmem>>, %arg3: memref<1x1x32xf32, #tpu.memory_space<vmem>>, %arg4: memref<1x4x32x8xf32, #tpu.memory_space<vmem>>, %arg5: memref<1x4x8xf32, #tpu.memory_space<vmem>>, %arg6: memref<1x4x32x8xf32, #tpu.memory_space<vmem>>, %arg7: memref<1x4x8xf32, #tpu.memory_space<vmem>>, %arg8: memref<1x4x32x8xf32, #tpu.memory_space<vmem>>, %arg9: memref<1x4x8xf32, #tpu.memory_space<vmem>>, %arg10: memref<1x4x8x32xf32, #tpu.memory_space<vmem>>, %arg11: memref<1x1x32xf32, #tpu.memory_space<vmem>>, %arg12: memref<1x1x32xf32, #tpu.memory_space<vmem>>, %arg13: memref<1x1x32xf32, #tpu.memory_space<vmem>>, %arg14: memref<1x32x64xf32, #tpu.memory_space<vmem>>, %arg15: memref<1x1x64xf32, #tpu.memory_space<vmem>>, %arg16: memref<1x64x32xf32, #tpu.memory_space<vmem>>, %arg17: memref<1x1x32xf32, #tpu.memory_space<vmem>>, %arg18: memref<1x32xf32, #tpu.memory_space<vmem>>, %arg19: memref<1x32xf32, #tpu.memory_space<vmem>>, %arg20: memref<2x8x32xf32, #tpu.memory_space<vmem>>) attributes {dimension_semantics = [#tpu.dimension_semantics<arbitrary>], iteration_bounds = array<i64: 2>, scalar_prefetch = 0 : i64, scratch_operands = 0 : i64, tpu.core_type = #tpu.core_type<tc>, window_params = [{pipeline_mode = #tpu.pipeline_mode<synchronous>, transform_indices = @transform_0, window_bounds = array<i64: 2, 8, 32>}, {transform_indices = @transform_1, window_bounds = array<i64: 1, 1, 32>}, {transform_indices = @transform_2, window_bounds = array<i64: 1, 1, 32>}, {transform_indices = @transform_3, window_bounds = array<i64: 1, 4, 32, 8>}, {transform_indices = @transform_4, window_bounds = array<i64: 1, 4, 8>}, {transform_indices = @transform_5, window_bounds = array<i64: 1, 4, 32, 8>}, {transform_indices = @transform_6, window_bounds = array<i64: 1, 4, 8>}, {transform_indices = @transform_7, window_bounds = array<i64: 1, 4, 32, 8>}, {transform_indices = @transform_8, window_bounds = array<i64: 1, 4, 8>}, {transform_indices = @transform_9, window_bounds = array<i64: 1, 4, 8, 32>}, {transform_indices = @transform_10, window_bounds = array<i64: 1, 1, 32>}, {transform_indices = @transform_11, window_bounds = array<i64: 1, 1, 32>}, {transform_indices = @transform_12, window_bounds = array<i64: 1, 1, 32>}, {transform_indices = @transform_13, window_bounds = array<i64: 1, 32, 64>}, {transform_indices = @transform_14, window_bounds = array<i64: 1, 1, 64>}, {transform_indices = @transform_15, window_bounds = array<i64: 1, 64, 32>}, {transform_indices = @transform_16, window_bounds = array<i64: 1, 1, 32>}, {pipeline_mode = #tpu.pipeline_mode<synchronous>, transform_indices = @transform_17, window_bounds = array<i64: 1, 32>}, {pipeline_mode = #tpu.pipeline_mode<synchronous>, transform_indices = @transform_18, window_bounds = array<i64: 1, 32>}, {pipeline_mode = #tpu.pipeline_mode<synchronous>, transform_indices = @transform_19, window_bounds = array<i64: 2, 8, 32>}]} {
    %c0_i32 = arith.constant 0 : i32
    %0 = arith.cmpi eq, %arg0, %c0_i32 : i32
    %1 = arith.extui %0 : i1 to i32
    %c0_i32_0 = arith.constant 0 : i32
    %2 = arith.cmpi ne, %1, %c0_i32_0 : i32
    scf.if %2 {
      %c0_182 = arith.constant 0 : index
      %c0_183 = arith.constant 0 : index
      %c0_184 = arith.constant 0 : index
      %275 = vector.load %arg1[%c0_182, %c0_183, %c0_184] : memref<2x8x32xf32, #tpu.memory_space<vmem>>, vector<2x8x32xf32>
      %c0_185 = arith.constant 0 : index
      %c0_186 = arith.constant 0 : index
      %c0_187 = arith.constant 0 : index
      %276 = vector.load %arg20[%c0_185, %c0_186, %c0_187] : memref<2x8x32xf32, #tpu.memory_space<vmem>>, vector<2x8x32xf32>
      tpu.vector_store %arg20[%c0_185, %c0_186, %c0_187], %275 {strides = array<i32>} : memref<2x8x32xf32, #tpu.memory_space<vmem>>, vector<2x8x32xf32>,
    } else {
    }
    %c0 = arith.constant 0 : index
    %c0_1 = arith.constant 0 : index
    %c0_2 = arith.constant 0 : index
    %3 = vector.load %arg20[%c0, %c0_1, %c0_2] : memref<2x8x32xf32, #tpu.memory_space<vmem>>, vector<2x8x32xf32>
    %c0_3 = arith.constant 0 : index
    %c0_4 = arith.constant 0 : index
    %c0_5 = arith.constant 0 : index
    %4 = vector.load %arg2[%c0_3, %c0_4, %c0_5] : memref<1x1x32xf32, #tpu.memory_space<vmem>>, vector<1x1x32xf32>
    %c0_6 = arith.constant 0 : index
    %c0_7 = arith.constant 0 : index
    %c0_8 = arith.constant 0 : index
    %5 = vector.load %arg3[%c0_6, %c0_7, %c0_8] : memref<1x1x32xf32, #tpu.memory_space<vmem>>, vector<1x1x32xf32>
    %cst = arith.constant dense<0.000000e+00> : vector<2x8xf32>
    %6 = vector.multi_reduction <add>, %3, %cst [2] : vector<2x8x32xf32> to vector<2x8xf32>
    %7 = vector.shape_cast %6 : vector<2x8xf32> to vector<2x8x1xf32>
    %cst_9 = arith.constant 3.200000e+01 : f32
    %8 = vector.broadcast %cst_9 : f32 to vector<2x8x1xf32>
    %9 = arith.divf %7, %8 : vector<2x8x1xf32>
    %10 = vector.broadcast %9 : vector<2x8x1xf32> to vector<2x8x32xf32>
    %11 = arith.subf %3, %10 : vector<2x8x32xf32>
    %12 = arith.mulf %11, %11 : vector<2x8x32xf32>
    %cst_10 = arith.constant dense<0.000000e+00> : vector<2x8xf32>
    %13 = vector.multi_reduction <add>, %12, %cst_10 [2] : vector<2x8x32xf32> to vector<2x8xf32>
    %14 = vector.shape_cast %13 : vector<2x8xf32> to vector<2x8x1xf32>
    %cst_11 = arith.constant 3.200000e+01 : f32
    %15 = vector.broadcast %cst_11 : f32 to vector<2x8x1xf32>
    %16 = arith.divf %14, %15 : vector<2x8x1xf32>
    %17 = vector.broadcast %9 : vector<2x8x1xf32> to vector<2x8x32xf32>
    %18 = arith.subf %3, %17 : vector<2x8x32xf32>
    %cst_12 = arith.constant 9.99999997E-7 : f32
    %19 = vector.broadcast %cst_12 : f32 to vector<2x8x1xf32>
    %20 = arith.addf %16, %19 : vector<2x8x1xf32>
    %21 = math.rsqrt %20 : vector<2x8x1xf32>
    %22 = vector.broadcast %21 : vector<2x8x1xf32> to vector<2x8x32xf32>
    %23 = arith.mulf %18, %22 : vector<2x8x32xf32>
    %24 = vector.broadcast %4 : vector<1x1x32xf32> to vector<2x8x32xf32>
    %25 = arith.mulf %23, %24 : vector<2x8x32xf32>
    %26 = vector.broadcast %5 : vector<1x1x32xf32> to vector<2x8x32xf32>
    %27 = arith.addf %25, %26 : vector<2x8x32xf32>
    %28 = vector.shape_cast %27 : vector<2x8x32xf32> to vector<16x32xf32>
    %cst_13 = arith.constant 0.000000e+00 : f32
    %29 = vector.broadcast %cst_13 : f32 to vector<16x32xf32>
    %c0_14 = arith.constant 0 : index
    %c0_15 = arith.constant 0 : index
    %c0_16 = arith.constant 0 : index
    %c0_17 = arith.constant 0 : index
    %30 = vector.load %arg4[%c0_14, %c0_15, %c0_16, %c0_17] : memref<1x4x32x8xf32, #tpu.memory_space<vmem>>, vector<1x1x32x8xf32>
    %31 = vector.shape_cast %30 : vector<1x1x32x8xf32> to vector<32x8xf32>
    %cst_18 = arith.constant dense<0.000000e+00> : vector<16x8xf32>
    %32 = tpu.matmul %28, %31, %cst_18 {dimension_numbers = #tpu.dot_dimension_numbers<[1], [0], [0], [1], [0, 0, 1, 1], [], []>} : vector<16x32xf32>, vector<32x8xf32>, vector<16x8xf32> -> vector<16x8xf32>
    %c0_19 = arith.constant 0 : index
    %c0_20 = arith.constant 0 : index
    %c0_21 = arith.constant 0 : index
    %33 = vector.load %arg5[%c0_19, %c0_20, %c0_21] : memref<1x4x8xf32, #tpu.memory_space<vmem>>, vector<1x1x8xf32>
    %34 = vector.shape_cast %33 : vector<1x1x8xf32> to vector<8xf32>
    %35 = vector.shape_cast %34 : vector<8xf32> to vector<1x8xf32>
    %36 = vector.broadcast %35 : vector<1x8xf32> to vector<16x8xf32>
    %37 = arith.addf %32, %36 : vector<16x8xf32>
    %38 = vector.shape_cast %37 : vector<16x8xf32> to vector<2x8x8xf32>
    %c0_22 = arith.constant 0 : index
    %c0_23 = arith.constant 0 : index
    %c0_24 = arith.constant 0 : index
    %c0_25 = arith.constant 0 : index
    %39 = vector.load %arg6[%c0_22, %c0_23, %c0_24, %c0_25] : memref<1x4x32x8xf32, #tpu.memory_space<vmem>>, vector<1x1x32x8xf32>
    %40 = vector.shape_cast %39 : vector<1x1x32x8xf32> to vector<32x8xf32>
    %cst_26 = arith.constant dense<0.000000e+00> : vector<16x8xf32>
    %41 = tpu.matmul %28, %40, %cst_26 {dimension_numbers = #tpu.dot_dimension_numbers<[1], [0], [0], [1], [0, 0, 1, 1], [], []>} : vector<16x32xf32>, vector<32x8xf32>, vector<16x8xf32> -> vector<16x8xf32>
    %c0_27 = arith.constant 0 : index
    %c0_28 = arith.constant 0 : index
    %c0_29 = arith.constant 0 : index
    %42 = vector.load %arg7[%c0_27, %c0_28, %c0_29] : memref<1x4x8xf32, #tpu.memory_space<vmem>>, vector<1x1x8xf32>
    %43 = vector.shape_cast %42 : vector<1x1x8xf32> to vector<8xf32>
    %44 = vector.shape_cast %43 : vector<8xf32> to vector<1x8xf32>
    %45 = vector.broadcast %44 : vector<1x8xf32> to vector<16x8xf32>
    %46 = arith.addf %41, %45 : vector<16x8xf32>
    %47 = vector.shape_cast %46 : vector<16x8xf32> to vector<2x8x8xf32>
    %c0_30 = arith.constant 0 : index
    %c0_31 = arith.constant 0 : index
    %c0_32 = arith.constant 0 : index
    %c0_33 = arith.constant 0 : index
    %48 = vector.load %arg8[%c0_30, %c0_31, %c0_32, %c0_33] : memref<1x4x32x8xf32, #tpu.memory_space<vmem>>, vector<1x1x32x8xf32>
    %49 = vector.shape_cast %48 : vector<1x1x32x8xf32> to vector<32x8xf32>
    %cst_34 = arith.constant dense<0.000000e+00> : vector<16x8xf32>
    %50 = tpu.matmul %28, %49, %cst_34 {dimension_numbers = #tpu.dot_dimension_numbers<[1], [0], [0], [1], [0, 0, 1, 1], [], []>} : vector<16x32xf32>, vector<32x8xf32>, vector<16x8xf32> -> vector<16x8xf32>
    %c0_35 = arith.constant 0 : index
    %c0_36 = arith.constant 0 : index
    %c0_37 = arith.constant 0 : index
    %51 = vector.load %arg9[%c0_35, %c0_36, %c0_37] : memref<1x4x8xf32, #tpu.memory_space<vmem>>, vector<1x1x8xf32>
    %52 = vector.shape_cast %51 : vector<1x1x8xf32> to vector<8xf32>
    %53 = vector.shape_cast %52 : vector<8xf32> to vector<1x8xf32>
    %54 = vector.broadcast %53 : vector<1x8xf32> to vector<16x8xf32>
    %55 = arith.addf %50, %54 : vector<16x8xf32>
    %56 = vector.shape_cast %55 : vector<16x8xf32> to vector<2x8x8xf32>
    "tpu.trace_start"() <{level = 10 : i32, message = "bqd,bkd->bqk"}> : () -> ()
    %cst_38 = arith.constant dense<0.000000e+00> : vector<2x8x8xf32>
    %57 = tpu.matmul %38, %47, %cst_38 {dimension_numbers = #tpu.dot_dimension_numbers<[2], [2], [1], [1], [0, 0, 0, 1, 1, 1], [0], [0]>} : vector<2x8x8xf32>, vector<2x8x8xf32>, vector<2x8x8xf32> -> vector<2x8x8xf32>
    "tpu.trace_stop"() : () -> ()
    %cst_39 = arith.constant 0.353553385 : f32
    %58 = vector.broadcast %cst_39 : f32 to vector<2x8x8xf32>
    %59 = arith.mulf %57, %58 : vector<2x8x8xf32>
    %cst_40 = arith.constant dense<0xFF800000> : vector<2x8xf32>
    %60 = vector.multi_reduction <maximumf>, %59, %cst_40 [2] : vector<2x8x8xf32> to vector<2x8xf32>
    %61 = vector.shape_cast %60 : vector<2x8xf32> to vector<2x8x1xf32>
    %62 = vector.broadcast %61 : vector<2x8x1xf32> to vector<2x8x8xf32>
    %63 = arith.subf %59, %62 : vector<2x8x8xf32>
    %64 = math.exp %63 : vector<2x8x8xf32>
    %cst_41 = arith.constant dense<0.000000e+00> : vector<2x8xf32>
    %65 = vector.multi_reduction <add>, %64, %cst_41 [2] : vector<2x8x8xf32> to vector<2x8xf32>
    %66 = vector.shape_cast %65 : vector<2x8xf32> to vector<2x8x1xf32>
    %67 = vector.broadcast %66 : vector<2x8x1xf32> to vector<2x8x8xf32>
    %68 = arith.divf %64, %67 : vector<2x8x8xf32>
    "tpu.trace_start"() <{level = 10 : i32, message = "bqk,bkd->bqd"}> : () -> ()
    %cst_42 = arith.constant dense<0.000000e+00> : vector<2x8x8xf32>
    %69 = tpu.matmul %68, %56, %cst_42 {dimension_numbers = #tpu.dot_dimension_numbers<[2], [1], [1], [2], [0, 0, 0, 1, 1, 2], [0], [0]>} : vector<2x8x8xf32>, vector<2x8x8xf32>, vector<2x8x8xf32> -> vector<2x8x8xf32>
    "tpu.trace_stop"() : () -> ()
    %70 = vector.shape_cast %69 : vector<2x8x8xf32> to vector<16x8xf32>
    %c0_43 = arith.constant 0 : index
    %c0_44 = arith.constant 0 : index
    %c0_45 = arith.constant 0 : index
    %c0_46 = arith.constant 0 : index
    %71 = vector.load %arg10[%c0_43, %c0_44, %c0_45, %c0_46] : memref<1x4x8x32xf32, #tpu.memory_space<vmem>>, vector<1x1x8x32xf32>
    %72 = vector.shape_cast %71 : vector<1x1x8x32xf32> to vector<8x32xf32>
    %cst_47 = arith.constant dense<0.000000e+00> : vector<16x32xf32>
    %73 = tpu.matmul %70, %72, %cst_47 {dimension_numbers = #tpu.dot_dimension_numbers<[1], [0], [0], [1], [0, 0, 1, 1], [], []>} : vector<16x8xf32>, vector<8x32xf32>, vector<16x32xf32> -> vector<16x32xf32>
    %74 = arith.addf %29, %73 : vector<16x32xf32>
    %c0_48 = arith.constant 0 : index
    %c1 = arith.constant 1 : index
    %c0_49 = arith.constant 0 : index
    %c0_50 = arith.constant 0 : index
    %75 = vector.load %arg4[%c0_48, %c1, %c0_49, %c0_50] : memref<1x4x32x8xf32, #tpu.memory_space<vmem>>, vector<1x1x32x8xf32>
    %76 = vector.shape_cast %75 : vector<1x1x32x8xf32> to vector<32x8xf32>
    %cst_51 = arith.constant dense<0.000000e+00> : vector<16x8xf32>
    %77 = tpu.matmul %28, %76, %cst_51 {dimension_numbers = #tpu.dot_dimension_numbers<[1], [0], [0], [1], [0, 0, 1, 1], [], []>} : vector<16x32xf32>, vector<32x8xf32>, vector<16x8xf32> -> vector<16x8xf32>
    %c0_52 = arith.constant 0 : index
    %c1_53 = arith.constant 1 : index
    %c0_54 = arith.constant 0 : index
    %78 = vector.load %arg5[%c0_52, %c1_53, %c0_54] : memref<1x4x8xf32, #tpu.memory_space<vmem>>, vector<1x1x8xf32>
    %79 = vector.shape_cast %78 : vector<1x1x8xf32> to vector<8xf32>
    %80 = vector.shape_cast %79 : vector<8xf32> to vector<1x8xf32>
    %81 = vector.broadcast %80 : vector<1x8xf32> to vector<16x8xf32>
    %82 = arith.addf %77, %81 : vector<16x8xf32>
    %83 = vector.shape_cast %82 : vector<16x8xf32> to vector<2x8x8xf32>
    %c0_55 = arith.constant 0 : index
    %c1_56 = arith.constant 1 : index
    %c0_57 = arith.constant 0 : index
    %c0_58 = arith.constant 0 : index
    %84 = vector.load %arg6[%c0_55, %c1_56, %c0_57, %c0_58] : memref<1x4x32x8xf32, #tpu.memory_space<vmem>>, vector<1x1x32x8xf32>
    %85 = vector.shape_cast %84 : vector<1x1x32x8xf32> to vector<32x8xf32>
    %cst_59 = arith.constant dense<0.000000e+00> : vector<16x8xf32>
    %86 = tpu.matmul %28, %85, %cst_59 {dimension_numbers = #tpu.dot_dimension_numbers<[1], [0], [0], [1], [0, 0, 1, 1], [], []>} : vector<16x32xf32>, vector<32x8xf32>, vector<16x8xf32> -> vector<16x8xf32>
    %c0_60 = arith.constant 0 : index
    %c1_61 = arith.constant 1 : index
    %c0_62 = arith.constant 0 : index
    %87 = vector.load %arg7[%c0_60, %c1_61, %c0_62] : memref<1x4x8xf32, #tpu.memory_space<vmem>>, vector<1x1x8xf32>
    %88 = vector.shape_cast %87 : vector<1x1x8xf32> to vector<8xf32>
    %89 = vector.shape_cast %88 : vector<8xf32> to vector<1x8xf32>
    %90 = vector.broadcast %89 : vector<1x8xf32> to vector<16x8xf32>
    %91 = arith.addf %86, %90 : vector<16x8xf32>
    %92 = vector.shape_cast %91 : vector<16x8xf32> to vector<2x8x8xf32>
    %c0_63 = arith.constant 0 : index
    %c1_64 = arith.constant 1 : index
    %c0_65 = arith.constant 0 : index
    %c0_66 = arith.constant 0 : index
    %93 = vector.load %arg8[%c0_63, %c1_64, %c0_65, %c0_66] : memref<1x4x32x8xf32, #tpu.memory_space<vmem>>, vector<1x1x32x8xf32>
    %94 = vector.shape_cast %93 : vector<1x1x32x8xf32> to vector<32x8xf32>
    %cst_67 = arith.constant dense<0.000000e+00> : vector<16x8xf32>
    %95 = tpu.matmul %28, %94, %cst_67 {dimension_numbers = #tpu.dot_dimension_numbers<[1], [0], [0], [1], [0, 0, 1, 1], [], []>} : vector<16x32xf32>, vector<32x8xf32>, vector<16x8xf32> -> vector<16x8xf32>
    %c0_68 = arith.constant 0 : index
    %c1_69 = arith.constant 1 : index
    %c0_70 = arith.constant 0 : index
    %96 = vector.load %arg9[%c0_68, %c1_69, %c0_70] : memref<1x4x8xf32, #tpu.memory_space<vmem>>, vector<1x1x8xf32>
    %97 = vector.shape_cast %96 : vector<1x1x8xf32> to vector<8xf32>
    %98 = vector.shape_cast %97 : vector<8xf32> to vector<1x8xf32>
    %99 = vector.broadcast %98 : vector<1x8xf32> to vector<16x8xf32>
    %100 = arith.addf %95, %99 : vector<16x8xf32>
    %101 = vector.shape_cast %100 : vector<16x8xf32> to vector<2x8x8xf32>
    "tpu.trace_start"() <{level = 10 : i32, message = "bqd,bkd->bqk"}> : () -> ()
    %cst_71 = arith.constant dense<0.000000e+00> : vector<2x8x8xf32>
    %102 = tpu.matmul %83, %92, %cst_71 {dimension_numbers = #tpu.dot_dimension_numbers<[2], [2], [1], [1], [0, 0, 0, 1, 1, 1], [0], [0]>} : vector<2x8x8xf32>, vector<2x8x8xf32>, vector<2x8x8xf32> -> vector<2x8x8xf32>
    "tpu.trace_stop"() : () -> ()
    %cst_72 = arith.constant 0.353553385 : f32
    %103 = vector.broadcast %cst_72 : f32 to vector<2x8x8xf32>
    %104 = arith.mulf %102, %103 : vector<2x8x8xf32>
    %cst_73 = arith.constant dense<0xFF800000> : vector<2x8xf32>
    %105 = vector.multi_reduction <maximumf>, %104, %cst_73 [2] : vector<2x8x8xf32> to vector<2x8xf32>
    %106 = vector.shape_cast %105 : vector<2x8xf32> to vector<2x8x1xf32>
    %107 = vector.broadcast %106 : vector<2x8x1xf32> to vector<2x8x8xf32>
    %108 = arith.subf %104, %107 : vector<2x8x8xf32>
    %109 = math.exp %108 : vector<2x8x8xf32>
    %cst_74 = arith.constant dense<0.000000e+00> : vector<2x8xf32>
    %110 = vector.multi_reduction <add>, %109, %cst_74 [2] : vector<2x8x8xf32> to vector<2x8xf32>
    %111 = vector.shape_cast %110 : vector<2x8xf32> to vector<2x8x1xf32>
    %112 = vector.broadcast %111 : vector<2x8x1xf32> to vector<2x8x8xf32>
    %113 = arith.divf %109, %112 : vector<2x8x8xf32>
    "tpu.trace_start"() <{level = 10 : i32, message = "bqk,bkd->bqd"}> : () -> ()
    %cst_75 = arith.constant dense<0.000000e+00> : vector<2x8x8xf32>
    %114 = tpu.matmul %113, %101, %cst_75 {dimension_numbers = #tpu.dot_dimension_numbers<[2], [1], [1], [2], [0, 0, 0, 1, 1, 2], [0], [0]>} : vector<2x8x8xf32>, vector<2x8x8xf32>, vector<2x8x8xf32> -> vector<2x8x8xf32>
    "tpu.trace_stop"() : () -> ()
    %115 = vector.shape_cast %114 : vector<2x8x8xf32> to vector<16x8xf32>
    %c0_76 = arith.constant 0 : index
    %c1_77 = arith.constant 1 : index
    %c0_78 = arith.constant 0 : index
    %c0_79 = arith.constant 0 : index
    %116 = vector.load %arg10[%c0_76, %c1_77, %c0_78, %c0_79] : memref<1x4x8x32xf32, #tpu.memory_space<vmem>>, vector<1x1x8x32xf32>
    %117 = vector.shape_cast %116 : vector<1x1x8x32xf32> to vector<8x32xf32>
    %cst_80 = arith.constant dense<0.000000e+00> : vector<16x32xf32>
    %118 = tpu.matmul %115, %117, %cst_80 {dimension_numbers = #tpu.dot_dimension_numbers<[1], [0], [0], [1], [0, 0, 1, 1], [], []>} : vector<16x8xf32>, vector<8x32xf32>, vector<16x32xf32> -> vector<16x32xf32>
    %119 = arith.addf %74, %118 : vector<16x32xf32>
    %c0_81 = arith.constant 0 : index
    %c2 = arith.constant 2 : index
    %c0_82 = arith.constant 0 : index
    %c0_83 = arith.constant 0 : index
    %120 = vector.load %arg4[%c0_81, %c2, %c0_82, %c0_83] : memref<1x4x32x8xf32, #tpu.memory_space<vmem>>, vector<1x1x32x8xf32>
    %121 = vector.shape_cast %120 : vector<1x1x32x8xf32> to vector<32x8xf32>
    %cst_84 = arith.constant dense<0.000000e+00> : vector<16x8xf32>
    %122 = tpu.matmul %28, %121, %cst_84 {dimension_numbers = #tpu.dot_dimension_numbers<[1], [0], [0], [1], [0, 0, 1, 1], [], []>} : vector<16x32xf32>, vector<32x8xf32>, vector<16x8xf32> -> vector<16x8xf32>
    %c0_85 = arith.constant 0 : index
    %c2_86 = arith.constant 2 : index
    %c0_87 = arith.constant 0 : index
    %123 = vector.load %arg5[%c0_85, %c2_86, %c0_87] : memref<1x4x8xf32, #tpu.memory_space<vmem>>, vector<1x1x8xf32>
    %124 = vector.shape_cast %123 : vector<1x1x8xf32> to vector<8xf32>
    %125 = vector.shape_cast %124 : vector<8xf32> to vector<1x8xf32>
    %126 = vector.broadcast %125 : vector<1x8xf32> to vector<16x8xf32>
    %127 = arith.addf %122, %126 : vector<16x8xf32>
    %128 = vector.shape_cast %127 : vector<16x8xf32> to vector<2x8x8xf32>
    %c0_88 = arith.constant 0 : index
    %c2_89 = arith.constant 2 : index
    %c0_90 = arith.constant 0 : index
    %c0_91 = arith.constant 0 : index
    %129 = vector.load %arg6[%c0_88, %c2_89, %c0_90, %c0_91] : memref<1x4x32x8xf32, #tpu.memory_space<vmem>>, vector<1x1x32x8xf32>
    %130 = vector.shape_cast %129 : vector<1x1x32x8xf32> to vector<32x8xf32>
    %cst_92 = arith.constant dense<0.000000e+00> : vector<16x8xf32>
    %131 = tpu.matmul %28, %130, %cst_92 {dimension_numbers = #tpu.dot_dimension_numbers<[1], [0], [0], [1], [0, 0, 1, 1], [], []>} : vector<16x32xf32>, vector<32x8xf32>, vector<16x8xf32> -> vector<16x8xf32>
    %c0_93 = arith.constant 0 : index
    %c2_94 = arith.constant 2 : index
    %c0_95 = arith.constant 0 : index
    %132 = vector.load %arg7[%c0_93, %c2_94, %c0_95] : memref<1x4x8xf32, #tpu.memory_space<vmem>>, vector<1x1x8xf32>
    %133 = vector.shape_cast %132 : vector<1x1x8xf32> to vector<8xf32>
    %134 = vector.shape_cast %133 : vector<8xf32> to vector<1x8xf32>
    %135 = vector.broadcast %134 : vector<1x8xf32> to vector<16x8xf32>
    %136 = arith.addf %131, %135 : vector<16x8xf32>
    %137 = vector.shape_cast %136 : vector<16x8xf32> to vector<2x8x8xf32>
    %c0_96 = arith.constant 0 : index
    %c2_97 = arith.constant 2 : index
    %c0_98 = arith.constant 0 : index
    %c0_99 = arith.constant 0 : index
    %138 = vector.load %arg8[%c0_96, %c2_97, %c0_98, %c0_99] : memref<1x4x32x8xf32, #tpu.memory_space<vmem>>, vector<1x1x32x8xf32>
    %139 = vector.shape_cast %138 : vector<1x1x32x8xf32> to vector<32x8xf32>
    %cst_100 = arith.constant dense<0.000000e+00> : vector<16x8xf32>
    %140 = tpu.matmul %28, %139, %cst_100 {dimension_numbers = #tpu.dot_dimension_numbers<[1], [0], [0], [1], [0, 0, 1, 1], [], []>} : vector<16x32xf32>, vector<32x8xf32>, vector<16x8xf32> -> vector<16x8xf32>
    %c0_101 = arith.constant 0 : index
    %c2_102 = arith.constant 2 : index
    %c0_103 = arith.constant 0 : index
    %141 = vector.load %arg9[%c0_101, %c2_102, %c0_103] : memref<1x4x8xf32, #tpu.memory_space<vmem>>, vector<1x1x8xf32>
    %142 = vector.shape_cast %141 : vector<1x1x8xf32> to vector<8xf32>
    %143 = vector.shape_cast %142 : vector<8xf32> to vector<1x8xf32>
    %144 = vector.broadcast %143 : vector<1x8xf32> to vector<16x8xf32>
    %145 = arith.addf %140, %144 : vector<16x8xf32>
    %146 = vector.shape_cast %145 : vector<16x8xf32> to vector<2x8x8xf32>
    "tpu.trace_start"() <{level = 10 : i32, message = "bqd,bkd->bqk"}> : () -> ()
    %cst_104 = arith.constant dense<0.000000e+00> : vector<2x8x8xf32>
    %147 = tpu.matmul %128, %137, %cst_104 {dimension_numbers = #tpu.dot_dimension_numbers<[2], [2], [1], [1], [0, 0, 0, 1, 1, 1], [0], [0]>} : vector<2x8x8xf32>, vector<2x8x8xf32>, vector<2x8x8xf32> -> vector<2x8x8xf32>
    "tpu.trace_stop"() : () -> ()
    %cst_105 = arith.constant 0.353553385 : f32
    %148 = vector.broadcast %cst_105 : f32 to vector<2x8x8xf32>
    %149 = arith.mulf %147, %148 : vector<2x8x8xf32>
    %cst_106 = arith.constant dense<0xFF800000> : vector<2x8xf32>
    %150 = vector.multi_reduction <maximumf>, %149, %cst_106 [2] : vector<2x8x8xf32> to vector<2x8xf32>
    %151 = vector.shape_cast %150 : vector<2x8xf32> to vector<2x8x1xf32>
    %152 = vector.broadcast %151 : vector<2x8x1xf32> to vector<2x8x8xf32>
    %153 = arith.subf %149, %152 : vector<2x8x8xf32>
    %154 = math.exp %153 : vector<2x8x8xf32>
    %cst_107 = arith.constant dense<0.000000e+00> : vector<2x8xf32>
    %155 = vector.multi_reduction <add>, %154, %cst_107 [2] : vector<2x8x8xf32> to vector<2x8xf32>
    %156 = vector.shape_cast %155 : vector<2x8xf32> to vector<2x8x1xf32>
    %157 = vector.broadcast %156 : vector<2x8x1xf32> to vector<2x8x8xf32>
    %158 = arith.divf %154, %157 : vector<2x8x8xf32>
    "tpu.trace_start"() <{level = 10 : i32, message = "bqk,bkd->bqd"}> : () -> ()
    %cst_108 = arith.constant dense<0.000000e+00> : vector<2x8x8xf32>
    %159 = tpu.matmul %158, %146, %cst_108 {dimension_numbers = #tpu.dot_dimension_numbers<[2], [1], [1], [2], [0, 0, 0, 1, 1, 2], [0], [0]>} : vector<2x8x8xf32>, vector<2x8x8xf32>, vector<2x8x8xf32> -> vector<2x8x8xf32>
    "tpu.trace_stop"() : () -> ()
    %160 = vector.shape_cast %159 : vector<2x8x8xf32> to vector<16x8xf32>
    %c0_109 = arith.constant 0 : index
    %c2_110 = arith.constant 2 : index
    %c0_111 = arith.constant 0 : index
    %c0_112 = arith.constant 0 : index
    %161 = vector.load %arg10[%c0_109, %c2_110, %c0_111, %c0_112] : memref<1x4x8x32xf32, #tpu.memory_space<vmem>>, vector<1x1x8x32xf32>
    %162 = vector.shape_cast %161 : vector<1x1x8x32xf32> to vector<8x32xf32>
    %cst_113 = arith.constant dense<0.000000e+00> : vector<16x32xf32>
    %163 = tpu.matmul %160, %162, %cst_113 {dimension_numbers = #tpu.dot_dimension_numbers<[1], [0], [0], [1], [0, 0, 1, 1], [], []>} : vector<16x8xf32>, vector<8x32xf32>, vector<16x32xf32> -> vector<16x32xf32>
    %164 = arith.addf %119, %163 : vector<16x32xf32>
    %c0_114 = arith.constant 0 : index
    %c3 = arith.constant 3 : index
    %c0_115 = arith.constant 0 : index
    %c0_116 = arith.constant 0 : index
    %165 = vector.load %arg4[%c0_114, %c3, %c0_115, %c0_116] : memref<1x4x32x8xf32, #tpu.memory_space<vmem>>, vector<1x1x32x8xf32>
    %166 = vector.shape_cast %165 : vector<1x1x32x8xf32> to vector<32x8xf32>
    %cst_117 = arith.constant dense<0.000000e+00> : vector<16x8xf32>
    %167 = tpu.matmul %28, %166, %cst_117 {dimension_numbers = #tpu.dot_dimension_numbers<[1], [0], [0], [1], [0, 0, 1, 1], [], []>} : vector<16x32xf32>, vector<32x8xf32>, vector<16x8xf32> -> vector<16x8xf32>
    %c0_118 = arith.constant 0 : index
    %c3_119 = arith.constant 3 : index
    %c0_120 = arith.constant 0 : index
    %168 = vector.load %arg5[%c0_118, %c3_119, %c0_120] : memref<1x4x8xf32, #tpu.memory_space<vmem>>, vector<1x1x8xf32>
    %169 = vector.shape_cast %168 : vector<1x1x8xf32> to vector<8xf32>
    %170 = vector.shape_cast %169 : vector<8xf32> to vector<1x8xf32>
    %171 = vector.broadcast %170 : vector<1x8xf32> to vector<16x8xf32>
    %172 = arith.addf %167, %171 : vector<16x8xf32>
    %173 = vector.shape_cast %172 : vector<16x8xf32> to vector<2x8x8xf32>
    %c0_121 = arith.constant 0 : index
    %c3_122 = arith.constant 3 : index
    %c0_123 = arith.constant 0 : index
    %c0_124 = arith.constant 0 : index
    %174 = vector.load %arg6[%c0_121, %c3_122, %c0_123, %c0_124] : memref<1x4x32x8xf32, #tpu.memory_space<vmem>>, vector<1x1x32x8xf32>
    %175 = vector.shape_cast %174 : vector<1x1x32x8xf32> to vector<32x8xf32>
    %cst_125 = arith.constant dense<0.000000e+00> : vector<16x8xf32>
    %176 = tpu.matmul %28, %175, %cst_125 {dimension_numbers = #tpu.dot_dimension_numbers<[1], [0], [0], [1], [0, 0, 1, 1], [], []>} : vector<16x32xf32>, vector<32x8xf32>, vector<16x8xf32> -> vector<16x8xf32>
    %c0_126 = arith.constant 0 : index
    %c3_127 = arith.constant 3 : index
    %c0_128 = arith.constant 0 : index
    %177 = vector.load %arg7[%c0_126, %c3_127, %c0_128] : memref<1x4x8xf32, #tpu.memory_space<vmem>>, vector<1x1x8xf32>
    %178 = vector.shape_cast %177 : vector<1x1x8xf32> to vector<8xf32>
    %179 = vector.shape_cast %178 : vector<8xf32> to vector<1x8xf32>
    %180 = vector.broadcast %179 : vector<1x8xf32> to vector<16x8xf32>
    %181 = arith.addf %176, %180 : vector<16x8xf32>
    %182 = vector.shape_cast %181 : vector<16x8xf32> to vector<2x8x8xf32>
    %c0_129 = arith.constant 0 : index
    %c3_130 = arith.constant 3 : index
    %c0_131 = arith.constant 0 : index
    %c0_132 = arith.constant 0 : index
    %183 = vector.load %arg8[%c0_129, %c3_130, %c0_131, %c0_132] : memref<1x4x32x8xf32, #tpu.memory_space<vmem>>, vector<1x1x32x8xf32>
    %184 = vector.shape_cast %183 : vector<1x1x32x8xf32> to vector<32x8xf32>
    %cst_133 = arith.constant dense<0.000000e+00> : vector<16x8xf32>
    %185 = tpu.matmul %28, %184, %cst_133 {dimension_numbers = #tpu.dot_dimension_numbers<[1], [0], [0], [1], [0, 0, 1, 1], [], []>} : vector<16x32xf32>, vector<32x8xf32>, vector<16x8xf32> -> vector<16x8xf32>
    %c0_134 = arith.constant 0 : index
    %c3_135 = arith.constant 3 : index
    %c0_136 = arith.constant 0 : index
    %186 = vector.load %arg9[%c0_134, %c3_135, %c0_136] : memref<1x4x8xf32, #tpu.memory_space<vmem>>, vector<1x1x8xf32>
    %187 = vector.shape_cast %186 : vector<1x1x8xf32> to vector<8xf32>
    %188 = vector.shape_cast %187 : vector<8xf32> to vector<1x8xf32>
    %189 = vector.broadcast %188 : vector<1x8xf32> to vector<16x8xf32>
    %190 = arith.addf %185, %189 : vector<16x8xf32>
    %191 = vector.shape_cast %190 : vector<16x8xf32> to vector<2x8x8xf32>
    "tpu.trace_start"() <{level = 10 : i32, message = "bqd,bkd->bqk"}> : () -> ()
    %cst_137 = arith.constant dense<0.000000e+00> : vector<2x8x8xf32>
    %192 = tpu.matmul %173, %182, %cst_137 {dimension_numbers = #tpu.dot_dimension_numbers<[2], [2], [1], [1], [0, 0, 0, 1, 1, 1], [0], [0]>} : vector<2x8x8xf32>, vector<2x8x8xf32>, vector<2x8x8xf32> -> vector<2x8x8xf32>
    "tpu.trace_stop"() : () -> ()
    %cst_138 = arith.constant 0.353553385 : f32
    %193 = vector.broadcast %cst_138 : f32 to vector<2x8x8xf32>
    %194 = arith.mulf %192, %193 : vector<2x8x8xf32>
    %cst_139 = arith.constant dense<0xFF800000> : vector<2x8xf32>
    %195 = vector.multi_reduction <maximumf>, %194, %cst_139 [2] : vector<2x8x8xf32> to vector<2x8xf32>
    %196 = vector.shape_cast %195 : vector<2x8xf32> to vector<2x8x1xf32>
    %197 = vector.broadcast %196 : vector<2x8x1xf32> to vector<2x8x8xf32>
    %198 = arith.subf %194, %197 : vector<2x8x8xf32>
    %199 = math.exp %198 : vector<2x8x8xf32>
    %cst_140 = arith.constant dense<0.000000e+00> : vector<2x8xf32>
    %200 = vector.multi_reduction <add>, %199, %cst_140 [2] : vector<2x8x8xf32> to vector<2x8xf32>
    %201 = vector.shape_cast %200 : vector<2x8xf32> to vector<2x8x1xf32>
    %202 = vector.broadcast %201 : vector<2x8x1xf32> to vector<2x8x8xf32>
    %203 = arith.divf %199, %202 : vector<2x8x8xf32>
    "tpu.trace_start"() <{level = 10 : i32, message = "bqk,bkd->bqd"}> : () -> ()
    %cst_141 = arith.constant dense<0.000000e+00> : vector<2x8x8xf32>
    %204 = tpu.matmul %203, %191, %cst_141 {dimension_numbers = #tpu.dot_dimension_numbers<[2], [1], [1], [2], [0, 0, 0, 1, 1, 2], [0], [0]>} : vector<2x8x8xf32>, vector<2x8x8xf32>, vector<2x8x8xf32> -> vector<2x8x8xf32>
    "tpu.trace_stop"() : () -> ()
    %205 = vector.shape_cast %204 : vector<2x8x8xf32> to vector<16x8xf32>
    %c0_142 = arith.constant 0 : index
    %c3_143 = arith.constant 3 : index
    %c0_144 = arith.constant 0 : index
    %c0_145 = arith.constant 0 : index
    %206 = vector.load %arg10[%c0_142, %c3_143, %c0_144, %c0_145] : memref<1x4x8x32xf32, #tpu.memory_space<vmem>>, vector<1x1x8x32xf32>
    %207 = vector.shape_cast %206 : vector<1x1x8x32xf32> to vector<8x32xf32>
    %cst_146 = arith.constant dense<0.000000e+00> : vector<16x32xf32>
    %208 = tpu.matmul %205, %207, %cst_146 {dimension_numbers = #tpu.dot_dimension_numbers<[1], [0], [0], [1], [0, 0, 1, 1], [], []>} : vector<16x8xf32>, vector<8x32xf32>, vector<16x32xf32> -> vector<16x32xf32>
    %209 = arith.addf %164, %208 : vector<16x32xf32>
    %210 = vector.shape_cast %209 : vector<16x32xf32> to vector<2x8x32xf32>
    %211 = arith.addf %3, %210 : vector<2x8x32xf32>
    %c0_147 = arith.constant 0 : index
    %c0_148 = arith.constant 0 : index
    %c0_149 = arith.constant 0 : index
    %212 = vector.load %arg11[%c0_147, %c0_148, %c0_149] : memref<1x1x32xf32, #tpu.memory_space<vmem>>, vector<1x1x32xf32>
    %213 = vector.broadcast %212 : vector<1x1x32xf32> to vector<2x8x32xf32>
    %214 = arith.addf %211, %213 : vector<2x8x32xf32>
    %c0_150 = arith.constant 0 : index
    %c0_151 = arith.constant 0 : index
    %c0_152 = arith.constant 0 : index
    %215 = vector.load %arg12[%c0_150, %c0_151, %c0_152] : memref<1x1x32xf32, #tpu.memory_space<vmem>>, vector<1x1x32xf32>
    %c0_153 = arith.constant 0 : index
    %c0_154 = arith.constant 0 : index
    %c0_155 = arith.constant 0 : index
    %216 = vector.load %arg13[%c0_153, %c0_154, %c0_155] : memref<1x1x32xf32, #tpu.memory_space<vmem>>, vector<1x1x32xf32>
    %cst_156 = arith.constant dense<0.000000e+00> : vector<2x8xf32>
    %217 = vector.multi_reduction <add>, %214, %cst_156 [2] : vector<2x8x32xf32> to vector<2x8xf32>
    %218 = vector.shape_cast %217 : vector<2x8xf32> to vector<2x8x1xf32>
    %cst_157 = arith.constant 3.200000e+01 : f32
    %219 = vector.broadcast %cst_157 : f32 to vector<2x8x1xf32>
    %220 = arith.divf %218, %219 : vector<2x8x1xf32>
    %221 = vector.broadcast %220 : vector<2x8x1xf32> to vector<2x8x32xf32>
    %222 = arith.subf %214, %221 : vector<2x8x32xf32>
    %223 = arith.mulf %222, %222 : vector<2x8x32xf32>
    %cst_158 = arith.constant dense<0.000000e+00> : vector<2x8xf32>
    %224 = vector.multi_reduction <add>, %223, %cst_158 [2] : vector<2x8x32xf32> to vector<2x8xf32>
    %225 = vector.shape_cast %224 : vector<2x8xf32> to vector<2x8x1xf32>
    %cst_159 = arith.constant 3.200000e+01 : f32
    %226 = vector.broadcast %cst_159 : f32 to vector<2x8x1xf32>
    %227 = arith.divf %225, %226 : vector<2x8x1xf32>
    %228 = vector.broadcast %220 : vector<2x8x1xf32> to vector<2x8x32xf32>
    %229 = arith.subf %214, %228 : vector<2x8x32xf32>
    %cst_160 = arith.constant 9.99999997E-7 : f32
    %230 = vector.broadcast %cst_160 : f32 to vector<2x8x1xf32>
    %231 = arith.addf %227, %230 : vector<2x8x1xf32>
    %232 = math.rsqrt %231 : vector<2x8x1xf32>
    %233 = vector.broadcast %232 : vector<2x8x1xf32> to vector<2x8x32xf32>
    %234 = arith.mulf %229, %233 : vector<2x8x32xf32>
    %235 = vector.broadcast %215 : vector<1x1x32xf32> to vector<2x8x32xf32>
    %236 = arith.mulf %234, %235 : vector<2x8x32xf32>
    %237 = vector.broadcast %216 : vector<1x1x32xf32> to vector<2x8x32xf32>
    %238 = arith.addf %236, %237 : vector<2x8x32xf32>
    %239 = vector.shape_cast %238 : vector<2x8x32xf32> to vector<16x32xf32>
    %c0_161 = arith.constant 0 : index
    %c0_162 = arith.constant 0 : index
    %c0_163 = arith.constant 0 : index
    %240 = vector.load %arg14[%c0_161, %c0_162, %c0_163] : memref<1x32x64xf32, #tpu.memory_space<vmem>>, vector<1x32x64xf32>
    %241 = vector.shape_cast %240 : vector<1x32x64xf32> to vector<32x64xf32>
    %cst_164 = arith.constant dense<0.000000e+00> : vector<16x64xf32>
    %242 = tpu.matmul %239, %241, %cst_164 {dimension_numbers = #tpu.dot_dimension_numbers<[1], [0], [0], [1], [0, 0, 1, 1], [], []>} : vector<16x32xf32>, vector<32x64xf32>, vector<16x64xf32> -> vector<16x64xf32>
    %c0_165 = arith.constant 0 : index
    %c0_166 = arith.constant 0 : index
    %c0_167 = arith.constant 0 : index
    %243 = vector.load %arg15[%c0_165, %c0_166, %c0_167] : memref<1x1x64xf32, #tpu.memory_space<vmem>>, vector<1x1x64xf32>
    %244 = vector.shape_cast %243 : vector<1x1x64xf32> to vector<1x64xf32>
    %245 = vector.broadcast %244 : vector<1x64xf32> to vector<16x64xf32>
    %246 = arith.addf %242, %245 : vector<16x64xf32>
    %cst_168 = arith.constant 5.000000e-01 : f32
    %247 = vector.broadcast %cst_168 : f32 to vector<16x64xf32>
    %248 = arith.mulf %247, %246 : vector<16x64xf32>
    %cst_169 = arith.constant 4.471500e-02 : f32
    %249 = vector.broadcast %cst_169 : f32 to vector<16x64xf32>
    %250 = arith.mulf %249, %246 : vector<16x64xf32>
    %251 = arith.mulf %250, %246 : vector<16x64xf32>
    %252 = arith.mulf %251, %246 : vector<16x64xf32>
    %253 = arith.addf %246, %252 : vector<16x64xf32>
    %cst_170 = arith.constant 0.797884583 : f32
    %254 = vector.broadcast %cst_170 : f32 to vector<16x64xf32>
    %255 = arith.mulf %254, %253 : vector<16x64xf32>
    %256 = math.tanh %255 : vector<16x64xf32>
    %cst_171 = arith.constant 1.000000e+00 : f32
    %257 = vector.broadcast %cst_171 : f32 to vector<16x64xf32>
    %258 = arith.addf %257, %256 : vector<16x64xf32>
    %259 = arith.mulf %248, %258 : vector<16x64xf32>
    %c0_172 = arith.constant 0 : index
    %c0_173 = arith.constant 0 : index
    %c0_174 = arith.constant 0 : index
    %260 = vector.load %arg16[%c0_172, %c0_173, %c0_174] : memref<1x64x32xf32, #tpu.memory_space<vmem>>, vector<1x64x32xf32>
    %261 = vector.shape_cast %260 : vector<1x64x32xf32> to vector<64x32xf32>
    %cst_175 = arith.constant dense<0.000000e+00> : vector<16x32xf32>
    %262 = tpu.matmul %259, %261, %cst_175 {dimension_numbers = #tpu.dot_dimension_numbers<[1], [0], [0], [1], [0, 0, 1, 1], [], []>} : vector<16x64xf32>, vector<64x32xf32>, vector<16x32xf32> -> vector<16x32xf32>
    %c0_176 = arith.constant 0 : index
    %c0_177 = arith.constant 0 : index
    %c0_178 = arith.constant 0 : index
    %263 = vector.load %arg17[%c0_176, %c0_177, %c0_178] : memref<1x1x32xf32, #tpu.memory_space<vmem>>, vector<1x1x32xf32>
    %264 = vector.shape_cast %263 : vector<1x1x32xf32> to vector<1x32xf32>
    %265 = vector.broadcast %264 : vector<1x32xf32> to vector<16x32xf32>
    %266 = arith.addf %262, %265 : vector<16x32xf32>
    %267 = vector.shape_cast %266 : vector<16x32xf32> to vector<2x8x32xf32>
    %268 = arith.addf %214, %267 : vector<2x8x32xf32>
    %c1_i32 = arith.constant 1 : i32
    %269 = arith.cmpi slt, %arg0, %c1_i32 : i32
    %270 = arith.extui %269 : i1 to i32
    %c0_i32_179 = arith.constant 0 : i32
    %271 = arith.cmpi ne, %270, %c0_i32_179 : i32
    scf.if %271 {
      %c0_182 = arith.constant 0 : index
      %c0_183 = arith.constant 0 : index
      %c0_184 = arith.constant 0 : index
      %275 = vector.load %arg20[%c0_182, %c0_183, %c0_184] : memref<2x8x32xf32, #tpu.memory_space<vmem>>, vector<2x8x32xf32>
      tpu.vector_store %arg20[%c0_182, %c0_183, %c0_184], %268 {strides = array<i32>} : memref<2x8x32xf32, #tpu.memory_space<vmem>>, vector<2x8x32xf32>,
    } else {
    }
    %c1_i32_180 = arith.constant 1 : i32
    %272 = arith.cmpi eq, %arg0, %c1_i32_180 : i32
    %273 = arith.extui %272 : i1 to i32
    %c0_i32_181 = arith.constant 0 : i32
    %274 = arith.cmpi ne, %273, %c0_i32_181 : i32
    scf.if %274 {
      %c0_182 = arith.constant 0 : index
      %c0_183 = arith.constant 0 : index
      %275 = vector.load %arg18[%c0_182, %c0_183] : memref<1x32xf32, #tpu.memory_space<vmem>>, vector<1x32xf32>
      %c0_184 = arith.constant 0 : index
      %c0_185 = arith.constant 0 : index
      %276 = vector.load %arg19[%c0_184, %c0_185] : memref<1x32xf32, #tpu.memory_space<vmem>>, vector<1x32xf32>
      %cst_186 = arith.constant dense<0.000000e+00> : vector<2x8xf32>
      %277 = vector.multi_reduction <add>, %268, %cst_186 [2] : vector<2x8x32xf32> to vector<2x8xf32>
      %278 = vector.shape_cast %277 : vector<2x8xf32> to vector<2x8x1xf32>
      %cst_187 = arith.constant 3.200000e+01 : f32
      %279 = vector.broadcast %cst_187 : f32 to vector<2x8x1xf32>
      %280 = arith.divf %278, %279 : vector<2x8x1xf32>
      %281 = vector.broadcast %280 : vector<2x8x1xf32> to vector<2x8x32xf32>
      %282 = arith.subf %268, %281 : vector<2x8x32xf32>
      %283 = arith.mulf %282, %282 : vector<2x8x32xf32>
      %cst_188 = arith.constant dense<0.000000e+00> : vector<2x8xf32>
      %284 = vector.multi_reduction <add>, %283, %cst_188 [2] : vector<2x8x32xf32> to vector<2x8xf32>
      %285 = vector.shape_cast %284 : vector<2x8xf32> to vector<2x8x1xf32>
      %cst_189 = arith.constant 3.200000e+01 : f32
      %286 = vector.broadcast %cst_189 : f32 to vector<2x8x1xf32>
      %287 = arith.divf %285, %286 : vector<2x8x1xf32>
      %288 = vector.broadcast %280 : vector<2x8x1xf32> to vector<2x8x32xf32>
      %289 = arith.subf %268, %288 : vector<2x8x32xf32>
      %cst_190 = arith.constant 9.99999997E-7 : f32
      %290 = vector.broadcast %cst_190 : f32 to vector<2x8x1xf32>
      %291 = arith.addf %287, %290 : vector<2x8x1xf32>
      %292 = math.rsqrt %291 : vector<2x8x1xf32>
      %293 = vector.broadcast %292 : vector<2x8x1xf32> to vector<2x8x32xf32>
      %294 = arith.mulf %289, %293 : vector<2x8x32xf32>
      %295 = vector.shape_cast %275 : vector<1x32xf32> to vector<1x1x32xf32>
      %296 = vector.broadcast %295 : vector<1x1x32xf32> to vector<2x8x32xf32>
      %297 = arith.mulf %294, %296 : vector<2x8x32xf32>
      %298 = vector.shape_cast %276 : vector<1x32xf32> to vector<1x1x32xf32>
      %299 = vector.broadcast %298 : vector<1x1x32xf32> to vector<2x8x32xf32>
      %300 = arith.addf %297, %299 : vector<2x8x32xf32>
      %c0_191 = arith.constant 0 : index
      %c0_192 = arith.constant 0 : index
      %c0_193 = arith.constant 0 : index
      %301 = vector.load %arg20[%c0_191, %c0_192, %c0_193] : memref<2x8x32xf32, #tpu.memory_space<vmem>>, vector<2x8x32xf32>
      tpu.vector_store %arg20[%c0_191, %c0_192, %c0_193], %300 {strides = array<i32>} : memref<2x8x32xf32, #tpu.memory_space<vmem>>, vector<2x8x32xf32>,
    } else {
    }
    return
  }
  func.func @transform_0(%arg0: i32) -> (i32, i32, i32) {
    %c0_i32 = arith.constant 0 : i32
    %c0_i32_0 = arith.constant 0 : i32
    %c0_i32_1 = arith.constant 0 : i32
    %c0_i32_2 = arith.constant 0 : i32
    return %c0_i32, %c0_i32_0, %c0_i32_1 : i32, i32, i32
  }
  func.func @transform_1(%arg0: i32) -> (i32, i32, i32) {
    %c0_i32 = arith.constant 0 : i32
    %c0_i32_0 = arith.constant 0 : i32
    %c0_i32_1 = arith.constant 0 : i32
    return %arg0, %c0_i32, %c0_i32_0 : i32, i32, i32
  }
  func.func @transform_2(%arg0: i32) -> (i32, i32, i32) {
    %c0_i32 = arith.constant 0 : i32
    %c0_i32_0 = arith.constant 0 : i32
    %c0_i32_1 = arith.constant 0 : i32
    return %arg0, %c0_i32, %c0_i32_0 : i32, i32, i32
  }
  func.func @transform_3(%arg0: i32) -> (i32, i32, i32, i32) {
    %c0_i32 = arith.constant 0 : i32
    %c0_i32_0 = arith.constant 0 : i32
    %c0_i32_1 = arith.constant 0 : i32
    %c0_i32_2 = arith.constant 0 : i32
    return %arg0, %c0_i32, %c0_i32_0, %c0_i32_1 : i32, i32, i32, i32
  }
  func.func @transform_4(%arg0: i32) -> (i32, i32, i32) {
    %c0_i32 = arith.constant 0 : i32
    %c0_i32_0 = arith.constant 0 : i32
    %c0_i32_1 = arith.constant 0 : i32
    return %arg0, %c0_i32, %c0_i32_0 : i32, i32, i32
  }
  func.func @transform_5(%arg0: i32) -> (i32, i32, i32, i32) {
    %c0_i32 = arith.constant 0 : i32
    %c0_i32_0 = arith.constant 0 : i32
    %c0_i32_1 = arith.constant 0 : i32
    %c0_i32_2 = arith.constant 0 : i32
    return %arg0, %c0_i32, %c0_i32_0, %c0_i32_1 : i32, i32, i32, i32
  }
  func.func @transform_6(%arg0: i32) -> (i32, i32, i32) {
    %c0_i32 = arith.constant 0 : i32
    %c0_i32_0 = arith.constant 0 : i32
    %c0_i32_1 = arith.constant 0 : i32
    return %arg0, %c0_i32, %c0_i32_0 : i32, i32, i32
  }
  func.func @transform_7(%arg0: i32) -> (i32, i32, i32, i32) {
    %c0_i32 = arith.constant 0 : i32
    %c0_i32_0 = arith.constant 0 : i32
    %c0_i32_1 = arith.constant 0 : i32
    %c0_i32_2 = arith.constant 0 : i32
    return %arg0, %c0_i32, %c0_i32_0, %c0_i32_1 : i32, i32, i32, i32
  }
  func.func @transform_8(%arg0: i32) -> (i32, i32, i32) {
    %c0_i32 = arith.constant 0 : i32
    %c0_i32_0 = arith.constant 0 : i32
    %c0_i32_1 = arith.constant 0 : i32
    return %arg0, %c0_i32, %c0_i32_0 : i32, i32, i32
  }
  func.func @transform_9(%arg0: i32) -> (i32, i32, i32, i32) {
    %c0_i32 = arith.constant 0 : i32
    %c0_i32_0 = arith.constant 0 : i32
    %c0_i32_1 = arith.constant 0 : i32
    %c0_i32_2 = arith.constant 0 : i32
    return %arg0, %c0_i32, %c0_i32_0, %c0_i32_1 : i32, i32, i32, i32
  }
  func.func @transform_10(%arg0: i32) -> (i32, i32, i32) {
    %c0_i32 = arith.constant 0 : i32
    %c0_i32_0 = arith.constant 0 : i32
    %c0_i32_1 = arith.constant 0 : i32
    return %arg0, %c0_i32, %c0_i32_0 : i32, i32, i32
  }
  func.func @transform_11(%arg0: i32) -> (i32, i32, i32) {
    %c0_i32 = arith.constant 0 : i32
    %c0_i32_0 = arith.constant 0 : i32
    %c0_i32_1 = arith.constant 0 : i32
    return %arg0, %c0_i32, %c0_i32_0 : i32, i32, i32
  }
  func.func @transform_12(%arg0: i32) -> (i32, i32, i32) {
    %c0_i32 = arith.constant 0 : i32
    %c0_i32_0 = arith.constant 0 : i32
    %c0_i32_1 = arith.constant 0 : i32
    return %arg0, %c0_i32, %c0_i32_0 : i32, i32, i32
  }
  func.func @transform_13(%arg0: i32) -> (i32, i32, i32) {
    %c0_i32 = arith.constant 0 : i32
    %c0_i32_0 = arith.constant 0 : i32
    %c0_i32_1 = arith.constant 0 : i32
    return %arg0, %c0_i32, %c0_i32_0 : i32, i32, i32
  }
  func.func @transform_14(%arg0: i32) -> (i32, i32, i32) {
    %c0_i32 = arith.constant 0 : i32
    %c0_i32_0 = arith.constant 0 : i32
    %c0_i32_1 = arith.constant 0 : i32
    return %arg0, %c0_i32, %c0_i32_0 : i32, i32, i32
  }
  func.func @transform_15(%arg0: i32) -> (i32, i32, i32) {
    %c0_i32 = arith.constant 0 : i32
    %c0_i32_0 = arith.constant 0 : i32
    %c0_i32_1 = arith.constant 0 : i32
    return %arg0, %c0_i32, %c0_i32_0 : i32, i32, i32
  }
  func.func @transform_16(%arg0: i32) -> (i32, i32, i32) {
    %c0_i32 = arith.constant 0 : i32
    %c0_i32_0 = arith.constant 0 : i32
    %c0_i32_1 = arith.constant 0 : i32
    return %arg0, %c0_i32, %c0_i32_0 : i32, i32, i32
  }
  func.func @transform_17(%arg0: i32) -> (i32, i32) {
    %c0_i32 = arith.constant 0 : i32
    %c0_i32_0 = arith.constant 0 : i32
    %c0_i32_1 = arith.constant 0 : i32
    return %c0_i32, %c0_i32_0 : i32, i32
  }
  func.func @transform_18(%arg0: i32) -> (i32, i32) {
    %c0_i32 = arith.constant 0 : i32
    %c0_i32_0 = arith.constant 0 : i32
    %c0_i32_1 = arith.constant 0 : i32
    return %c0_i32, %c0_i32_0 : i32, i32
  }
  func.func @transform_19(%arg0: i32) -> (i32, i32, i32) {
    %c0_i32 = arith.constant 0 : i32
    %c0_i32_0 = arith.constant 0 : i32
    %c0_i32_1 = arith.constant 0 : i32
    %c0_i32_2 = arith.constant 0 : i32
    return %c0_i32, %c0_i32_0, %c0_i32_1 : i32, i32, i32
  }
}

</mosaic_0001>

<llo_original>
// kernel: encoder_forward.1
$region0: #{encoder_forward.1}
  #allocation0 [shape = 'u32[]', space=smem, size = 0x4, offset = 0x4, fixed_abs, tag = 'smem constant byte address 0x4 - core index']
  #allocation1 [shape = 'u32[144,128]{1,0:T(1,128)}', space=vmem, size = 0x12000, scoped, tag = 'internal scratch']
  %s0 = inlined_call_operand.vmem [shape: f32[2,8,32], index: 0, kind: input, shape index: {}]
  %s1 = inlined_call_operand.vmem [shape: f32[2,1,32], index: 1, kind: input, shape index: {}]
  %s2 = inlined_call_operand.vmem [shape: f32[2,1,32], index: 2, kind: input, shape index: {}]
  %s3 = inlined_call_operand.vmem [shape: f32[2,4,32,8], index: 3, kind: input, shape index: {}]
  %s4 = inlined_call_operand.vmem [shape: f32[2,4,8], index: 4, kind: input, shape index: {}]
  %s5 = inlined_call_operand.vmem [shape: f32[2,4,32,8], index: 5, kind: input, shape index: {}]
  %s6 = inlined_call_operand.vmem [shape: f32[2,4,8], index: 6, kind: input, shape index: {}]
  %s7 = inlined_call_operand.vmem [shape: f32[2,4,32,8], index: 7, kind: input, shape index: {}]
  %s8 = inlined_call_operand.vmem [shape: f32[2,4,8], index: 8, kind: input, shape index: {}]
  %s9 = inlined_call_operand.vmem [shape: f32[2,4,8,32], index: 9, kind: input, shape index: {}]
  %s10 = inlined_call_operand.vmem [shape: f32[2,1,32], index: 10, kind: input, shape index: {}]
  %s11 = inlined_call_operand.vmem [shape: f32[2,1,32], index: 11, kind: input, shape index: {}]
  %s12 = inlined_call_operand.vmem [shape: f32[2,1,32], index: 12, kind: input, shape index: {}]
  %s13 = inlined_call_operand.vmem [shape: f32[2,32,64], index: 13, kind: input, shape index: {}]
  %s14 = inlined_call_operand.vmem [shape: f32[2,1,64], index: 14, kind: input, shape index: {}]
  %s15 = inlined_call_operand.vmem [shape: f32[2,64,32], index: 15, kind: input, shape index: {}]
  %s16 = inlined_call_operand.vmem [shape: f32[2,1,32], index: 16, kind: input, shape index: {}]
  %s17 = inlined_call_operand.vmem [shape: f32[1,32], index: 17, kind: input, shape index: {}]
  %s18 = inlined_call_operand.vmem [shape: f32[1,32], index: 18, kind: input, shape index: {}]
  %s19 = inlined_call_operand.hbm [shape: f32[2,8,32], index: 19, kind: output, shape index: {}]
  %s20 = sld [smem:[#allocation0]]
  $region121: #{encoder_forward.1} parent=0
    _
  %s22 = ssub.s32 1, %s20
  %s23 = scalar_select 0, %s22, %s20
  $region1: #{encoder_forward.1} parent=0
    #allocation2 [shape = 'u8[8192]{0}', space=vmem, size = 0x2000, scoped, tag = 'output window, operand 0, single buffered']
    #allocation3 [shape = 's32[2]{0}', space=sflag, size = 0x8, scoped, tag = 'scoped memory for encoder_forward.1']
    %24 = vsyncpa [#allocation3], 0
    loop: start=0, step=1, limit=4
    $region2: #{encoder_forward.1} parent=1 // loop_pre_header
      _
    $region3: #{encoder_forward.1} parent=1 // loop_header
      %s26 = sphi 0, %s30
      %p27 = scmp.ge.s32.totalorder %s26, 4
      %s34 = sphi 0, %s34
      %s36 = sphi 0, %s34
      %s37 = sphi 0, %s36
      %s51 = sphi 0, %s37
      %s57 = sphi 0, %s59
      %s60 = sphi 0, %s57
      %s61 = sphi 0, %s60
      %s77 = sphi 0, %s61
      %s83 = sphi 0, %s85
      %s86 = sphi 0, %s83
      %s87 = sphi 0, %s86
      %s103 = sphi 0, %s87
      %s109 = sphi 0, %s111
      %s112 = sphi 0, %s109
      %s113 = sphi 0, %s112
      %s129 = sphi 0, %s113
      %s135 = sphi 0, %s137
      %s138 = sphi 0, %s135
      %s139 = sphi 0, %s138
      %s155 = sphi 0, %s139
      %s161 = sphi 0, %s163
      %s164 = sphi 0, %s161
      %s165 = sphi 0, %s164
      %s181 = sphi 0, %s165
      %s187 = sphi 0, %s189
      %s190 = sphi 0, %s187
      %s191 = sphi 0, %s190
      %s207 = sphi 0, %s191
      %s213 = sphi 0, %s215
      %s216 = sphi 0, %s213
      %s217 = sphi 0, %s216
      %s233 = sphi 0, %s217
      %s239 = sphi 0, %s241
      %s242 = sphi 0, %s239
      %s243 = sphi 0, %s242
      %s259 = sphi 0, %s243
      %s265 = sphi 0, %s267
      %s268 = sphi 0, %s265
      %s269 = sphi 0, %s268
      %s285 = sphi 0, %s269
      %s291 = sphi 0, %s293
      %s294 = sphi 0, %s291
      %s295 = sphi 0, %s294
      %s311 = sphi 0, %s295
      %s317 = sphi 0, %s319
      %s320 = sphi 0, %s317
      %s321 = sphi 0, %s320
      %s337 = sphi 0, %s321
      %s343 = sphi 0, %s345
      %s346 = sphi 0, %s343
      %s347 = sphi 0, %s346
      %s363 = sphi 0, %s347
      %s369 = sphi 0, %s371
      %s372 = sphi 0, %s369
      %s373 = sphi 0, %s372
      %s389 = sphi 0, %s373
      %s395 = sphi 0, %s397
      %s398 = sphi 0, %s395
      %s399 = sphi 0, %s398
      %s415 = sphi 0, %s399
      %s421 = sphi 0, %s423
      %s424 = sphi 0, %s421
      %s425 = sphi 0, %s424
      %s441 = sphi 0, %s425
      %s447 = sphi 0, %s449
      %s450 = sphi 0, %s447
      %s451 = sphi 0, %s450
      %s467 = sphi 0, %s451
      %s471 = sphi 0, %s471
      %s473 = sphi 0, %s471
      %s474 = sphi 0, %s473
      %s488 = sphi 0, %s474
      %s492 = sphi 0, %s492
      %s494 = sphi 0, %s492
      %s495 = sphi 0, %s494
      %s509 = sphi 0, %s495
      %s513 = sphi 0, %s513
      %s515 = sphi 0, %s513
      %s516 = sphi 0, %s515
      %s530 = sphi 0, %s516
    $region4: #{encoder_forward.1} parent=1 // loop_header_branch
      %29 = sbr.rel (%p27) target = $region8
    $region5: #{encoder_forward.1} parent=1 // loop_body
      %s31 = ssub.s32 %s26, 1
      %s32 = ssub.s32 %s26, 2
      %s33 = sadd.s32 %s26, 1
      %s35 = sadd.s32 %s34, 1
      %p38 = scmp.eq.s32.totalorder %s26, 1
      %p39 = scmp.ne.s32.totalorder %s34, %s36
      %p40 = scmp.eq.s32.totalorder %s26, 0
      %p41 = por %p39, %p40
      %p42 = scmp.ne.s32.totalorder %s34, %s36
      %p43 = scmp.eq.s32.totalorder %s31, 1
      %p44 = por %p42, %p43
      %p45 = scmp.ne.s32.totalorder %s36, %s37
      %p46 = scmp.eq.s32.totalorder %s31, 0
      %p47 = por %p45, %p46
      %p48 = scmp.ne.s32.totalorder %s36, %s37
      %p49 = scmp.eq.s32.totalorder %s32, 1
      %p50 = por %p48, %p49
      %p52 = scmp.ne.s32.totalorder %s37, %s51
      %p53 = scmp.eq.s32.totalorder %s32, 0
      %p54 = por %p52, %p53
      %s55 = ssub.s32 %s26, %s33
      %p56 = scmp.eq.s32.totalorder %s55, 0
      %s58 = sadd.s32 %s57, 1
      %s59 = scalar_select %p56, %s57, %s58
      %p62 = pneg %p56
      %p63 = scmp.eq.s32.totalorder %s26, 1
      %p64 = por %p62, %p63
      %p65 = scmp.ne.s32.totalorder %s57, %s60
      %p66 = scmp.eq.s32.totalorder %s26, 0
      %p67 = por %p65, %p66
      %p68 = scmp.ne.s32.totalorder %s57, %s60
      %p69 = scmp.eq.s32.totalorder %s31, 1
      %p70 = por %p68, %p69
      %p71 = scmp.ne.s32.totalorder %s60, %s61
      %p72 = scmp.eq.s32.totalorder %s31, 0
      %p73 = por %p71, %p72
      %p74 = scmp.ne.s32.totalorder %s60, %s61
      %p75 = scmp.eq.s32.totalorder %s32, 1
      %p76 = por %p74, %p75
      %p78 = scmp.ne.s32.totalorder %s61, %s77
      %p79 = scmp.eq.s32.totalorder %s32, 0
      %p80 = por %p78, %p79
      %s81 = ssub.s32 %s26, %s33
      %p82 = scmp.eq.s32.totalorder %s81, 0
      %s84 = sadd.s32 %s83, 1
      %s85 = scalar_select %p82, %s83, %s84
      %p88 = pneg %p82
      %p89 = scmp.eq.s32.totalorder %s26, 1
      %p90 = por %p88, %p89
      %p91 = scmp.ne.s32.totalorder %s83, %s86
      %p92 = scmp.eq.s32.totalorder %s26, 0
      %p93 = por %p91, %p92
      %p94 = scmp.ne.s32.totalorder %s83, %s86
      %p95 = scmp.eq.s32.totalorder %s31, 1
      %p96 = por %p94, %p95
      %p97 = scmp.ne.s32.totalorder %s86, %s87
      %p98 = scmp.eq.s32.totalorder %s31, 0
      %p99 = por %p97, %p98
      %p100 = scmp.ne.s32.totalorder %s86, %s87
      %p101 = scmp.eq.s32.totalorder %s32, 1
      %p102 = por %p100, %p101
      %p104 = scmp.ne.s32.totalorder %s87, %s103
      %p105 = scmp.eq.s32.totalorder %s32, 0
      %p106 = por %p104, %p105
      %s107 = ssub.s32 %s26, %s33
      %p108 = scmp.eq.s32.totalorder %s107, 0
      %s110 = sadd.s32 %s109, 1
      %s111 = scalar_select %p108, %s109, %s110
      %p114 = pneg %p108
      %p115 = scmp.eq.s32.totalorder %s26, 1
      %p116 = por %p114, %p115
      %p117 = scmp.ne.s32.totalorder %s109, %s112
      %p118 = scmp.eq.s32.totalorder %s26, 0
      %p119 = por %p117, %p118
      %p120 = scmp.ne.s32.totalorder %s109, %s112
      %p121 = scmp.eq.s32.totalorder %s31, 1
      %p122 = por %p120, %p121
      %p123 = scmp.ne.s32.totalorder %s112, %s113
      %p124 = scmp.eq.s32.totalorder %s31, 0
      %p125 = por %p123, %p124
      %p126 = scmp.ne.s32.totalorder %s112, %s113
      %p127 = scmp.eq.s32.totalorder %s32, 1
      %p128 = por %p126, %p127
      %p130 = scmp.ne.s32.totalorder %s113, %s129
      %p131 = scmp.eq.s32.totalorder %s32, 0
      %p132 = por %p130, %p131
      %s133 = ssub.s32 %s26, %s33
      %p134 = scmp.eq.s32.totalorder %s133, 0
      %s136 = sadd.s32 %s135, 1
      %s137 = scalar_select %p134, %s135, %s136
      %p140 = pneg %p134
      %p141 = scmp.eq.s32.totalorder %s26, 1
      %p142 = por %p140, %p141
      %p143 = scmp.ne.s32.totalorder %s135, %s138
      %p144 = scmp.eq.s32.totalorder %s26, 0
      %p145 = por %p143, %p144
      %p146 = scmp.ne.s32.totalorder %s135, %s138
      %p147 = scmp.eq.s32.totalorder %s31, 1
      %p148 = por %p146, %p147
      %p149 = scmp.ne.s32.totalorder %s138, %s139
      %p150 = scmp.eq.s32.totalorder %s31, 0
      %p151 = por %p149, %p150
      %p152 = scmp.ne.s32.totalorder %s138, %s139
      %p153 = scmp.eq.s32.totalorder %s32, 1
      %p154 = por %p152, %p153
      %p156 = scmp.ne.s32.totalorder %s139, %s155
      %p157 = scmp.eq.s32.totalorder %s32, 0
      %p158 = por %p156, %p157
      %s159 = ssub.s32 %s26, %s33
      %p160 = scmp.eq.s32.totalorder %s159, 0
      %s162 = sadd.s32 %s161, 1
      %s163 = scalar_select %p160, %s161, %s162
      %p166 = pneg %p160
      %p167 = scmp.eq.s32.totalorder %s26, 1
      %p168 = por %p166, %p167
      %p169 = scmp.ne.s32.totalorder %s161, %s164
      %p170 = scmp.eq.s32.totalorder %s26, 0
      %p171 = por %p169, %p170
      %p172 = scmp.ne.s32.totalorder %s161, %s164
      %p173 = scmp.eq.s32.totalorder %s31, 1
      %p174 = por %p172, %p173
      %p175 = scmp.ne.s32.totalorder %s164, %s165
      %p176 = scmp.eq.s32.totalorder %s31, 0
      %p177 = por %p175, %p176
      %p178 = scmp.ne.s32.totalorder %s164, %s165
      %p179 = scmp.eq.s32.totalorder %s32, 1
      %p180 = por %p178, %p179
      %p182 = scmp.ne.s32.totalorder %s165, %s181
      %p183 = scmp.eq.s32.totalorder %s32, 0
      %p184 = por %p182, %p183
      %s185 = ssub.s32 %s26, %s33
      %p186 = scmp.eq.s32.totalorder %s185, 0
      %s188 = sadd.s32 %s187, 1
      %s189 = scalar_select %p186, %s187, %s188
      %p192 = pneg %p186
      %p193 = scmp.eq.s32.totalorder %s26, 1
      %p194 = por %p192, %p193
      %p195 = scmp.ne.s32.totalorder %s187, %s190
      %p196 = scmp.eq.s32.totalorder %s26, 0
      %p197 = por %p195, %p196
      %p198 = scmp.ne.s32.totalorder %s187, %s190
      %p199 = scmp.eq.s32.totalorder %s31, 1
      %p200 = por %p198, %p199
      %p201 = scmp.ne.s32.totalorder %s190, %s191
      %p202 = scmp.eq.s32.totalorder %s31, 0
      %p203 = por %p201, %p202
      %p204 = scmp.ne.s32.totalorder %s190, %s191
      %p205 = scmp.eq.s32.totalorder %s32, 1
      %p206 = por %p204, %p205
      %p208 = scmp.ne.s32.totalorder %s191, %s207
      %p209 = scmp.eq.s32.totalorder %s32, 0
      %p210 = por %p208, %p209
      %s211 = ssub.s32 %s26, %s33
      %p212 = scmp.eq.s32.totalorder %s211, 0
      %s214 = sadd.s32 %s213, 1
      %s215 = scalar_select %p212, %s213, %s214
      %p218 = pneg %p212
      %p219 = scmp.eq.s32.totalorder %s26, 1
      %p220 = por %p218, %p219
      %p221 = scmp.ne.s32.totalorder %s213, %s216
      %p222 = scmp.eq.s32.totalorder %s26, 0
      %p223 = por %p221, %p222
      %p224 = scmp.ne.s32.totalorder %s213, %s216
      %p225 = scmp.eq.s32.totalorder %s31, 1
      %p226 = por %p224, %p225
      %p227 = scmp.ne.s32.totalorder %s216, %s217
      %p228 = scmp.eq.s32.totalorder %s31, 0
      %p229 = por %p227, %p228
      %p230 = scmp.ne.s32.totalorder %s216, %s217
      %p231 = scmp.eq.s32.totalorder %s32, 1
      %p232 = por %p230, %p231
      %p234 = scmp.ne.s32.totalorder %s217, %s233
      %p235 = scmp.eq.s32.totalorder %s32, 0
      %p236 = por %p234, %p235
      %s237 = ssub.s32 %s26, %s33
      %p238 = scmp.eq.s32.totalorder %s237, 0
      %s240 = sadd.s32 %s239, 1
      %s241 = scalar_select %p238, %s239, %s240
      %p244 = pneg %p238
      %p245 = scmp.eq.s32.totalorder %s26, 1
      %p246 = por %p244, %p245
      %p247 = scmp.ne.s32.totalorder %s239, %s242
      %p248 = scmp.eq.s32.totalorder %s26, 0
      %p249 = por %p247, %p248
      %p250 = scmp.ne.s32.totalorder %s239, %s242
      %p251 = scmp.eq.s32.totalorder %s31, 1
      %p252 = por %p250, %p251
      %p253 = scmp.ne.s32.totalorder %s242, %s243
      %p254 = scmp.eq.s32.totalorder %s31, 0
      %p255 = por %p253, %p254
      %p256 = scmp.ne.s32.totalorder %s242, %s243
      %p257 = scmp.eq.s32.totalorder %s32, 1
      %p258 = por %p256, %p257
      %p260 = scmp.ne.s32.totalorder %s243, %s259
      %p261 = scmp.eq.s32.totalorder %s32, 0
      %p262 = por %p260, %p261
      %s263 = ssub.s32 %s26, %s33
      %p264 = scmp.eq.s32.totalorder %s263, 0
      %s266 = sadd.s32 %s265, 1
      %s267 = scalar_select %p264, %s265, %s266
      %p270 = pneg %p264
      %p271 = scmp.eq.s32.totalorder %s26, 1
      %p272 = por %p270, %p271
      %p273 = scmp.ne.s32.totalorder %s265, %s268
      %p274 = scmp.eq.s32.totalorder %s26, 0
      %p275 = por %p273, %p274
      %p276 = scmp.ne.s32.totalorder %s265, %s268
      %p277 = scmp.eq.s32.totalorder %s31, 1
      %p278 = por %p276, %p277
      %p279 = scmp.ne.s32.totalorder %s268, %s269
      %p280 = scmp.eq.s32.totalorder %s31, 0
      %p281 = por %p279, %p280
      %p282 = scmp.ne.s32.totalorder %s268, %s269
      %p283 = scmp.eq.s32.totalorder %s32, 1
      %p284 = por %p282, %p283
      %p286 = scmp.ne.s32.totalorder %s269, %s285
      %p287 = scmp.eq.s32.totalorder %s32, 0
      %p288 = por %p286, %p287
      %s289 = ssub.s32 %s26, %s33
      %p290 = scmp.eq.s32.totalorder %s289, 0
      %s292 = sadd.s32 %s291, 1
      %s293 = scalar_select %p290, %s291, %s292
      %p296 = pneg %p290
      %p297 = scmp.eq.s32.totalorder %s26, 1
      %p298 = por %p296, %p297
      %p299 = scmp.ne.s32.totalorder %s291, %s294
      %p300 = scmp.eq.s32.totalorder %s26, 0
      %p301 = por %p299, %p300
      %p302 = scmp.ne.s32.totalorder %s291, %s294
      %p303 = scmp.eq.s32.totalorder %s31, 1
      %p304 = por %p302, %p303
      %p305 = scmp.ne.s32.totalorder %s294, %s295
      %p306 = scmp.eq.s32.totalorder %s31, 0
      %p307 = por %p305, %p306
      %p308 = scmp.ne.s32.totalorder %s294, %s295
      %p309 = scmp.eq.s32.totalorder %s32, 1
      %p310 = por %p308, %p309
      %p312 = scmp.ne.s32.totalorder %s295, %s311
      %p313 = scmp.eq.s32.totalorder %s32, 0
      %p314 = por %p312, %p313
      %s315 = ssub.s32 %s26, %s33
      %p316 = scmp.eq.s32.totalorder %s315, 0
      %s318 = sadd.s32 %s317, 1
      %s319 = scalar_select %p316, %s317, %s318
      %p322 = pneg %p316
      %p323 = scmp.eq.s32.totalorder %s26, 1
      %p324 = por %p322, %p323
      %p325 = scmp.ne.s32.totalorder %s317, %s320
      %p326 = scmp.eq.s32.totalorder %s26, 0
      %p327 = por %p325, %p326
      %p328 = scmp.ne.s32.totalorder %s317, %s320
      %p329 = scmp.eq.s32.totalorder %s31, 1
      %p330 = por %p328, %p329
      %p331 = scmp.ne.s32.totalorder %s320, %s321
      %p332 = scmp.eq.s32.totalorder %s31, 0
      %p333 = por %p331, %p332
      %p334 = scmp.ne.s32.totalorder %s320, %s321
      %p335 = scmp.eq.s32.totalorder %s32, 1
      %p336 = por %p334, %p335
      %p338 = scmp.ne.s32.totalorder %s321, %s337
      %p339 = scmp.eq.s32.totalorder %s32, 0
      %p340 = por %p338, %p339
      %s341 = ssub.s32 %s26, %s33
      %p342 = scmp.eq.s32.totalorder %s341, 0
      %s344 = sadd.s32 %s343, 1
      %s345 = scalar_select %p342, %s343, %s344
      %p348 = pneg %p342
      %p349 = scmp.eq.s32.totalorder %s26, 1
      %p350 = por %p348, %p349
      %p351 = scmp.ne.s32.totalorder %s343, %s346
      %p352 = scmp.eq.s32.totalorder %s26, 0
      %p353 = por %p351, %p352
      %p354 = scmp.ne.s32.totalorder %s343, %s346
      %p355 = scmp.eq.s32.totalorder %s31, 1
      %p356 = por %p354, %p355
      %p357 = scmp.ne.s32.totalorder %s346, %s347
      %p358 = scmp.eq.s32.totalorder %s31, 0
      %p359 = por %p357, %p358
      %p360 = scmp.ne.s32.totalorder %s346, %s347
      %p361 = scmp.eq.s32.totalorder %s32, 1
      %p362 = por %p360, %p361
      %p364 = scmp.ne.s32.totalorder %s347, %s363
      %p365 = scmp.eq.s32.totalorder %s32, 0
      %p366 = por %p364, %p365
      %s367 = ssub.s32 %s26, %s33
      %p368 = scmp.eq.s32.totalorder %s367, 0
      %s370 = sadd.s32 %s369, 1
      %s371 = scalar_select %p368, %s369, %s370
      %p374 = pneg %p368
      %p375 = scmp.eq.s32.totalorder %s26, 1
      %p376 = por %p374, %p375
      %p377 = scmp.ne.s32.totalorder %s369, %s372
      %p378 = scmp.eq.s32.totalorder %s26, 0
      %p379 = por %p377, %p378
      %p380 = scmp.ne.s32.totalorder %s369, %s372
      %p381 = scmp.eq.s32.totalorder %s31, 1
      %p382 = por %p380, %p381
      %p383 = scmp.ne.s32.totalorder %s372, %s373
      %p384 = scmp.eq.s32.totalorder %s31, 0
      %p385 = por %p383, %p384
      %p386 = scmp.ne.s32.totalorder %s372, %s373
      %p387 = scmp.eq.s32.totalorder %s32, 1
      %p388 = por %p386, %p387
      %p390 = scmp.ne.s32.totalorder %s373, %s389
      %p391 = scmp.eq.s32.totalorder %s32, 0
      %p392 = por %p390, %p391
      %s393 = ssub.s32 %s26, %s33
      %p394 = scmp.eq.s32.totalorder %s393, 0
      %s396 = sadd.s32 %s395, 1
      %s397 = scalar_select %p394, %s395, %s396
      %p400 = pneg %p394
      %p401 = scmp.eq.s32.totalorder %s26, 1
      %p402 = por %p400, %p401
      %p403 = scmp.ne.s32.totalorder %s395, %s398
      %p404 = scmp.eq.s32.totalorder %s26, 0
      %p405 = por %p403, %p404
      %p406 = scmp.ne.s32.totalorder %s395, %s398
      %p407 = scmp.eq.s32.totalorder %s31, 1
      %p408 = por %p406, %p407
      %p409 = scmp.ne.s32.totalorder %s398, %s399
      %p410 = scmp.eq.s32.totalorder %s31, 0
      %p411 = por %p409, %p410
      %p412 = scmp.ne.s32.totalorder %s398, %s399
      %p413 = scmp.eq.s32.totalorder %s32, 1
      %p414 = por %p412, %p413
      %p416 = scmp.ne.s32.totalorder %s399, %s415
      %p417 = scmp.eq.s32.totalorder %s32, 0
      %p418 = por %p416, %p417
      %s419 = ssub.s32 %s26, %s33
      %p420 = scmp.eq.s32.totalorder %s419, 0
      %s422 = sadd.s32 %s421, 1
      %s423 = scalar_select %p420, %s421, %s422
      %p426 = pneg %p420
      %p427 = scmp.eq.s32.totalorder %s26, 1
      %p428 = por %p426, %p427
      %p429 = scmp.ne.s32.totalorder %s421, %s424
      %p430 = scmp.eq.s32.totalorder %s26, 0
      %p431 = por %p429, %p430
      %p432 = scmp.ne.s32.totalorder %s421, %s424
      %p433 = scmp.eq.s32.totalorder %s31, 1
      %p434 = por %p432, %p433
      %p435 = scmp.ne.s32.totalorder %s424, %s425
      %p436 = scmp.eq.s32.totalorder %s31, 0
      %p437 = por %p435, %p436
      %p438 = scmp.ne.s32.totalorder %s424, %s425
      %p439 = scmp.eq.s32.totalorder %s32, 1
      %p440 = por %p438, %p439
      %p442 = scmp.ne.s32.totalorder %s425, %s441
      %p443 = scmp.eq.s32.totalorder %s32, 0
      %p444 = por %p442, %p443
      %s445 = ssub.s32 %s26, %s33
      %p446 = scmp.eq.s32.totalorder %s445, 0
      %s448 = sadd.s32 %s447, 1
      %s449 = scalar_select %p446, %s447, %s448
      %p452 = pneg %p446
      %p453 = scmp.eq.s32.totalorder %s26, 1
      %p454 = por %p452, %p453
      %p455 = scmp.ne.s32.totalorder %s447, %s450
      %p456 = scmp.eq.s32.totalorder %s26, 0
      %p457 = por %p455, %p456
      %p458 = scmp.ne.s32.totalorder %s447, %s450
      %p459 = scmp.eq.s32.totalorder %s31, 1
      %p460 = por %p458, %p459
      %p461 = scmp.ne.s32.totalorder %s450, %s451
      %p462 = scmp.eq.s32.totalorder %s31, 0
      %p463 = por %p461, %p462
      %p464 = scmp.ne.s32.totalorder %s450, %s451
      %p465 = scmp.eq.s32.totalorder %s32, 1
      %p466 = por %p464, %p465
      %p468 = scmp.ne.s32.totalorder %s451, %s467
      %p469 = scmp.eq.s32.totalorder %s32, 0
      %p470 = por %p468, %p469
      %s472 = sadd.s32 %s471, 1
      %p475 = scmp.eq.s32.totalorder %s26, 1
      %p476 = scmp.ne.s32.totalorder %s471, %s473
      %p477 = scmp.eq.s32.totalorder %s26, 0
      %p478 = por %p476, %p477
      %p479 = scmp.ne.s32.totalorder %s471, %s473
      %p480 = scmp.eq.s32.totalorder %s31, 1
      %p481 = por %p479, %p480
      %p482 = scmp.ne.s32.totalorder %s473, %s474
      %p483 = scmp.eq.s32.totalorder %s31, 0
      %p484 = por %p482, %p483
      %p485 = scmp.ne.s32.totalorder %s473, %s474
      %p486 = scmp.eq.s32.totalorder %s32, 1
      %p487 = por %p485, %p486
      %p489 = scmp.ne.s32.totalorder %s474, %s488
      %p490 = scmp.eq.s32.totalorder %s32, 0
      %p491 = por %p489, %p490
      %s493 = sadd.s32 %s492, 1
      %p496 = scmp.eq.s32.totalorder %s26, 1
      %p497 = scmp.ne.s32.totalorder %s492, %s494
      %p498 = scmp.eq.s32.totalorder %s26, 0
      %p499 = por %p497, %p498
      %p500 = scmp.ne.s32.totalorder %s492, %s494
      %p501 = scmp.eq.s32.totalorder %s31, 1
      %p502 = por %p500, %p501
      %p503 = scmp.ne.s32.totalorder %s494, %s495
      %p504 = scmp.eq.s32.totalorder %s31, 0
      %p505 = por %p503, %p504
      %p506 = scmp.ne.s32.totalorder %s494, %s495
      %p507 = scmp.eq.s32.totalorder %s32, 1
      %p508 = por %p506, %p507
      %p510 = scmp.ne.s32.totalorder %s495, %s509
      %p511 = scmp.eq.s32.totalorder %s32, 0
      %p512 = por %p510, %p511
      %s514 = sadd.s32 %s513, 1
      %p517 = scmp.eq.s32.totalorder %s26, 1
      %p518 = scmp.ne.s32.totalorder %s513, %s515
      %p519 = scmp.eq.s32.totalorder %s26, 0
      %p520 = por %p518, %p519
      %p521 = scmp.ne.s32.totalorder %s513, %s515
      %p522 = scmp.eq.s32.totalorder %s31, 1
      %p523 = por %p521, %p522
      %p524 = scmp.ne.s32.totalorder %s515, %s516
      %p525 = scmp.eq.s32.totalorder %s31, 0
      %p526 = por %p524, %p525
      %p527 = scmp.ne.s32.totalorder %s515, %s516
      %p528 = scmp.eq.s32.totalorder %s32, 1
      %p529 = por %p527, %p528
      %p531 = scmp.ne.s32.totalorder %s516, %s530
      %p532 = scmp.eq.s32.totalorder %s32, 0
      %p533 = por %p531, %p532
      %p534 = scmp.le.s32.totalorder 1, %s26
      %p535 = scmp.lt.s32.totalorder %s26, 3
      %p536 = pnand %p534, %p535
      %p537 = pneg %p536
      // Predicated region
      $region9: #{encoder_forward.1} parent=5 // pred_check
        _
      $region10: #{encoder_forward.1} parent=5 // pred_check_branch
        %539 = sbr.rel (%p536) target = $region12
      $region11: #{encoder_forward.1} parent=5 // pred_region
        %s540 = ssub.s32 %s26, 1
        // Predicated region
        $region13: #{encoder_forward.1} parent=11 // pred_check
          %p541 = pneg %p47
        $region14: #{encoder_forward.1} parent=11 // pred_check_branch
          %543 = sbr.rel (%p541) target = $region16
        $region15: #{encoder_forward.1} parent=11 // pred_region
          _
        $region16: #{encoder_forward.1} parent=11 // pred_fallthru
          _
        // Predicated region
        $region17: #{encoder_forward.1} parent=11 // pred_check
          %p544 = pneg %p484
        $region18: #{encoder_forward.1} parent=11 // pred_check_branch
          %546 = sbr.rel (%p544) target = $region20
        $region19: #{encoder_forward.1} parent=11 // pred_region
          _
        $region20: #{encoder_forward.1} parent=11 // pred_fallthru
          _
        // Predicated region
        $region21: #{encoder_forward.1} parent=11 // pred_check
          %p547 = pneg %p505
        $region22: #{encoder_forward.1} parent=11 // pred_check_branch
          %549 = sbr.rel (%p547) target = $region24
        $region23: #{encoder_forward.1} parent=11 // pred_region
          _
        $region24: #{encoder_forward.1} parent=11 // pred_fallthru
          _
      $region12: #{encoder_forward.1} parent=5 // pred_fallthru
        _
      %p550 = scmp.lt.s32.totalorder %s26, 2
      // Predicated region
      $region25: #{encoder_forward.1} parent=5 // pred_check
        %p551 = pneg %p550
      $region26: #{encoder_forward.1} parent=5 // pred_check_branch
        %553 = sbr.rel (%p551) target = $region28
      $region27: #{encoder_forward.1} parent=5 // pred_region
        // Predicated region
        $region29: #{encoder_forward.1} parent=27 // pred_check
          %p554 = pneg %p67
        $region30: #{encoder_forward.1} parent=27 // pred_check_branch
          %556 = sbr.rel (%p554) target = $region32
        $region31: #{encoder_forward.1} parent=27 // pred_region
          %p557 = scmp.lt.s32.totalorder %s26, 1
          %s558 = scalar_select %p557, %s26, 1
          %s559 = scalar_lea.vmem %s1, %s558
        $region32: #{encoder_forward.1} parent=27 // pred_fallthru
          _
        // Predicated region
        $region33: #{encoder_forward.1} parent=27 // pred_check
          %p560 = pneg %p93
        $region34: #{encoder_forward.1} parent=27 // pred_check_branch
          %562 = sbr.rel (%p560) target = $region36
        $region35: #{encoder_forward.1} parent=27 // pred_region
          %p563 = scmp.lt.s32.totalorder %s26, 1
          %s564 = scalar_select %p563, %s26, 1
          %s565 = scalar_lea.vmem %s2, %s564
        $region36: #{encoder_forward.1} parent=27 // pred_fallthru
          _
        // Predicated region
        $region37: #{encoder_forward.1} parent=27 // pred_check
          %p566 = pneg %p119
        $region38: #{encoder_forward.1} parent=27 // pred_check_branch
          %568 = sbr.rel (%p566) target = $region40
        $region39: #{encoder_forward.1} parent=27 // pred_region
          %p569 = scmp.lt.s32.totalorder %s26, 1
          %s570 = scalar_select %p569, %s26, 1
          %s571 = smul.addr %s570, 16
          %s572 = smul.addr %s571, 8
          %s573 = scalar_lea.vmem %s3, %s572
        $region40: #{encoder_forward.1} parent=27 // pred_fallthru
          _
        // Predicated region
        $region41: #{encoder_forward.1} parent=27 // pred_check
          %p574 = pneg %p145
        $region42: #{encoder_forward.1} parent=27 // pred_check_branch
          %576 = sbr.rel (%p574) target = $region44
        $region43: #{encoder_forward.1} parent=27 // pred_region
          %p577 = scmp.lt.s32.totalorder %s26, 1
          %s578 = scalar_select %p577, %s26, 1
          %s579 = smul.addr %s578, 4
          %s580 = scalar_lea.vmem %s4, %s579
        $region44: #{encoder_forward.1} parent=27 // pred_fallthru
          _
        // Predicated region
        $region45: #{encoder_forward.1} parent=27 // pred_check
          %p581 = pneg %p171
        $region46: #{encoder_forward.1} parent=27 // pred_check_branch
          %583 = sbr.rel (%p581) target = $region48
        $region47: #{encoder_forward.1} parent=27 // pred_region
          %p584 = scmp.lt.s32.totalorder %s26, 1
          %s585 = scalar_select %p584, %s26, 1
          %s586 = smul.addr %s585, 16
          %s587 = smul.addr %s586, 8
          %s588 = scalar_lea.vmem %s5, %s587
        $region48: #{encoder_forward.1} parent=27 // pred_fallthru
          _
        // Predicated region
        $region49: #{encoder_forward.1} parent=27 // pred_check
          %p589 = pneg %p197
        $region50: #{encoder_forward.1} parent=27 // pred_check_branch
          %591 = sbr.rel (%p589) target = $region52
        $region51: #{encoder_forward.1} parent=27 // pred_region
          %p592 = scmp.lt.s32.totalorder %s26, 1
          %s593 = scalar_select %p592, %s26, 1
          %s594 = smul.addr %s593, 4
          %s595 = scalar_lea.vmem %s6, %s594
        $region52: #{encoder_forward.1} parent=27 // pred_fallthru
          _
        // Predicated region
        $region53: #{encoder_forward.1} parent=27 // pred_check
          %p596 = pneg %p223
        $region54: #{encoder_forward.1} parent=27 // pred_check_branch
          %598 = sbr.rel (%p596) target = $region56
        $region55: #{encoder_forward.1} parent=27 // pred_region
          %p599 = scmp.lt.s32.totalorder %s26, 1
          %s600 = scalar_select %p599, %s26, 1
          %s601 = smul.addr %s600, 16
          %s602 = smul.addr %s601, 8
          %s603 = scalar_lea.vmem %s7, %s602
        $region56: #{encoder_forward.1} parent=27 // pred_fallthru
          _
        // Predicated region
        $region57: #{encoder_forward.1} parent=27 // pred_check
          %p604 = pneg %p249
        $region58: #{encoder_forward.1} parent=27 // pred_check_branch
          %606 = sbr.rel (%p604) target = $region60
        $region59: #{encoder_forward.1} parent=27 // pred_region
          %p607 = scmp.lt.s32.totalorder %s26, 1
          %s608 = scalar_select %p607, %s26, 1
          %s609 = smul.addr %s608, 4
          %s610 = scalar_lea.vmem %s8, %s609
        $region60: #{encoder_forward.1} parent=27 // pred_fallthru
          _
        // Predicated region
        $region61: #{encoder_forward.1} parent=27 // pred_check
          %p611 = pneg %p275
        $region62: #{encoder_forward.1} parent=27 // pred_check_branch
          %613 = sbr.rel (%p611) target = $region64
        $region63: #{encoder_forward.1} parent=27 // pred_region
          %p614 = scmp.lt.s32.totalorder %s26, 1
          %s615 = scalar_select %p614, %s26, 1
          %s616 = smul.addr %s615, 4
          %s617 = smul.addr %s616, 8
          %s618 = scalar_lea.vmem %s9, %s617
        $region64: #{encoder_forward.1} parent=27 // pred_fallthru
          _
        // Predicated region
        $region65: #{encoder_forward.1} parent=27 // pred_check
          %p619 = pneg %p301
        $region66: #{encoder_forward.1} parent=27 // pred_check_branch
          %621 = sbr.rel (%p619) target = $region68
        $region67: #{encoder_forward.1} parent=27 // pred_region
          %p622 = scmp.lt.s32.totalorder %s26, 1
          %s623 = scalar_select %p622, %s26, 1
          %s624 = scalar_lea.vmem %s10, %s623
        $region68: #{encoder_forward.1} parent=27 // pred_fallthru
          _
        // Predicated region
        $region69: #{encoder_forward.1} parent=27 // pred_check
          %p625 = pneg %p327
        $region70: #{encoder_forward.1} parent=27 // pred_check_branch
          %627 = sbr.rel (%p625) target = $region72
        $region71: #{encoder_forward.1} parent=27 // pred_region
          %p628 = scmp.lt.s32.totalorder %s26, 1
          %s629 = scalar_select %p628, %s26, 1
          %s630 = scalar_lea.vmem %s11, %s629
        $region72: #{encoder_forward.1} parent=27 // pred_fallthru
          _
        // Predicated region
        $region73: #{encoder_forward.1} parent=27 // pred_check
          %p631 = pneg %p353
        $region74: #{encoder_forward.1} parent=27 // pred_check_branch
          %633 = sbr.rel (%p631) target = $region76
        $region75: #{encoder_forward.1} parent=27 // pred_region
          %p634 = scmp.lt.s32.totalorder %s26, 1
          %s635 = scalar_select %p634, %s26, 1
          %s636 = scalar_lea.vmem %s12, %s635
        $region76: #{encoder_forward.1} parent=27 // pred_fallthru
          _
        // Predicated region
        $region77: #{encoder_forward.1} parent=27 // pred_check
          %p637 = pneg %p379
        $region78: #{encoder_forward.1} parent=27 // pred_check_branch
          %639 = sbr.rel (%p637) target = $region80
        $region79: #{encoder_forward.1} parent=27 // pred_region
          %p640 = scmp.lt.s32.totalorder %s26, 1
          %s641 = scalar_select %p640, %s26, 1
          %s642 = smul.addr %s641, 4
          %s643 = smul.addr %s642, 8
          %s644 = scalar_lea.vmem %s13, %s643
        $region80: #{encoder_forward.1} parent=27 // pred_fallthru
          _
        // Predicated region
        $region81: #{encoder_forward.1} parent=27 // pred_check
          %p645 = pneg %p405
        $region82: #{encoder_forward.1} parent=27 // pred_check_branch
          %647 = sbr.rel (%p645) target = $region84
        $region83: #{encoder_forward.1} parent=27 // pred_region
          %p648 = scmp.lt.s32.totalorder %s26, 1
          %s649 = scalar_select %p648, %s26, 1
          %s650 = scalar_lea.vmem %s14, %s649
        $region84: #{encoder_forward.1} parent=27 // pred_fallthru
          _
        // Predicated region
        $region85: #{encoder_forward.1} parent=27 // pred_check
          %p651 = pneg %p431
        $region86: #{encoder_forward.1} parent=27 // pred_check_branch
          %653 = sbr.rel (%p651) target = $region88
        $region87: #{encoder_forward.1} parent=27 // pred_region
          %p654 = scmp.lt.s32.totalorder %s26, 1
          %s655 = scalar_select %p654, %s26, 1
          %s656 = smul.addr %s655, 8
          %s657 = smul.addr %s656, 8
          %s658 = scalar_lea.vmem %s15, %s657
        $region88: #{encoder_forward.1} parent=27 // pred_fallthru
          _
        // Predicated region
        $region89: #{encoder_forward.1} parent=27 // pred_check
          %p659 = pneg %p457
        $region90: #{encoder_forward.1} parent=27 // pred_check_branch
          %661 = sbr.rel (%p659) target = $region92
        $region91: #{encoder_forward.1} parent=27 // pred_region
          %p662 = scmp.lt.s32.totalorder %s26, 1
          %s663 = scalar_select %p662, %s26, 1
          %s664 = scalar_lea.vmem %s16, %s663
        $region92: #{encoder_forward.1} parent=27 // pred_fallthru
          _
      $region28: #{encoder_forward.1} parent=5 // pred_fallthru
        _
      %p665 = scmp.le.s32.totalorder 1, %s26
      %p666 = scmp.lt.s32.totalorder %s26, 3
      %p667 = pnand %p665, %p666
      %p668 = pneg %p667
      // Predicated region
      $region93: #{encoder_forward.1} parent=5 // pred_check
        _
      $region94: #{encoder_forward.1} parent=5 // pred_check_branch
        %670 = sbr.rel (%p667) target = $region96
      $region95: #{encoder_forward.1} parent=5 // pred_region
        %s671 = ssub.s32 %s26, 1
        %p672 = pneg %p47
        %p673 = pneg %p44
        %p674 = scmp.lt.s32.totalorder %s31, 1
        %s675 = scalar_select %p674, %s31, 1
        %s676 = scalar_lea.vmem %s1, %s675
        %p677 = pneg %p73
        %p678 = pneg %p70
        %p679 = scmp.lt.s32.totalorder %s31, 1
        %s680 = scalar_select %p679, %s31, 1
        %s681 = scalar_lea.vmem %s2, %s680
        %p682 = pneg %p99
        %p683 = pneg %p96
        %p684 = scmp.lt.s32.totalorder %s31, 1
        %s685 = scalar_select %p684, %s31, 1
        %s686 = smul.addr %s685, 16
        %s687 = smul.addr %s686, 8
        %s688 = scalar_lea.vmem %s3, %s687
        %p689 = pneg %p125
        %p690 = pneg %p122
        %p691 = scmp.lt.s32.totalorder %s31, 1
        %s692 = scalar_select %p691, %s31, 1
        %s693 = smul.addr %s692, 4
        %s694 = scalar_lea.vmem %s4, %s693
        %p695 = pneg %p151
        %p696 = pneg %p148
        %p697 = scmp.lt.s32.totalorder %s31, 1
        %s698 = scalar_select %p697, %s31, 1
        %s699 = smul.addr %s698, 16
        %s700 = smul.addr %s699, 8
        %s701 = scalar_lea.vmem %s5, %s700
        %p702 = pneg %p177
        %p703 = pneg %p174
        %p704 = scmp.lt.s32.totalorder %s31, 1
        %s705 = scalar_select %p704, %s31, 1
        %s706 = smul.addr %s705, 4
        %s707 = scalar_lea.vmem %s6, %s706
        %p708 = pneg %p203
        %p709 = pneg %p200
        %p710 = scmp.lt.s32.totalorder %s31, 1
        %s711 = scalar_select %p710, %s31, 1
        %s712 = smul.addr %s711, 16
        %s713 = smul.addr %s712, 8
        %s714 = scalar_lea.vmem %s7, %s713
        %p715 = pneg %p229
        %p716 = pneg %p226
        %p717 = scmp.lt.s32.totalorder %s31, 1
        %s718 = scalar_select %p717, %s31, 1
        %s719 = smul.addr %s718, 4
        %s720 = scalar_lea.vmem %s8, %s719
        %p721 = pneg %p255
        %p722 = pneg %p252
        %p723 = scmp.lt.s32.totalorder %s31, 1
        %s724 = scalar_select %p723, %s31, 1
        %s725 = smul.addr %s724, 4
        %s726 = smul.addr %s725, 8
        %s727 = scalar_lea.vmem %s9, %s726
        %p728 = pneg %p281
        %p729 = pneg %p278
        %p730 = scmp.lt.s32.totalorder %s31, 1
        %s731 = scalar_select %p730, %s31, 1
        %s732 = scalar_lea.vmem %s10, %s731
        %p733 = pneg %p307
        %p734 = pneg %p304
        %p735 = scmp.lt.s32.totalorder %s31, 1
        %s736 = scalar_select %p735, %s31, 1
        %s737 = scalar_lea.vmem %s11, %s736
        %p738 = pneg %p333
        %p739 = pneg %p330
        %p740 = scmp.lt.s32.totalorder %s31, 1
        %s741 = scalar_select %p740, %s31, 1
        %s742 = scalar_lea.vmem %s12, %s741
        %p743 = pneg %p359
        %p744 = pneg %p356
        %p745 = scmp.lt.s32.totalorder %s31, 1
        %s746 = scalar_select %p745, %s31, 1
        %s747 = smul.addr %s746, 4
        %s748 = smul.addr %s747, 8
        %s749 = scalar_lea.vmem %s13, %s748
        %p750 = pneg %p385
        %p751 = pneg %p382
        %p752 = scmp.lt.s32.totalorder %s31, 1
        %s753 = scalar_select %p752, %s31, 1
        %s754 = scalar_lea.vmem %s14, %s753
        %p755 = pneg %p411
        %p756 = pneg %p408
        %p757 = scmp.lt.s32.totalorder %s31, 1
        %s758 = scalar_select %p757, %s31, 1
        %s759 = smul.addr %s758, 8
        %s760 = smul.addr %s759, 8
        %s761 = scalar_lea.vmem %s15, %s760
        %p762 = pneg %p437
        %p763 = pneg %p434
        %p764 = scmp.lt.s32.totalorder %s31, 1
        %s765 = scalar_select %p764, %s31, 1
        %s766 = scalar_lea.vmem %s16, %s765
        %p767 = pneg %p463
        %p768 = pneg %p460
        %p769 = pneg %p484
        %p770 = pneg %p481
        %p771 = pneg %p505
        %p772 = pneg %p502
        %p773 = pneg %p526
        %p774 = pneg %p523
        %p775 = scmp.lt.s32.totalorder %s31, 1
        %s776 = scalar_select %p775, %s31, 1
        %s777 = scalar_lea.vmem %s1, %s776
        %p778 = scmp.lt.s32.totalorder %s31, 1
        %s779 = scalar_select %p778, %s31, 1
        %s780 = scalar_lea.vmem %s2, %s779
        %p781 = scmp.lt.s32.totalorder %s31, 1
        %s782 = scalar_select %p781, %s31, 1
        %s783 = smul.addr %s782, 16
        %s784 = smul.addr %s783, 8
        %s785 = scalar_lea.vmem %s3, %s784
        %p786 = scmp.lt.s32.totalorder %s31, 1
        %s787 = scalar_select %p786, %s31, 1
        %s788 = smul.addr %s787, 4
        %s789 = scalar_lea.vmem %s4, %s788
        %p790 = scmp.lt.s32.totalorder %s31, 1
        %s791 = scalar_select %p790, %s31, 1
        %s792 = smul.addr %s791, 16
        %s793 = smul.addr %s792, 8
        %s794 = scalar_lea.vmem %s5, %s793
        %p795 = scmp.lt.s32.totalorder %s31, 1
        %s796 = scalar_select %p795, %s31, 1
        %s797 = smul.addr %s796, 4
        %s798 = scalar_lea.vmem %s6, %s797
        %p799 = scmp.lt.s32.totalorder %s31, 1
        %s800 = scalar_select %p799, %s31, 1
        %s801 = smul.addr %s800, 16
        %s802 = smul.addr %s801, 8
        %s803 = scalar_lea.vmem %s7, %s802
        %p804 = scmp.lt.s32.totalorder %s31, 1
        %s805 = scalar_select %p804, %s31, 1
        %s806 = smul.addr %s805, 4
        %s807 = scalar_lea.vmem %s8, %s806
        %p808 = scmp.lt.s32.totalorder %s31, 1
        %s809 = scalar_select %p808, %s31, 1
        %s810 = smul.addr %s809, 4
        %s811 = smul.addr %s810, 8
        %s812 = scalar_lea.vmem %s9, %s811
        %p813 = scmp.lt.s32.totalorder %s31, 1
        %s814 = scalar_select %p813, %s31, 1
        %s815 = scalar_lea.vmem %s10, %s814
        %p816 = scmp.lt.s32.totalorder %s31, 1
        %s817 = scalar_select %p816, %s31, 1
        %s818 = scalar_lea.vmem %s11, %s817
        %p819 = scmp.lt.s32.totalorder %s31, 1
        %s820 = scalar_select %p819, %s31, 1
        %s821 = scalar_lea.vmem %s12, %s820
        %p822 = scmp.lt.s32.totalorder %s31, 1
        %s823 = scalar_select %p822, %s31, 1
        %s824 = smul.addr %s823, 4
        %s825 = smul.addr %s824, 8
        %s826 = scalar_lea.vmem %s13, %s825
        %p827 = scmp.lt.s32.totalorder %s31, 1
        %s828 = scalar_select %p827, %s31, 1
        %s829 = scalar_lea.vmem %s14, %s828
        %p830 = scmp.lt.s32.totalorder %s31, 1
        %s831 = scalar_select %p830, %s31, 1
        %s832 = smul.addr %s831, 8
        %s833 = smul.addr %s832, 8
        %s834 = scalar_lea.vmem %s15, %s833
        %p835 = scmp.lt.s32.totalorder %s31, 1
        %s836 = scalar_select %p835, %s31, 1
        %s837 = scalar_lea.vmem %s16, %s836
        %p838 = scmp.eq.s32.totalorder %s31, 0
        // Predicated region
        $region97: #{encoder_forward.1} parent=95 // pred_check
          %p839 = pneg %p838
        $region98: #{encoder_forward.1} parent=95 // pred_check_branch
          %841 = sbr.rel (%p839) target = $region100
        $region99: #{encoder_forward.1} parent=95 // pred_region
          %v842 = vld [vmem:[%s0] sm:$0xff]
          %v843 = vld [vmem:[%s0 + $0x8] sm:$0xff]
          %vm844 = vcmask 261120
          %845 = vst.msk [vmem:[#allocation2] sm:$0xff] %vm844, %v842
          %846 = vst.msk [vmem:[#allocation2 + $0x8] sm:$0xff] %vm844, %v843
        $region100: #{encoder_forward.1} parent=95 // pred_fallthru
          _
        %v847 = vld [vmem:[#allocation2] sm:$0xff]
        %v848 = vld [vmem:[#allocation2 + $0x8] sm:$0xff]
        %v849 = vld [vmem:[%s777] sm:$0x1]
        %v850 = vld [vmem:[%s780] sm:$0x1]
        %vm851 = vcmask 261120
        %v852 = vsel %vm851, %v847, 0.0
        %853 = vadd.xlane.f32.xlu0 %v852
        %v854 = vpop.xlane.xlu0 %853
        %v855 = vsel %vm851, %v848, 0.0
        %856 = vadd.xlane.f32.xlu0 %v855
        %v857 = vpop.xlane.xlu0 %856
        %v858 = vrcp.pop 32.0
        %v859 = vmul.f32 %v854, %v858
        %v860 = vmul.f32 %v857, %v858
        %v861 = vsub.f32 %v847, %v859
        %v862 = vsub.f32 %v848, %v860
        %v863 = vmul.f32 %v861, %v861
        %v864 = vmul.f32 %v862, %v862
        %v865 = vsel %vm851, %v863, 0.0
        %866 = vadd.xlane.f32.xlu0 %v865
        %v867 = vpop.xlane.xlu0 %866
        %v868 = vsel %vm851, %v864, 0.0
        %869 = vadd.xlane.f32.xlu0 %v868
        %v870 = vpop.xlane.xlu0 %869
        %v871 = vmul.f32 %v867, %v858
        %v872 = vmul.f32 %v870, %v858
        %v873 = vadd.f32 %v871, 1e-06
        %v874 = vadd.f32 %v872, 1e-06
        %v875 = vrsqrt.pop %v873
        %v876 = vrsqrt.pop %v874
        %v877 = vmul.f32 %v861, %v875
        %v878 = vmul.f32 %v862, %v876
        %v880 = vlaneseq
        %v881 = vshrl.u32 %v880, 7
        %v882 = vsub.s32 0, %v881
        %v883 = vrot.slane %v849, %v882
        %v885 = vmul.f32 %v877, %v883
        %v886 = vmul.f32 %v878, %v883
        %v888 = vlaneseq
        %v889 = vshrl.u32 %v888, 7
        %v890 = vsub.s32 0, %v889
        %v891 = vrot.slane %v850, %v890
        %v893 = vadd.f32 %v885, %v891
        %v894 = vadd.f32 %v886, %v891
        %v895 = vld [vmem:[%s785] sm:$0xff]
        %v896 = vld [vmem:[%s785 + $0x8] sm:$0xff]
        %v897 = vld [vmem:[%s785 + $0x10] sm:$0xff]
        %v898 = vld [vmem:[%s785 + $0x18] sm:$0xff]
        %v899 = vld [vmem:[%s789] sm:$0x1]
        %v900 = vlaneseq
        %v901 = vshrl.u32 %v900, 7
        %v902 = vsub.s32 0, %v901
        %v903 = vrot.slane %v899, %v902
        %v905 = vsel %vm851, %v893, 0
        %v908 = vsel %vm851, %v894, 0
        %910 = vmatprep.subr.mxu0 0.0
        %911 = vmatpush1.msra.mxu0 0.0
        %912 = vmatprep.subr.mxu0 0.0
        %913 = vmatpush1.msra.mxu0 0.0
        %914 = vmatprep.subr.mxu0 0.0
        %915 = vmatpush1.msra.mxu0 0.0
        %916 = vmatprep.subr.mxu0 0.0
        %917 = vmatpush1.msra.mxu0 0.0
        %918 = vmatprep.subr.mxu0 0.0
        %919 = vmatpush1.msra.mxu0 0.0
        %920 = vmatprep.subr.mxu0 0.0
        %921 = vmatpush1.msra.mxu0 0.0
        %922 = vmatprep.subr.mxu0 0.0
        %923 = vmatpush1.msra.mxu0 0.0
        %924 = vmatprep.subr.mxu0 0.0
        %925 = vmatpush1.msra.mxu0 0.0
        %926 = vmatprep.subr.mxu0 0.0
        %927 = vmatpush1.msra.mxu0 0.0
        %928 = vmatprep.subr.mxu0 0.0
        %929 = vmatpush1.msra.mxu0 0.0
        %930 = vmatprep.subr.mxu0 0.0
        %931 = vmatpush1.msra.mxu0 0.0
        %932 = vmatprep.subr.mxu0 0.0
        %933 = vmatpush1.msra.mxu0 0.0
        %934 = vmatprep.subr.mxu0 0.0
        %935 = vmatpush1.msra.mxu0 %v898
        %936 = vmatprep.subr.mxu0 0.0
        %937 = vmatpush1.msra.mxu0 %v897
        %938 = vmatprep.subr.mxu0 0.0
        %939 = vmatpush1.msra.mxu0 %v896
        %940 = vmatprep.subr.mxu0 0.0
        %941 = vmatpush1.msra.mxu0 %v895
        %942 = vmatprep.subr.mxu0 0.0
        %943 = vmatpush2.msra.mxu0 0.0
        %944 = vmatprep.subr.mxu0 0.0
        %945 = vmatpush2.msra.mxu0 0.0
        %946 = vmatprep.subr.mxu0 0.0
        %947 = vmatpush2.msra.mxu0 0.0
        %948 = vmatprep.subr.mxu0 0.0
        %949 = vmatpush2.msra.mxu0 0.0
        %950 = vmatprep.subr.mxu0 0.0
        %951 = vmatpush2.msra.mxu0 0.0
        %952 = vmatprep.subr.mxu0 0.0
        %953 = vmatpush2.msra.mxu0 0.0
        %954 = vmatprep.subr.mxu0 0.0
        %955 = vmatpush2.msra.mxu0 0.0
        %956 = vmatprep.subr.mxu0 0.0
        %957 = vmatpush2.msra.mxu0 0.0
        %958 = vmatprep.subr.mxu0 0.0
        %959 = vmatpush2.msra.mxu0 0.0
        %960 = vmatprep.subr.mxu0 0.0
        %961 = vmatpush2.msra.mxu0 0.0
        %962 = vmatprep.subr.mxu0 0.0
        %963 = vmatpush2.msra.mxu0 0.0
        %964 = vmatprep.subr.mxu0 0.0
        %965 = vmatpush2.msra.mxu0 0.0
        %966 = vmatprep.subr.mxu0 0.0
        %967 = vmatpush2.msra.mxu0 0.0
        %968 = vmatprep.subr.mxu0 0.0
        %969 = vmatpush2.msra.mxu0 0.0
        %970 = vmatprep.subr.mxu0 0.0
        %971 = vmatpush2.msra.mxu0 0.0
        %972 = vmatprep.subr.mxu0 0.0
        %973 = vmatpush2.msra.mxu0 0.0
        %974 = vmatprep.mubr.f32.mxu0 0.0
        %975 = vmatmul.mubr.f32.gmra.mxu0 %v905
        %v976 = vpop.f32.mrf.mxu0
        %v977 = vadd.f32 %v903, %v976
        %v978 = vpop.f32.mrf.mxu0
        %979 = vmatprep.mubr.f32.mxu0 0.0
        %980 = vmatmul.mubr.f32.gmra.mxu0 %v908
        %v981 = vpop.f32.mrf.mxu0
        %v982 = vadd.f32 %v903, %v981
        %v983 = vpop.f32.mrf.mxu0
        %984 = vdwg.mxu0
        %v985 = vld [vmem:[%s794] sm:$0xff]
        %v986 = vld [vmem:[%s794 + $0x8] sm:$0xff]
        %v987 = vld [vmem:[%s794 + $0x10] sm:$0xff]
        %v988 = vld [vmem:[%s794 + $0x18] sm:$0xff]
        %v989 = vld [vmem:[%s798] sm:$0x1]
        %v990 = vlaneseq
        %v991 = vshrl.u32 %v990, 7
        %v992 = vsub.s32 0, %v991
        %v993 = vrot.slane %v989, %v992
        %994 = vmatprep.subr.mxu0 0.0
        %995 = vmatpush1.msra.mxu0 0.0
        %996 = vmatprep.subr.mxu0 0.0
        %997 = vmatpush1.msra.mxu0 0.0
        %998 = vmatprep.subr.mxu0 0.0
        %999 = vmatpush1.msra.mxu0 0.0
        %1000 = vmatprep.subr.mxu0 0.0
        %1001 = vmatpush1.msra.mxu0 0.0
        %1002 = vmatprep.subr.mxu0 0.0
        %1003 = vmatpush1.msra.mxu0 0.0
        %1004 = vmatprep.subr.mxu0 0.0
        %1005 = vmatpush1.msra.mxu0 0.0
        %1006 = vmatprep.subr.mxu0 0.0
        %1007 = vmatpush1.msra.mxu0 0.0
        %1008 = vmatprep.subr.mxu0 0.0
        %1009 = vmatpush1.msra.mxu0 0.0
        %1010 = vmatprep.subr.mxu0 0.0
        %1011 = vmatpush1.msra.mxu0 0.0
        %1012 = vmatprep.subr.mxu0 0.0
        %1013 = vmatpush1.msra.mxu0 0.0
        %1014 = vmatprep.subr.mxu0 0.0
        %1015 = vmatpush1.msra.mxu0 0.0
        %1016 = vmatprep.subr.mxu0 0.0
        %1017 = vmatpush1.msra.mxu0 0.0
        %1018 = vmatprep.subr.mxu0 0.0
        %1019 = vmatpush1.msra.mxu0 %v988
        %1020 = vmatprep.subr.mxu0 0.0
        %1021 = vmatpush1.msra.mxu0 %v987
        %1022 = vmatprep.subr.mxu0 0.0
        %1023 = vmatpush1.msra.mxu0 %v986
        %1024 = vmatprep.subr.mxu0 0.0
        %1025 = vmatpush1.msra.mxu0 %v985
        %1026 = vmatprep.subr.mxu0 0.0
        %1027 = vmatpush2.msra.mxu0 0.0
        %1028 = vmatprep.subr.mxu0 0.0
        %1029 = vmatpush2.msra.mxu0 0.0
        %1030 = vmatprep.subr.mxu0 0.0
        %1031 = vmatpush2.msra.mxu0 0.0
        %1032 = vmatprep.subr.mxu0 0.0
        %1033 = vmatpush2.msra.mxu0 0.0
        %1034 = vmatprep.subr.mxu0 0.0
        %1035 = vmatpush2.msra.mxu0 0.0
        %1036 = vmatprep.subr.mxu0 0.0
        %1037 = vmatpush2.msra.mxu0 0.0
        %1038 = vmatprep.subr.mxu0 0.0
        %1039 = vmatpush2.msra.mxu0 0.0
        %1040 = vmatprep.subr.mxu0 0.0
        %1041 = vmatpush2.msra.mxu0 0.0
        %1042 = vmatprep.subr.mxu0 0.0
        %1043 = vmatpush2.msra.mxu0 0.0
        %1044 = vmatprep.subr.mxu0 0.0
        %1045 = vmatpush2.msra.mxu0 0.0
        %1046 = vmatprep.subr.mxu0 0.0
        %1047 = vmatpush2.msra.mxu0 0.0
        %1048 = vmatprep.subr.mxu0 0.0
        %1049 = vmatpush2.msra.mxu0 0.0
        %1050 = vmatprep.subr.mxu0 0.0
        %1051 = vmatpush2.msra.mxu0 0.0
        %1052 = vmatprep.subr.mxu0 0.0
        %1053 = vmatpush2.msra.mxu0 0.0
        %1054 = vmatprep.subr.mxu0 0.0
        %1055 = vmatpush2.msra.mxu0 0.0
        %1056 = vmatprep.subr.mxu0 0.0
        %1057 = vmatpush2.msra.mxu0 0.0
        %1058 = vmatprep.mubr.f32.mxu0 0.0
        %1059 = vmatmul.mubr.f32.gmra.mxu0 %v905
        %v1060 = vpop.f32.mrf.mxu0
        %v1061 = vadd.f32 %v993, %v1060
        %v1062 = vpop.f32.mrf.mxu0
        %1063 = vmatprep.mubr.f32.mxu0 0.0
        %1064 = vmatmul.mubr.f32.gmra.mxu0 %v908
        %v1065 = vpop.f32.mrf.mxu0
        %v1066 = vadd.f32 %v993, %v1065
        %v1067 = vpop.f32.mrf.mxu0
        %1068 = vdwg.mxu0
        %v1069 = vld [vmem:[%s803] sm:$0xff]
        %v1070 = vld [vmem:[%s803 + $0x8] sm:$0xff]
        %v1071 = vld [vmem:[%s803 + $0x10] sm:$0xff]
        %v1072 = vld [vmem:[%s803 + $0x18] sm:$0xff]
        %v1073 = vld [vmem:[%s807] sm:$0x1]
        %v1074 = vlaneseq
        %v1075 = vshrl.u32 %v1074, 7
        %v1076 = vsub.s32 0, %v1075
        %v1077 = vrot.slane %v1073, %v1076
        %1078 = vmatprep.subr.mxu0 0.0
        %1079 = vmatpush1.msra.mxu0 0.0
        %1080 = vmatprep.subr.mxu0 0.0
        %1081 = vmatpush1.msra.mxu0 0.0
        %1082 = vmatprep.subr.mxu0 0.0
        %1083 = vmatpush1.msra.mxu0 0.0
        %1084 = vmatprep.subr.mxu0 0.0
        %1085 = vmatpush1.msra.mxu0 0.0
        %1086 = vmatprep.subr.mxu0 0.0
        %1087 = vmatpush1.msra.mxu0 0.0
        %1088 = vmatprep.subr.mxu0 0.0
        %1089 = vmatpush1.msra.mxu0 0.0
        %1090 = vmatprep.subr.mxu0 0.0
        %1091 = vmatpush1.msra.mxu0 0.0
        %1092 = vmatprep.subr.mxu0 0.0
        %1093 = vmatpush1.msra.mxu0 0.0
        %1094 = vmatprep.subr.mxu0 0.0
        %1095 = vmatpush1.msra.mxu0 0.0
        %1096 = vmatprep.subr.mxu0 0.0
        %1097 = vmatpush1.msra.mxu0 0.0
        %1098 = vmatprep.subr.mxu0 0.0
        %1099 = vmatpush1.msra.mxu0 0.0
        %1100 = vmatprep.subr.mxu0 0.0
        %1101 = vmatpush1.msra.mxu0 0.0
        %1102 = vmatprep.subr.mxu0 0.0
        %1103 = vmatpush1.msra.mxu0 %v1072
        %1104 = vmatprep.subr.mxu0 0.0
        %1105 = vmatpush1.msra.mxu0 %v1071
        %1106 = vmatprep.subr.mxu0 0.0
        %1107 = vmatpush1.msra.mxu0 %v1070
        %1108 = vmatprep.subr.mxu0 0.0
        %1109 = vmatpush1.msra.mxu0 %v1069
        %1110 = vmatprep.subr.mxu0 0.0
        %1111 = vmatpush2.msra.mxu0 0.0
        %1112 = vmatprep.subr.mxu0 0.0
        %1113 = vmatpush2.msra.mxu0 0.0
        %1114 = vmatprep.subr.mxu0 0.0
        %1115 = vmatpush2.msra.mxu0 0.0
        %1116 = vmatprep.subr.mxu0 0.0
        %1117 = vmatpush2.msra.mxu0 0.0
        %1118 = vmatprep.subr.mxu0 0.0
        %1119 = vmatpush2.msra.mxu0 0.0
        %1120 = vmatprep.subr.mxu0 0.0
        %1121 = vmatpush2.msra.mxu0 0.0
        %1122 = vmatprep.subr.mxu0 0.0
        %1123 = vmatpush2.msra.mxu0 0.0
        %1124 = vmatprep.subr.mxu0 0.0
        %1125 = vmatpush2.msra.mxu0 0.0
        %1126 = vmatprep.subr.mxu0 0.0
        %1127 = vmatpush2.msra.mxu0 0.0
        %1128 = vmatprep.subr.mxu0 0.0
        %1129 = vmatpush2.msra.mxu0 0.0
        %1130 = vmatprep.subr.mxu0 0.0
        %1131 = vmatpush2.msra.mxu0 0.0
        %1132 = vmatprep.subr.mxu0 0.0
        %1133 = vmatpush2.msra.mxu0 0.0
        %1134 = vmatprep.subr.mxu0 0.0
        %1135 = vmatpush2.msra.mxu0 0.0
        %1136 = vmatprep.subr.mxu0 0.0
        %1137 = vmatpush2.msra.mxu0 0.0
        %1138 = vmatprep.subr.mxu0 0.0
        %1139 = vmatpush2.msra.mxu0 0.0
        %1140 = vmatprep.subr.mxu0 0.0
        %1141 = vmatpush2.msra.mxu0 0.0
        %1142 = vmatprep.mubr.f32.mxu0 0.0
        %1143 = vmatmul.mubr.f32.gmra.mxu0 %v905
        %v1144 = vpop.f32.mrf.mxu0
        %v1145 = vadd.f32 %v1077, %v1144
        %v1146 = vpop.f32.mrf.mxu0
        %1147 = vmatprep.mubr.f32.mxu0 0.0
        %1148 = vmatmul.mubr.f32.gmra.mxu0 %v908
        %v1149 = vpop.f32.mrf.mxu0
        %v1150 = vadd.f32 %v1077, %v1149
        %v1151 = vpop.f32.mrf.mxu0
        %1152 = vdwg.mxu0
        %vm1153 = vcmask 64512
        %v1155 = vsel %vm1153, %v977, 0
        %v1158 = vsel %vm1153, %v1061, 0
        %1160 = vmatprep.subr.mxu0 0.0
        %1161 = vmatpush1.xpose.msra.mxu0 0.0
        %1162 = vmatprep.subr.mxu0 0.0
        %1163 = vmatpush1.xpose.msra.mxu0 0.0
        %1164 = vmatprep.subr.mxu0 0.0
        %1165 = vmatpush1.xpose.msra.mxu0 0.0
        %1166 = vmatprep.subr.mxu0 0.0
        %1167 = vmatpush1.xpose.msra.mxu0 0.0
        %1168 = vmatprep.subr.mxu0 0.0
        %1169 = vmatpush1.xpose.msra.mxu0 0.0
        %1170 = vmatprep.subr.mxu0 0.0
        %1171 = vmatpush1.xpose.msra.mxu0 0.0
        %1172 = vmatprep.subr.mxu0 0.0
        %1173 = vmatpush1.xpose.msra.mxu0 0.0
        %1174 = vmatprep.subr.mxu0 0.0
        %1175 = vmatpush1.xpose.msra.mxu0 0.0
        %1176 = vmatprep.subr.mxu0 0.0
        %1177 = vmatpush1.xpose.msra.mxu0 0.0
        %1178 = vmatprep.subr.mxu0 0.0
        %1179 = vmatpush1.xpose.msra.mxu0 0.0
        %1180 = vmatprep.subr.mxu0 0.0
        %1181 = vmatpush1.xpose.msra.mxu0 0.0
        %1182 = vmatprep.subr.mxu0 0.0
        %1183 = vmatpush1.xpose.msra.mxu0 0.0
        %1184 = vmatprep.subr.mxu0 0.0
        %1185 = vmatpush1.xpose.msra.mxu0 0.0
        %1186 = vmatprep.subr.mxu0 0.0
        %1187 = vmatpush1.xpose.msra.mxu0 0.0
        %1188 = vmatprep.subr.mxu0 0.0
        %1189 = vmatpush1.xpose.msra.mxu0 0.0
        %1190 = vmatprep.subr.mxu0 0.0
        %1191 = vmatpush1.xpose.msra.mxu0 %v1158
        %1192 = vmatprep.subr.mxu0 0.0
        %1193 = vmatpush2.xpose.msra.mxu0 0.0
        %1194 = vmatprep.subr.mxu0 0.0
        %1195 = vmatpush2.xpose.msra.mxu0 0.0
        %1196 = vmatprep.subr.mxu0 0.0
        %1197 = vmatpush2.xpose.msra.mxu0 0.0
        %1198 = vmatprep.subr.mxu0 0.0
        %1199 = vmatpush2.xpose.msra.mxu0 0.0
        %1200 = vmatprep.subr.mxu0 0.0
        %1201 = vmatpush2.xpose.msra.mxu0 0.0
        %1202 = vmatprep.subr.mxu0 0.0
        %1203 = vmatpush2.xpose.msra.mxu0 0.0
        %1204 = vmatprep.subr.mxu0 0.0
        %1205 = vmatpush2.xpose.msra.mxu0 0.0
        %1206 = vmatprep.subr.mxu0 0.0
        %1207 = vmatpush2.xpose.msra.mxu0 0.0
        %1208 = vmatprep.subr.mxu0 0.0
        %1209 = vmatpush2.xpose.msra.mxu0 0.0
        %1210 = vmatprep.subr.mxu0 0.0
        %1211 = vmatpush2.xpose.msra.mxu0 0.0
        %1212 = vmatprep.subr.mxu0 0.0
        %1213 = vmatpush2.xpose.msra.mxu0 0.0
        %1214 = vmatprep.subr.mxu0 0.0
        %1215 = vmatpush2.xpose.msra.mxu0 0.0
        %1216 = vmatprep.subr.mxu0 0.0
        %1217 = vmatpush2.xpose.msra.mxu0 0.0
        %1218 = vmatprep.subr.mxu0 0.0
        %1219 = vmatpush2.xpose.msra.mxu0 0.0
        %1220 = vmatprep.subr.mxu0 0.0
        %1221 = vmatpush2.xpose.msra.mxu0 0.0
        %1222 = vmatprep.subr.mxu0 0.0
        %1223 = vmatpush2.xpose.msra.mxu0 0.0
        %1224 = vmatprep.mubr.f32.mxu0 0.0
        %1225 = vmatmul.mubr.f32.gmra.mxu0 %v1155
        %v1226 = vpop.f32.mrf.mxu0
        %v1227 = vadd.f32 0.0, %v1226
        %v1228 = vpop.f32.mrf.mxu0
        %1229 = vdwg.mxu0
        %v1231 = vsel %vm1153, %v982, 0
        %v1234 = vsel %vm1153, %v1066, 0
        %1236 = vmatprep.subr.mxu0 0.0
        %1237 = vmatpush1.xpose.msra.mxu0 0.0
        %1238 = vmatprep.subr.mxu0 0.0
        %1239 = vmatpush1.xpose.msra.mxu0 0.0
        %1240 = vmatprep.subr.mxu0 0.0
        %1241 = vmatpush1.xpose.msra.mxu0 0.0
        %1242 = vmatprep.subr.mxu0 0.0
        %1243 = vmatpush1.xpose.msra.mxu0 0.0
        %1244 = vmatprep.subr.mxu0 0.0
        %1245 = vmatpush1.xpose.msra.mxu0 0.0
        %1246 = vmatprep.subr.mxu0 0.0
        %1247 = vmatpush1.xpose.msra.mxu0 0.0
        %1248 = vmatprep.subr.mxu0 0.0
        %1249 = vmatpush1.xpose.msra.mxu0 0.0
        %1250 = vmatprep.subr.mxu0 0.0
        %1251 = vmatpush1.xpose.msra.mxu0 0.0
        %1252 = vmatprep.subr.mxu0 0.0
        %1253 = vmatpush1.xpose.msra.mxu0 0.0
        %1254 = vmatprep.subr.mxu0 0.0
        %1255 = vmatpush1.xpose.msra.mxu0 0.0
        %1256 = vmatprep.subr.mxu0 0.0
        %1257 = vmatpush1.xpose.msra.mxu0 0.0
        %1258 = vmatprep.subr.mxu0 0.0
        %1259 = vmatpush1.xpose.msra.mxu0 0.0
        %1260 = vmatprep.subr.mxu0 0.0
        %1261 = vmatpush1.xpose.msra.mxu0 0.0
        %1262 = vmatprep.subr.mxu0 0.0
        %1263 = vmatpush1.xpose.msra.mxu0 0.0
        %1264 = vmatprep.subr.mxu0 0.0
        %1265 = vmatpush1.xpose.msra.mxu0 0.0
        %1266 = vmatprep.subr.mxu0 0.0
        %1267 = vmatpush1.xpose.msra.mxu0 %v1234
        %1268 = vmatprep.subr.mxu0 0.0
        %1269 = vmatpush2.xpose.msra.mxu0 0.0
        %1270 = vmatprep.subr.mxu0 0.0
        %1271 = vmatpush2.xpose.msra.mxu0 0.0
        %1272 = vmatprep.subr.mxu0 0.0
        %1273 = vmatpush2.xpose.msra.mxu0 0.0
        %1274 = vmatprep.subr.mxu0 0.0
        %1275 = vmatpush2.xpose.msra.mxu0 0.0
        %1276 = vmatprep.subr.mxu0 0.0
        %1277 = vmatpush2.xpose.msra.mxu0 0.0
        %1278 = vmatprep.subr.mxu0 0.0
        %1279 = vmatpush2.xpose.msra.mxu0 0.0
        %1280 = vmatprep.subr.mxu0 0.0
        %1281 = vmatpush2.xpose.msra.mxu0 0.0
        %1282 = vmatprep.subr.mxu0 0.0
        %1283 = vmatpush2.xpose.msra.mxu0 0.0
        %1284 = vmatprep.subr.mxu0 0.0
        %1285 = vmatpush2.xpose.msra.mxu0 0.0
        %1286 = vmatprep.subr.mxu0 0.0
        %1287 = vmatpush2.xpose.msra.mxu0 0.0
        %1288 = vmatprep.subr.mxu0 0.0
        %1289 = vmatpush2.xpose.msra.mxu0 0.0
        %1290 = vmatprep.subr.mxu0 0.0
        %1291 = vmatpush2.xpose.msra.mxu0 0.0
        %1292 = vmatprep.subr.mxu0 0.0
        %1293 = vmatpush2.xpose.msra.mxu0 0.0
        %1294 = vmatprep.subr.mxu0 0.0
        %1295 = vmatpush2.xpose.msra.mxu0 0.0
        %1296 = vmatprep.subr.mxu0 0.0
        %1297 = vmatpush2.xpose.msra.mxu0 0.0
        %1298 = vmatprep.subr.mxu0 0.0
        %1299 = vmatpush2.xpose.msra.mxu0 0.0
        %1300 = vmatprep.mubr.f32.mxu0 0.0
        %1301 = vmatmul.mubr.f32.gmra.mxu0 %v1231
        %v1302 = vpop.f32.mrf.mxu0
        %v1303 = vadd.f32 0.0, %v1302
        %v1304 = vpop.f32.mrf.mxu0
        %1305 = vdwg.mxu0
        %v1306 = vmul.f32 %v1227, 0.35355338
        %v1307 = vmul.f32 %v1303, 0.35355338
        %v1308 = vsel %vm1153, %v1306, -inf
        %1309 = vmax.xlane.f32.xlu0 %v1308
        %v1310 = vpop.xlane.xlu0 %1309
        %v1311 = vsel %vm1153, %v1307, -inf
        %1312 = vmax.xlane.f32.xlu0 %v1311
        %v1313 = vpop.xlane.xlu0 %1312
        %v1314 = vsub.f32 %v1306, %v1310
        %v1315 = vsub.f32 %v1307, %v1313
        %v1316 = vmul.f32 %v1314, 1.442695
        %v1317 = vpow.pop %v1316
        %v1318 = vmul.f32 %v1315, 1.442695
        %v1319 = vpow.pop %v1318
        %v1320 = vsel %vm1153, %v1317, 0.0
        %1321 = vadd.xlane.f32.xlu0 %v1320
        %v1322 = vpop.xlane.xlu0 %1321
        %v1323 = vsel %vm1153, %v1319, 0.0
        %1324 = vadd.xlane.f32.xlu0 %v1323
        %v1325 = vpop.xlane.xlu0 %1324
        %v1326 = vrcp.pop %v1322
        %v1327 = vmul.f32 %v1317, %v1326
        %v1328 = vrcp.pop %v1325
        %v1329 = vmul.f32 %v1319, %v1328
        %v1331 = vsel %vm1153, %v1327, 0
        %1333 = vmatprep.subr.mxu0 0.0
        %1334 = vmatpush1.msra.mxu0 0.0
        %1335 = vmatprep.subr.mxu0 0.0
        %1336 = vmatpush1.msra.mxu0 0.0
        %1337 = vmatprep.subr.mxu0 0.0
        %1338 = vmatpush1.msra.mxu0 0.0
        %1339 = vmatprep.subr.mxu0 0.0
        %1340 = vmatpush1.msra.mxu0 0.0
        %1341 = vmatprep.subr.mxu0 0.0
        %1342 = vmatpush1.msra.mxu0 0.0
        %1343 = vmatprep.subr.mxu0 0.0
        %1344 = vmatpush1.msra.mxu0 0.0
        %1345 = vmatprep.subr.mxu0 0.0
        %1346 = vmatpush1.msra.mxu0 0.0
        %1347 = vmatprep.subr.mxu0 0.0
        %1348 = vmatpush1.msra.mxu0 0.0
        %1349 = vmatprep.subr.mxu0 0.0
        %1350 = vmatpush1.msra.mxu0 0.0
        %1351 = vmatprep.subr.mxu0 0.0
        %1352 = vmatpush1.msra.mxu0 0.0
        %1353 = vmatprep.subr.mxu0 0.0
        %1354 = vmatpush1.msra.mxu0 0.0
        %1355 = vmatprep.subr.mxu0 0.0
        %1356 = vmatpush1.msra.mxu0 0.0
        %1357 = vmatprep.subr.mxu0 0.0
        %1358 = vmatpush1.msra.mxu0 0.0
        %1359 = vmatprep.subr.mxu0 0.0
        %1360 = vmatpush1.msra.mxu0 0.0
        %1361 = vmatprep.subr.mxu0 0.0
        %1362 = vmatpush1.msra.mxu0 0.0
        %1363 = vmatprep.subr.mxu0 0.0
        %1364 = vmatpush1.msra.mxu0 %v1145
        %1365 = vmatprep.subr.mxu0 0.0
        %1366 = vmatpush2.msra.mxu0 0.0
        %1367 = vmatprep.subr.mxu0 0.0
        %1368 = vmatpush2.msra.mxu0 0.0
        %1369 = vmatprep.subr.mxu0 0.0
        %1370 = vmatpush2.msra.mxu0 0.0
        %1371 = vmatprep.subr.mxu0 0.0
        %1372 = vmatpush2.msra.mxu0 0.0
        %1373 = vmatprep.subr.mxu0 0.0
        %1374 = vmatpush2.msra.mxu0 0.0
        %1375 = vmatprep.subr.mxu0 0.0
        %1376 = vmatpush2.msra.mxu0 0.0
        %1377 = vmatprep.subr.mxu0 0.0
        %1378 = vmatpush2.msra.mxu0 0.0
        %1379 = vmatprep.subr.mxu0 0.0
        %1380 = vmatpush2.msra.mxu0 0.0
        %1381 = vmatprep.subr.mxu0 0.0
        %1382 = vmatpush2.msra.mxu0 0.0
        %1383 = vmatprep.subr.mxu0 0.0
        %1384 = vmatpush2.msra.mxu0 0.0
        %1385 = vmatprep.subr.mxu0 0.0
        %1386 = vmatpush2.msra.mxu0 0.0
        %1387 = vmatprep.subr.mxu0 0.0
        %1388 = vmatpush2.msra.mxu0 0.0
        %1389 = vmatprep.subr.mxu0 0.0
        %1390 = vmatpush2.msra.mxu0 0.0
        %1391 = vmatprep.subr.mxu0 0.0
        %1392 = vmatpush2.msra.mxu0 0.0
        %1393 = vmatprep.subr.mxu0 0.0
        %1394 = vmatpush2.msra.mxu0 0.0
        %1395 = vmatprep.subr.mxu0 0.0
        %1396 = vmatpush2.msra.mxu0 0.0
        %1397 = vmatprep.mubr.f32.mxu0 0.0
        %1398 = vmatmul.mubr.f32.gmra.mxu0 %v1331
        %v1399 = vpop.f32.mrf.mxu0
        %v1400 = vadd.f32 0.0, %v1399
        %v1401 = vpop.f32.mrf.mxu0
        %1402 = vdwg.mxu0
        %v1404 = vsel %vm1153, %v1329, 0
        %1406 = vmatprep.subr.mxu0 0.0
        %1407 = vmatpush1.msra.mxu0 0.0
        %1408 = vmatprep.subr.mxu0 0.0
        %1409 = vmatpush1.msra.mxu0 0.0
        %1410 = vmatprep.subr.mxu0 0.0
        %1411 = vmatpush1.msra.mxu0 0.0
        %1412 = vmatprep.subr.mxu0 0.0
        %1413 = vmatpush1.msra.mxu0 0.0
        %1414 = vmatprep.subr.mxu0 0.0
        %1415 = vmatpush1.msra.mxu0 0.0
        %1416 = vmatprep.subr.mxu0 0.0
        %1417 = vmatpush1.msra.mxu0 0.0
        %1418 = vmatprep.subr.mxu0 0.0
        %1419 = vmatpush1.msra.mxu0 0.0
        %1420 = vmatprep.subr.mxu0 0.0
        %1421 = vmatpush1.msra.mxu0 0.0
        %1422 = vmatprep.subr.mxu0 0.0
        %1423 = vmatpush1.msra.mxu0 0.0
        %1424 = vmatprep.subr.mxu0 0.0
        %1425 = vmatpush1.msra.mxu0 0.0
        %1426 = vmatprep.subr.mxu0 0.0
        %1427 = vmatpush1.msra.mxu0 0.0
        %1428 = vmatprep.subr.mxu0 0.0
        %1429 = vmatpush1.msra.mxu0 0.0
        %1430 = vmatprep.subr.mxu0 0.0
        %1431 = vmatpush1.msra.mxu0 0.0
        %1432 = vmatprep.subr.mxu0 0.0
        %1433 = vmatpush1.msra.mxu0 0.0
        %1434 = vmatprep.subr.mxu0 0.0
        %1435 = vmatpush1.msra.mxu0 0.0
        %1436 = vmatprep.subr.mxu0 0.0
        %1437 = vmatpush1.msra.mxu0 %v1150
        %1438 = vmatprep.subr.mxu0 0.0
        %1439 = vmatpush2.msra.mxu0 0.0
        %1440 = vmatprep.subr.mxu0 0.0
        %1441 = vmatpush2.msra.mxu0 0.0
        %1442 = vmatprep.subr.mxu0 0.0
        %1443 = vmatpush2.msra.mxu0 0.0
        %1444 = vmatprep.subr.mxu0 0.0
        %1445 = vmatpush2.msra.mxu0 0.0
        %1446 = vmatprep.subr.mxu0 0.0
        %1447 = vmatpush2.msra.mxu0 0.0
        %1448 = vmatprep.subr.mxu0 0.0
        %1449 = vmatpush2.msra.mxu0 0.0
        %1450 = vmatprep.subr.mxu0 0.0
        %1451 = vmatpush2.msra.mxu0 0.0
        %1452 = vmatprep.subr.mxu0 0.0
        %1453 = vmatpush2.msra.mxu0 0.0
        %1454 = vmatprep.subr.mxu0 0.0
        %1455 = vmatpush2.msra.mxu0 0.0
        %1456 = vmatprep.subr.mxu0 0.0
        %1457 = vmatpush2.msra.mxu0 0.0
        %1458 = vmatprep.subr.mxu0 0.0
        %1459 = vmatpush2.msra.mxu0 0.0
        %1460 = vmatprep.subr.mxu0 0.0
        %1461 = vmatpush2.msra.mxu0 0.0
        %1462 = vmatprep.subr.mxu0 0.0
        %1463 = vmatpush2.msra.mxu0 0.0
        %1464 = vmatprep.subr.mxu0 0.0
        %1465 = vmatpush2.msra.mxu0 0.0
        %1466 = vmatprep.subr.mxu0 0.0
        %1467 = vmatpush2.msra.mxu0 0.0
        %1468 = vmatprep.subr.mxu0 0.0
        %1469 = vmatpush2.msra.mxu0 0.0
        %1470 = vmatprep.mubr.f32.mxu0 0.0
        %1471 = vmatmul.mubr.f32.gmra.mxu0 %v1404
        %v1472 = vpop.f32.mrf.mxu0
        %v1473 = vadd.f32 0.0, %v1472
        %v1474 = vpop.f32.mrf.mxu0
        %1475 = vdwg.mxu0
        %v1476 = vld [vmem:[%s812] sm:$0xff]
        %s1477 = scalar_lea.vmem %s785, 32
        %v1478 = vld [vmem:[%s1477] sm:$0xff]
        %v1479 = vld [vmem:[%s1477 + $0x8] sm:$0xff]
        %v1480 = vld [vmem:[%s1477 + $0x10] sm:$0xff]
        %v1481 = vld [vmem:[%s1477 + $0x18] sm:$0xff]
        %v1482 = vld [vmem:[%s789 + $0x1] sm:$0x1]
        %v1483 = vlaneseq
        %v1484 = vshrl.u32 %v1483, 7
        %v1485 = vsub.s32 0, %v1484
        %v1486 = vrot.slane %v1482, %v1485
        %1487 = vmatprep.subr.mxu0 0.0
        %1488 = vmatpush1.msra.mxu0 0.0
        %1489 = vmatprep.subr.mxu0 0.0
        %1490 = vmatpush1.msra.mxu0 0.0
        %1491 = vmatprep.subr.mxu0 0.0
        %1492 = vmatpush1.msra.mxu0 0.0
        %1493 = vmatprep.subr.mxu0 0.0
        %1494 = vmatpush1.msra.mxu0 0.0
        %1495 = vmatprep.subr.mxu0 0.0
        %1496 = vmatpush1.msra.mxu0 0.0
        %1497 = vmatprep.subr.mxu0 0.0
        %1498 = vmatpush1.msra.mxu0 0.0
        %1499 = vmatprep.subr.mxu0 0.0
        %1500 = vmatpush1.msra.mxu0 0.0
        %1501 = vmatprep.subr.mxu0 0.0
        %1502 = vmatpush1.msra.mxu0 0.0
        %1503 = vmatprep.subr.mxu0 0.0
        %1504 = vmatpush1.msra.mxu0 0.0
        %1505 = vmatprep.subr.mxu0 0.0
        %1506 = vmatpush1.msra.mxu0 0.0
        %1507 = vmatprep.subr.mxu0 0.0
        %1508 = vmatpush1.msra.mxu0 0.0
        %1509 = vmatprep.subr.mxu0 0.0
        %1510 = vmatpush1.msra.mxu0 0.0
        %1511 = vmatprep.subr.mxu0 0.0
        %1512 = vmatpush1.msra.mxu0 %v1481
        %1513 = vmatprep.subr.mxu0 0.0
        %1514 = vmatpush1.msra.mxu0 %v1480
        %1515 = vmatprep.subr.mxu0 0.0
        %1516 = vmatpush1.msra.mxu0 %v1479
        %1517 = vmatprep.subr.mxu0 0.0
        %1518 = vmatpush1.msra.mxu0 %v1478
        %1519 = vmatprep.subr.mxu0 0.0
        %1520 = vmatpush2.msra.mxu0 0.0
        %1521 = vmatprep.subr.mxu0 0.0
        %1522 = vmatpush2.msra.mxu0 0.0
        %1523 = vmatprep.subr.mxu0 0.0
        %1524 = vmatpush2.msra.mxu0 0.0
        %1525 = vmatprep.subr.mxu0 0.0
        %1526 = vmatpush2.msra.mxu0 0.0
        %1527 = vmatprep.subr.mxu0 0.0
        %1528 = vmatpush2.msra.mxu0 0.0
        %1529 = vmatprep.subr.mxu0 0.0
        %1530 = vmatpush2.msra.mxu0 0.0
        %1531 = vmatprep.subr.mxu0 0.0
        %1532 = vmatpush2.msra.mxu0 0.0
        %1533 = vmatprep.subr.mxu0 0.0
        %1534 = vmatpush2.msra.mxu0 0.0
        %1535 = vmatprep.subr.mxu0 0.0
        %1536 = vmatpush2.msra.mxu0 0.0
        %1537 = vmatprep.subr.mxu0 0.0
        %1538 = vmatpush2.msra.mxu0 0.0
        %1539 = vmatprep.subr.mxu0 0.0
        %1540 = vmatpush2.msra.mxu0 0.0
        %1541 = vmatprep.subr.mxu0 0.0
        %1542 = vmatpush2.msra.mxu0 0.0
        %1543 = vmatprep.subr.mxu0 0.0
        %1544 = vmatpush2.msra.mxu0 0.0
        %1545 = vmatprep.subr.mxu0 0.0
        %1546 = vmatpush2.msra.mxu0 0.0
        %1547 = vmatprep.subr.mxu0 0.0
        %1548 = vmatpush2.msra.mxu0 0.0
        %1549 = vmatprep.subr.mxu0 0.0
        %1550 = vmatpush2.msra.mxu0 0.0
        %1551 = vmatprep.mubr.f32.mxu0 0.0
        %1552 = vmatmul.mubr.f32.gmra.mxu0 %v905
        %v1553 = vpop.f32.mrf.mxu0
        %v1554 = vadd.f32 %v1486, %v1553
        %v1555 = vpop.f32.mrf.mxu0
        %1556 = vmatprep.mubr.f32.mxu0 0.0
        %1557 = vmatmul.mubr.f32.gmra.mxu0 %v908
        %v1558 = vpop.f32.mrf.mxu0
        %v1559 = vadd.f32 %v1486, %v1558
        %v1560 = vpop.f32.mrf.mxu0
        %1561 = vdwg.mxu0
        %s1562 = scalar_lea.vmem %s794, 32
        %v1563 = vld [vmem:[%s1562] sm:$0xff]
        %v1564 = vld [vmem:[%s1562 + $0x8] sm:$0xff]
        %v1565 = vld [vmem:[%s1562 + $0x10] sm:$0xff]
        %v1566 = vld [vmem:[%s1562 + $0x18] sm:$0xff]
        %v1567 = vld [vmem:[%s798 + $0x1] sm:$0x1]
        %v1568 = vlaneseq
        %v1569 = vshrl.u32 %v1568, 7
        %v1570 = vsub.s32 0, %v1569
        %v1571 = vrot.slane %v1567, %v1570
        %1572 = vmatprep.subr.mxu0 0.0
        %1573 = vmatpush1.msra.mxu0 0.0
        %1574 = vmatprep.subr.mxu0 0.0
        %1575 = vmatpush1.msra.mxu0 0.0
        %1576 = vmatprep.subr.mxu0 0.0
        %1577 = vmatpush1.msra.mxu0 0.0
        %1578 = vmatprep.subr.mxu0 0.0
        %1579 = vmatpush1.msra.mxu0 0.0
        %1580 = vmatprep.subr.mxu0 0.0
        %1581 = vmatpush1.msra.mxu0 0.0
        %1582 = vmatprep.subr.mxu0 0.0
        %1583 = vmatpush1.msra.mxu0 0.0
        %1584 = vmatprep.subr.mxu0 0.0
        %1585 = vmatpush1.msra.mxu0 0.0
        %1586 = vmatprep.subr.mxu0 0.0
        %1587 = vmatpush1.msra.mxu0 0.0
        %1588 = vmatprep.subr.mxu0 0.0
        %1589 = vmatpush1.msra.mxu0 0.0
        %1590 = vmatprep.subr.mxu0 0.0
        %1591 = vmatpush1.msra.mxu0 0.0
        %1592 = vmatprep.subr.mxu0 0.0
        %1593 = vmatpush1.msra.mxu0 0.0
        %1594 = vmatprep.subr.mxu0 0.0
        %1595 = vmatpush1.msra.mxu0 0.0
        %1596 = vmatprep.subr.mxu0 0.0
        %1597 = vmatpush1.msra.mxu0 %v1566
        %1598 = vmatprep.subr.mxu0 0.0
        %1599 = vmatpush1.msra.mxu0 %v1565
        %1600 = vmatprep.subr.mxu0 0.0
        %1601 = vmatpush1.msra.mxu0 %v1564
        %1602 = vmatprep.subr.mxu0 0.0
        %1603 = vmatpush1.msra.mxu0 %v1563
        %1604 = vmatprep.subr.mxu0 0.0
        %1605 = vmatpush2.msra.mxu0 0.0
        %1606 = vmatprep.subr.mxu0 0.0
        %1607 = vmatpush2.msra.mxu0 0.0
        %1608 = vmatprep.subr.mxu0 0.0
        %1609 = vmatpush2.msra.mxu0 0.0
        %1610 = vmatprep.subr.mxu0 0.0
        %1611 = vmatpush2.msra.mxu0 0.0
        %1612 = vmatprep.subr.mxu0 0.0
        %1613 = vmatpush2.msra.mxu0 0.0
        %1614 = vmatprep.subr.mxu0 0.0
        %1615 = vmatpush2.msra.mxu0 0.0
        %1616 = vmatprep.subr.mxu0 0.0
        %1617 = vmatpush2.msra.mxu0 0.0
        %1618 = vmatprep.subr.mxu0 0.0
        %1619 = vmatpush2.msra.mxu0 0.0
        %1620 = vmatprep.subr.mxu0 0.0
        %1621 = vmatpush2.msra.mxu0 0.0
        %1622 = vmatprep.subr.mxu0 0.0
        %1623 = vmatpush2.msra.mxu0 0.0
        %1624 = vmatprep.subr.mxu0 0.0
        %1625 = vmatpush2.msra.mxu0 0.0
        %1626 = vmatprep.subr.mxu0 0.0
        %1627 = vmatpush2.msra.mxu0 0.0
        %1628 = vmatprep.subr.mxu0 0.0
        %1629 = vmatpush2.msra.mxu0 0.0
        %1630 = vmatprep.subr.mxu0 0.0
        %1631 = vmatpush2.msra.mxu0 0.0
        %1632 = vmatprep.subr.mxu0 0.0
        %1633 = vmatpush2.msra.mxu0 0.0
        %1634 = vmatprep.subr.mxu0 0.0
        %1635 = vmatpush2.msra.mxu0 0.0
        %1636 = vmatprep.mubr.f32.mxu0 0.0
        %1637 = vmatmul.mubr.f32.gmra.mxu0 %v905
        %v1638 = vpop.f32.mrf.mxu0
        %v1639 = vadd.f32 %v1571, %v1638
        %v1640 = vpop.f32.mrf.mxu0
        %1641 = vmatprep.mubr.f32.mxu0 0.0
        %1642 = vmatmul.mubr.f32.gmra.mxu0 %v908
        %v1643 = vpop.f32.mrf.mxu0
        %v1644 = vadd.f32 %v1571, %v1643
        %v1645 = vpop.f32.mrf.mxu0
        %1646 = vdwg.mxu0
        %s1647 = scalar_lea.vmem %s803, 32
        %v1648 = vld [vmem:[%s1647] sm:$0xff]
        %v1649 = vld [vmem:[%s1647 + $0x8] sm:$0xff]
        %v1650 = vld [vmem:[%s1647 + $0x10] sm:$0xff]
        %v1651 = vld [vmem:[%s1647 + $0x18] sm:$0xff]
        %v1652 = vld [vmem:[%s807 + $0x1] sm:$0x1]
        %v1653 = vlaneseq
        %v1654 = vshrl.u32 %v1653, 7
        %v1655 = vsub.s32 0, %v1654
        %v1656 = vrot.slane %v1652, %v1655
        %1657 = vmatprep.subr.mxu0 0.0
        %1658 = vmatpush1.msra.mxu0 0.0
        %1659 = vmatprep.subr.mxu0 0.0
        %1660 = vmatpush1.msra.mxu0 0.0
        %1661 = vmatprep.subr.mxu0 0.0
        %1662 = vmatpush1.msra.mxu0 0.0
        %1663 = vmatprep.subr.mxu0 0.0
        %1664 = vmatpush1.msra.mxu0 0.0
        %1665 = vmatprep.subr.mxu0 0.0
        %1666 = vmatpush1.msra.mxu0 0.0
        %1667 = vmatprep.subr.mxu0 0.0
        %1668 = vmatpush1.msra.mxu0 0.0
        %1669 = vmatprep.subr.mxu0 0.0
        %1670 = vmatpush1.msra.mxu0 0.0
        %1671 = vmatprep.subr.mxu0 0.0
        %1672 = vmatpush1.msra.mxu0 0.0
        %1673 = vmatprep.subr.mxu0 0.0
        %1674 = vmatpush1.msra.mxu0 0.0
        %1675 = vmatprep.subr.mxu0 0.0
        %1676 = vmatpush1.msra.mxu0 0.0
        %1677 = vmatprep.subr.mxu0 0.0
        %1678 = vmatpush1.msra.mxu0 0.0
        %1679 = vmatprep.subr.mxu0 0.0
        %1680 = vmatpush1.msra.mxu0 0.0
        %1681 = vmatprep.subr.mxu0 0.0
        %1682 = vmatpush1.msra.mxu0 %v1651
        %1683 = vmatprep.subr.mxu0 0.0
        %1684 = vmatpush1.msra.mxu0 %v1650
        %1685 = vmatprep.subr.mxu0 0.0
        %1686 = vmatpush1.msra.mxu0 %v1649
        %1687 = vmatprep.subr.mxu0 0.0
        %1688 = vmatpush1.msra.mxu0 %v1648
        %1689 = vmatprep.subr.mxu0 0.0
        %1690 = vmatpush2.msra.mxu0 0.0
        %1691 = vmatprep.subr.mxu0 0.0
        %1692 = vmatpush2.msra.mxu0 0.0
        %1693 = vmatprep.subr.mxu0 0.0
        %1694 = vmatpush2.msra.mxu0 0.0
        %1695 = vmatprep.subr.mxu0 0.0
        %1696 = vmatpush2.msra.mxu0 0.0
        %1697 = vmatprep.subr.mxu0 0.0
        %1698 = vmatpush2.msra.mxu0 0.0
        %1699 = vmatprep.subr.mxu0 0.0
        %1700 = vmatpush2.msra.mxu0 0.0
        %1701 = vmatprep.subr.mxu0 0.0
        %1702 = vmatpush2.msra.mxu0 0.0
        %1703 = vmatprep.subr.mxu0 0.0
        %1704 = vmatpush2.msra.mxu0 0.0
        %1705 = vmatprep.subr.mxu0 0.0
        %1706 = vmatpush2.msra.mxu0 0.0
        %1707 = vmatprep.subr.mxu0 0.0
        %1708 = vmatpush2.msra.mxu0 0.0
        %1709 = vmatprep.subr.mxu0 0.0
        %1710 = vmatpush2.msra.mxu0 0.0
        %1711 = vmatprep.subr.mxu0 0.0
        %1712 = vmatpush2.msra.mxu0 0.0
        %1713 = vmatprep.subr.mxu0 0.0
        %1714 = vmatpush2.msra.mxu0 0.0
        %1715 = vmatprep.subr.mxu0 0.0
        %1716 = vmatpush2.msra.mxu0 0.0
        %1717 = vmatprep.subr.mxu0 0.0
        %1718 = vmatpush2.msra.mxu0 0.0
        %1719 = vmatprep.subr.mxu0 0.0
        %1720 = vmatpush2.msra.mxu0 0.0
        %1721 = vmatprep.mubr.f32.mxu0 0.0
        %1722 = vmatmul.mubr.f32.gmra.mxu0 %v905
        %v1723 = vpop.f32.mrf.mxu0
        %v1724 = vadd.f32 %v1656, %v1723
        %v1725 = vpop.f32.mrf.mxu0
        %1726 = vmatprep.mubr.f32.mxu0 0.0
        %1727 = vmatmul.mubr.f32.gmra.mxu0 %v908
        %v1728 = vpop.f32.mrf.mxu0
        %v1729 = vadd.f32 %v1656, %v1728
        %v1730 = vpop.f32.mrf.mxu0
        %1731 = vdwg.mxu0
        %v1733 = vsel %vm1153, %v1554, 0
        %v1736 = vsel %vm1153, %v1639, 0
        %1738 = vmatprep.subr.mxu0 0.0
        %1739 = vmatpush1.xpose.msra.mxu0 0.0
        %1740 = vmatprep.subr.mxu0 0.0
        %1741 = vmatpush1.xpose.msra.mxu0 0.0
        %1742 = vmatprep.subr.mxu0 0.0
        %1743 = vmatpush1.xpose.msra.mxu0 0.0
        %1744 = vmatprep.subr.mxu0 0.0
        %1745 = vmatpush1.xpose.msra.mxu0 0.0
        %1746 = vmatprep.subr.mxu0 0.0
        %1747 = vmatpush1.xpose.msra.mxu0 0.0
        %1748 = vmatprep.subr.mxu0 0.0
        %1749 = vmatpush1.xpose.msra.mxu0 0.0
        %1750 = vmatprep.subr.mxu0 0.0
        %1751 = vmatpush1.xpose.msra.mxu0 0.0
        %1752 = vmatprep.subr.mxu0 0.0
        %1753 = vmatpush1.xpose.msra.mxu0 0.0
        %1754 = vmatprep.subr.mxu0 0.0
        %1755 = vmatpush1.xpose.msra.mxu0 0.0
        %1756 = vmatprep.subr.mxu0 0.0
        %1757 = vmatpush1.xpose.msra.mxu0 0.0
        %1758 = vmatprep.subr.mxu0 0.0
        %1759 = vmatpush1.xpose.msra.mxu0 0.0
        %1760 = vmatprep.subr.mxu0 0.0
        %1761 = vmatpush1.xpose.msra.mxu0 0.0
        %1762 = vmatprep.subr.mxu0 0.0
        %1763 = vmatpush1.xpose.msra.mxu0 0.0
        %1764 = vmatprep.subr.mxu0 0.0
        %1765 = vmatpush1.xpose.msra.mxu0 0.0
        %1766 = vmatprep.subr.mxu0 0.0
        %1767 = vmatpush1.xpose.msra.mxu0 0.0
        %1768 = vmatprep.subr.mxu0 0.0
        %1769 = vmatpush1.xpose.msra.mxu0 %v1736
        %1770 = vmatprep.subr.mxu0 0.0
        %1771 = vmatpush2.xpose.msra.mxu0 0.0
        %1772 = vmatprep.subr.mxu0 0.0
        %1773 = vmatpush2.xpose.msra.mxu0 0.0
        %1774 = vmatprep.subr.mxu0 0.0
        %1775 = vmatpush2.xpose.msra.mxu0 0.0
        %1776 = vmatprep.subr.mxu0 0.0
        %1777 = vmatpush2.xpose.msra.mxu0 0.0
        %1778 = vmatprep.subr.mxu0 0.0
        %1779 = vmatpush2.xpose.msra.mxu0 0.0
        %1780 = vmatprep.subr.mxu0 0.0
        %1781 = vmatpush2.xpose.msra.mxu0 0.0
        %1782 = vmatprep.subr.mxu0 0.0
        %1783 = vmatpush2.xpose.msra.mxu0 0.0
        %1784 = vmatprep.subr.mxu0 0.0
        %1785 = vmatpush2.xpose.msra.mxu0 0.0
        %1786 = vmatprep.subr.mxu0 0.0
        %1787 = vmatpush2.xpose.msra.mxu0 0.0
        %1788 = vmatprep.subr.mxu0 0.0
        %1789 = vmatpush2.xpose.msra.mxu0 0.0
        %1790 = vmatprep.subr.mxu0 0.0
        %1791 = vmatpush2.xpose.msra.mxu0 0.0
        %1792 = vmatprep.subr.mxu0 0.0
        %1793 = vmatpush2.xpose.msra.mxu0 0.0
        %1794 = vmatprep.subr.mxu0 0.0
        %1795 = vmatpush2.xpose.msra.mxu0 0.0
        %1796 = vmatprep.subr.mxu0 0.0
        %1797 = vmatpush2.xpose.msra.mxu0 0.0
        %1798 = vmatprep.subr.mxu0 0.0
        %1799 = vmatpush2.xpose.msra.mxu0 0.0
        %1800 = vmatprep.subr.mxu0 0.0
        %1801 = vmatpush2.xpose.msra.mxu0 0.0
        %1802 = vmatprep.mubr.f32.mxu0 0.0
        %1803 = vmatmul.mubr.f32.gmra.mxu0 %v1733
        %v1804 = vpop.f32.mrf.mxu0
        %v1805 = vadd.f32 0.0, %v1804
        %v1806 = vpop.f32.mrf.mxu0
        %1807 = vdwg.mxu0
        %v1809 = vsel %vm1153, %v1559, 0
        %v1812 = vsel %vm1153, %v1644, 0
        %1814 = vmatprep.subr.mxu0 0.0
        %1815 = vmatpush1.xpose.msra.mxu0 0.0
        %1816 = vmatprep.subr.mxu0 0.0
        %1817 = vmatpush1.xpose.msra.mxu0 0.0
        %1818 = vmatprep.subr.mxu0 0.0
        %1819 = vmatpush1.xpose.msra.mxu0 0.0
        %1820 = vmatprep.subr.mxu0 0.0
        %1821 = vmatpush1.xpose.msra.mxu0 0.0
        %1822 = vmatprep.subr.mxu0 0.0
        %1823 = vmatpush1.xpose.msra.mxu0 0.0
        %1824 = vmatprep.subr.mxu0 0.0
        %1825 = vmatpush1.xpose.msra.mxu0 0.0
        %1826 = vmatprep.subr.mxu0 0.0
        %1827 = vmatpush1.xpose.msra.mxu0 0.0
        %1828 = vmatprep.subr.mxu0 0.0
        %1829 = vmatpush1.xpose.msra.mxu0 0.0
        %1830 = vmatprep.subr.mxu0 0.0
        %1831 = vmatpush1.xpose.msra.mxu0 0.0
        %1832 = vmatprep.subr.mxu0 0.0
        %1833 = vmatpush1.xpose.msra.mxu0 0.0
        %1834 = vmatprep.subr.mxu0 0.0
        %1835 = vmatpush1.xpose.msra.mxu0 0.0
        %1836 = vmatprep.subr.mxu0 0.0
        %1837 = vmatpush1.xpose.msra.mxu0 0.0
        %1838 = vmatprep.subr.mxu0 0.0
        %1839 = vmatpush1.xpose.msra.mxu0 0.0
        %1840 = vmatprep.subr.mxu0 0.0
        %1841 = vmatpush1.xpose.msra.mxu0 0.0
        %1842 = vmatprep.subr.mxu0 0.0
        %1843 = vmatpush1.xpose.msra.mxu0 0.0
        %1844 = vmatprep.subr.mxu0 0.0
        %1845 = vmatpush1.xpose.msra.mxu0 %v1812
        %1846 = vmatprep.subr.mxu0 0.0
        %1847 = vmatpush2.xpose.msra.mxu0 0.0
        %1848 = vmatprep.subr.mxu0 0.0
        %1849 = vmatpush2.xpose.msra.mxu0 0.0
        %1850 = vmatprep.subr.mxu0 0.0
        %1851 = vmatpush2.xpose.msra.mxu0 0.0
        %1852 = vmatprep.subr.mxu0 0.0
        %1853 = vmatpush2.xpose.msra.mxu0 0.0
        %1854 = vmatprep.subr.mxu0 0.0
        %1855 = vmatpush2.xpose.msra.mxu0 0.0
        %1856 = vmatprep.subr.mxu0 0.0
        %1857 = vmatpush2.xpose.msra.mxu0 0.0
        %1858 = vmatprep.subr.mxu0 0.0
        %1859 = vmatpush2.xpose.msra.mxu0 0.0
        %1860 = vmatprep.subr.mxu0 0.0
        %1861 = vmatpush2.xpose.msra.mxu0 0.0
        %1862 = vmatprep.subr.mxu0 0.0
        %1863 = vmatpush2.xpose.msra.mxu0 0.0
        %1864 = vmatprep.subr.mxu0 0.0
        %1865 = vmatpush2.xpose.msra.mxu0 0.0
        %1866 = vmatprep.subr.mxu0 0.0
        %1867 = vmatpush2.xpose.msra.mxu0 0.0
        %1868 = vmatprep.subr.mxu0 0.0
        %1869 = vmatpush2.xpose.msra.mxu0 0.0
        %1870 = vmatprep.subr.mxu0 0.0
        %1871 = vmatpush2.xpose.msra.mxu0 0.0
        %1872 = vmatprep.subr.mxu0 0.0
        %1873 = vmatpush2.xpose.msra.mxu0 0.0
        %1874 = vmatprep.subr.mxu0 0.0
        %1875 = vmatpush2.xpose.msra.mxu0 0.0
        %1876 = vmatprep.subr.mxu0 0.0
        %1877 = vmatpush2.xpose.msra.mxu0 0.0
        %1878 = vmatprep.mubr.f32.mxu0 0.0
        %1879 = vmatmul.mubr.f32.gmra.mxu0 %v1809
        %v1880 = vpop.f32.mrf.mxu0
        %v1881 = vadd.f32 0.0, %v1880
        %v1882 = vpop.f32.mrf.mxu0
        %1883 = vdwg.mxu0
        %v1884 = vmul.f32 %v1805, 0.35355338
        %v1885 = vmul.f32 %v1881, 0.35355338
        %v1886 = vsel %vm1153, %v1884, -inf
        %1887 = vmax.xlane.f32.xlu0 %v1886
        %v1888 = vpop.xlane.xlu0 %1887
        %v1889 = vsel %vm1153, %v1885, -inf
        %1890 = vmax.xlane.f32.xlu0 %v1889
        %v1891 = vpop.xlane.xlu0 %1890
        %v1892 = vsub.f32 %v1884, %v1888
        %v1893 = vsub.f32 %v1885, %v1891
        %v1894 = vmul.f32 %v1892, 1.442695
        %v1895 = vpow.pop %v1894
        %v1896 = vmul.f32 %v1893, 1.442695
        %v1897 = vpow.pop %v1896
        %v1898 = vsel %vm1153, %v1895, 0.0
        %1899 = vadd.xlane.f32.xlu0 %v1898
        %v1900 = vpop.xlane.xlu0 %1899
        %v1901 = vsel %vm1153, %v1897, 0.0
        %1902 = vadd.xlane.f32.xlu0 %v1901
        %v1903 = vpop.xlane.xlu0 %1902
        %v1904 = vrcp.pop %v1900
        %v1905 = vmul.f32 %v1895, %v1904
        %v1906 = vrcp.pop %v1903
        %v1907 = vmul.f32 %v1897, %v1906
        %v1909 = vsel %vm1153, %v1905, 0
        %1911 = vmatprep.subr.mxu0 0.0
        %1912 = vmatpush1.msra.mxu0 0.0
        %1913 = vmatprep.subr.mxu0 0.0
        %1914 = vmatpush1.msra.mxu0 0.0
        %1915 = vmatprep.subr.mxu0 0.0
        %1916 = vmatpush1.msra.mxu0 0.0
        %1917 = vmatprep.subr.mxu0 0.0
        %1918 = vmatpush1.msra.mxu0 0.0
        %1919 = vmatprep.subr.mxu0 0.0
        %1920 = vmatpush1.msra.mxu0 0.0
        %1921 = vmatprep.subr.mxu0 0.0
        %1922 = vmatpush1.msra.mxu0 0.0
        %1923 = vmatprep.subr.mxu0 0.0
        %1924 = vmatpush1.msra.mxu0 0.0
        %1925 = vmatprep.subr.mxu0 0.0
        %1926 = vmatpush1.msra.mxu0 0.0
        %1927 = vmatprep.subr.mxu0 0.0
        %1928 = vmatpush1.msra.mxu0 0.0
        %1929 = vmatprep.subr.mxu0 0.0
        %1930 = vmatpush1.msra.mxu0 0.0
        %1931 = vmatprep.subr.mxu0 0.0
        %1932 = vmatpush1.msra.mxu0 0.0
        %1933 = vmatprep.subr.mxu0 0.0
        %1934 = vmatpush1.msra.mxu0 0.0
        %1935 = vmatprep.subr.mxu0 0.0
        %1936 = vmatpush1.msra.mxu0 0.0
        %1937 = vmatprep.subr.mxu0 0.0
        %1938 = vmatpush1.msra.mxu0 0.0
        %1939 = vmatprep.subr.mxu0 0.0
        %1940 = vmatpush1.msra.mxu0 0.0
        %1941 = vmatprep.subr.mxu0 0.0
        %1942 = vmatpush1.msra.mxu0 %v1724
        %1943 = vmatprep.subr.mxu0 0.0
        %1944 = vmatpush2.msra.mxu0 0.0
        %1945 = vmatprep.subr.mxu0 0.0
        %1946 = vmatpush2.msra.mxu0 0.0
        %1947 = vmatprep.subr.mxu0 0.0
        %1948 = vmatpush2.msra.mxu0 0.0
        %1949 = vmatprep.subr.mxu0 0.0
        %1950 = vmatpush2.msra.mxu0 0.0
        %1951 = vmatprep.subr.mxu0 0.0
        %1952 = vmatpush2.msra.mxu0 0.0
        %1953 = vmatprep.subr.mxu0 0.0
        %1954 = vmatpush2.msra.mxu0 0.0
        %1955 = vmatprep.subr.mxu0 0.0
        %1956 = vmatpush2.msra.mxu0 0.0
        %1957 = vmatprep.subr.mxu0 0.0
        %1958 = vmatpush2.msra.mxu0 0.0
        %1959 = vmatprep.subr.mxu0 0.0
        %1960 = vmatpush2.msra.mxu0 0.0
        %1961 = vmatprep.subr.mxu0 0.0
        %1962 = vmatpush2.msra.mxu0 0.0
        %1963 = vmatprep.subr.mxu0 0.0
        %1964 = vmatpush2.msra.mxu0 0.0
        %1965 = vmatprep.subr.mxu0 0.0
        %1966 = vmatpush2.msra.mxu0 0.0
        %1967 = vmatprep.subr.mxu0 0.0
        %1968 = vmatpush2.msra.mxu0 0.0
        %1969 = vmatprep.subr.mxu0 0.0
        %1970 = vmatpush2.msra.mxu0 0.0
        %1971 = vmatprep.subr.mxu0 0.0
        %1972 = vmatpush2.msra.mxu0 0.0
        %1973 = vmatprep.subr.mxu0 0.0
        %1974 = vmatpush2.msra.mxu0 0.0
        %1975 = vmatprep.mubr.f32.mxu0 0.0
        %1976 = vmatmul.mubr.f32.gmra.mxu0 %v1909
        %v1977 = vpop.f32.mrf.mxu0
        %v1978 = vadd.f32 0.0, %v1977
        %v1979 = vpop.f32.mrf.mxu0
        %1980 = vdwg.mxu0
        %v1982 = vsel %vm1153, %v1907, 0
        %1984 = vmatprep.subr.mxu0 0.0
        %1985 = vmatpush1.msra.mxu0 0.0
        %1986 = vmatprep.subr.mxu0 0.0
        %1987 = vmatpush1.msra.mxu0 0.0
        %1988 = vmatprep.subr.mxu0 0.0
        %1989 = vmatpush1.msra.mxu0 0.0
        %1990 = vmatprep.subr.mxu0 0.0
        %1991 = vmatpush1.msra.mxu0 0.0
        %1992 = vmatprep.subr.mxu0 0.0
        %1993 = vmatpush1.msra.mxu0 0.0
        %1994 = vmatprep.subr.mxu0 0.0
        %1995 = vmatpush1.msra.mxu0 0.0
        %1996 = vmatprep.subr.mxu0 0.0
        %1997 = vmatpush1.msra.mxu0 0.0
        %1998 = vmatprep.subr.mxu0 0.0
        %1999 = vmatpush1.msra.mxu0 0.0
        %2000 = vmatprep.subr.mxu0 0.0
        %2001 = vmatpush1.msra.mxu0 0.0
        %2002 = vmatprep.subr.mxu0 0.0
        %2003 = vmatpush1.msra.mxu0 0.0
        %2004 = vmatprep.subr.mxu0 0.0
        %2005 = vmatpush1.msra.mxu0 0.0
        %2006 = vmatprep.subr.mxu0 0.0
        %2007 = vmatpush1.msra.mxu0 0.0
        %2008 = vmatprep.subr.mxu0 0.0
        %2009 = vmatpush1.msra.mxu0 0.0
        %2010 = vmatprep.subr.mxu0 0.0
        %2011 = vmatpush1.msra.mxu0 0.0
        %2012 = vmatprep.subr.mxu0 0.0
        %2013 = vmatpush1.msra.mxu0 0.0
        %2014 = vmatprep.subr.mxu0 0.0
        %2015 = vmatpush1.msra.mxu0 %v1729
        %2016 = vmatprep.subr.mxu0 0.0
        %2017 = vmatpush2.msra.mxu0 0.0
        %2018 = vmatprep.subr.mxu0 0.0
        %2019 = vmatpush2.msra.mxu0 0.0
        %2020 = vmatprep.subr.mxu0 0.0
        %2021 = vmatpush2.msra.mxu0 0.0
        %2022 = vmatprep.subr.mxu0 0.0
        %2023 = vmatpush2.msra.mxu0 0.0
        %2024 = vmatprep.subr.mxu0 0.0
        %2025 = vmatpush2.msra.mxu0 0.0
        %2026 = vmatprep.subr.mxu0 0.0
        %2027 = vmatpush2.msra.mxu0 0.0
        %2028 = vmatprep.subr.mxu0 0.0
        %2029 = vmatpush2.msra.mxu0 0.0
        %2030 = vmatprep.subr.mxu0 0.0
        %2031 = vmatpush2.msra.mxu0 0.0
        %2032 = vmatprep.subr.mxu0 0.0
        %2033 = vmatpush2.msra.mxu0 0.0
        %2034 = vmatprep.subr.mxu0 0.0
        %2035 = vmatpush2.msra.mxu0 0.0
        %2036 = vmatprep.subr.mxu0 0.0
        %2037 = vmatpush2.msra.mxu0 0.0
        %2038 = vmatprep.subr.mxu0 0.0
        %2039 = vmatpush2.msra.mxu0 0.0
        %2040 = vmatprep.subr.mxu0 0.0
        %2041 = vmatpush2.msra.mxu0 0.0
        %2042 = vmatprep.subr.mxu0 0.0
        %2043 = vmatpush2.msra.mxu0 0.0
        %2044 = vmatprep.subr.mxu0 0.0
        %2045 = vmatpush2.msra.mxu0 0.0
        %2046 = vmatprep.subr.mxu0 0.0
        %2047 = vmatpush2.msra.mxu0 0.0
        %2048 = vmatprep.mubr.f32.mxu0 0.0
        %2049 = vmatmul.mubr.f32.gmra.mxu0 %v1982
        %v2050 = vpop.f32.mrf.mxu0
        %v2051 = vadd.f32 0.0, %v2050
        %v2052 = vpop.f32.mrf.mxu0
        %2053 = vdwg.mxu0
        %s2054 = scalar_lea.vmem %s812, 8
        %v2055 = vld [vmem:[%s2054] sm:$0xff]
        %v2057 = vsel %vm1153, %v1978, 0
        %v2060 = vsel %vm1153, %v2051, 0
        %2062 = vmatprep.subr.mxu0 0.0
        %2063 = vmatpush1.msra.mxu0 0.0
        %2064 = vmatprep.subr.mxu0 0.0
        %2065 = vmatpush1.msra.mxu0 0.0
        %2066 = vmatprep.subr.mxu0 0.0
        %2067 = vmatpush1.msra.mxu0 0.0
        %2068 = vmatprep.subr.mxu0 0.0
        %2069 = vmatpush1.msra.mxu0 0.0
        %2070 = vmatprep.subr.mxu0 0.0
        %2071 = vmatpush1.msra.mxu0 0.0
        %2072 = vmatprep.subr.mxu0 0.0
        %2073 = vmatpush1.msra.mxu0 0.0
        %2074 = vmatprep.subr.mxu0 0.0
        %2075 = vmatpush1.msra.mxu0 0.0
        %2076 = vmatprep.subr.mxu0 0.0
        %2077 = vmatpush1.msra.mxu0 0.0
        %2078 = vmatprep.subr.mxu0 0.0
        %2079 = vmatpush1.msra.mxu0 0.0
        %2080 = vmatprep.subr.mxu0 0.0
        %2081 = vmatpush1.msra.mxu0 0.0
        %2082 = vmatprep.subr.mxu0 0.0
        %2083 = vmatpush1.msra.mxu0 0.0
        %2084 = vmatprep.subr.mxu0 0.0
        %2085 = vmatpush1.msra.mxu0 0.0
        %2086 = vmatprep.subr.mxu0 0.0
        %2087 = vmatpush1.msra.mxu0 0.0
        %2088 = vmatprep.subr.mxu0 0.0
        %2089 = vmatpush1.msra.mxu0 0.0
        %2090 = vmatprep.subr.mxu0 0.0
        %2091 = vmatpush1.msra.mxu0 0.0
        %2092 = vmatprep.subr.mxu0 0.0
        %2093 = vmatpush1.msra.mxu0 %v2055
        %2094 = vmatprep.subr.mxu0 0.0
        %2095 = vmatpush2.msra.mxu0 0.0
        %2096 = vmatprep.subr.mxu0 0.0
        %2097 = vmatpush2.msra.mxu0 0.0
        %2098 = vmatprep.subr.mxu0 0.0
        %2099 = vmatpush2.msra.mxu0 0.0
        %2100 = vmatprep.subr.mxu0 0.0
        %2101 = vmatpush2.msra.mxu0 0.0
        %2102 = vmatprep.subr.mxu0 0.0
        %2103 = vmatpush2.msra.mxu0 0.0
        %2104 = vmatprep.subr.mxu0 0.0
        %2105 = vmatpush2.msra.mxu0 0.0
        %2106 = vmatprep.subr.mxu0 0.0
        %2107 = vmatpush2.msra.mxu0 0.0
        %2108 = vmatprep.subr.mxu0 0.0
        %2109 = vmatpush2.msra.mxu0 0.0
        %2110 = vmatprep.subr.mxu0 0.0
        %2111 = vmatpush2.msra.mxu0 0.0
        %2112 = vmatprep.subr.mxu0 0.0
        %2113 = vmatpush2.msra.mxu0 0.0
        %2114 = vmatprep.subr.mxu0 0.0
        %2115 = vmatpush2.msra.mxu0 0.0
        %2116 = vmatprep.subr.mxu0 0.0
        %2117 = vmatpush2.msra.mxu0 0.0
        %2118 = vmatprep.subr.mxu0 0.0
        %2119 = vmatpush2.msra.mxu0 0.0
        %2120 = vmatprep.subr.mxu0 0.0
        %2121 = vmatpush2.msra.mxu0 0.0
        %2122 = vmatprep.subr.mxu0 0.0
        %2123 = vmatpush2.msra.mxu0 0.0
        %2124 = vmatprep.subr.mxu0 0.0
        %2125 = vmatpush2.msra.mxu0 0.0
        %2126 = vmatprep.mubr.f32.mxu0 0.0
        %2127 = vmatmul.mubr.f32.gmra.mxu0 %v2057
        %v2128 = vpop.f32.mrf.mxu0
        %v2129 = vadd.f32 0.0, %v2128
        %v2130 = vpop.f32.mrf.mxu0
        %2131 = vmatprep.mubr.f32.mxu0 0.0
        %2132 = vmatmul.mubr.f32.gmra.mxu0 %v2060
        %v2133 = vpop.f32.mrf.mxu0
        %v2134 = vadd.f32 0.0, %v2133
        %v2135 = vpop.f32.mrf.mxu0
        %2136 = vdwg.mxu0
        %v2138 = vsel %vm1153, %v1400, 0
        %v2141 = vsel %vm1153, %v1473, 0
        %2143 = vmatprep.subr.mxu0 0.0
        %2144 = vmatpush1.msra.mxu0 0.0
        %2145 = vmatprep.subr.mxu0 0.0
        %2146 = vmatpush1.msra.mxu0 0.0
        %2147 = vmatprep.subr.mxu0 0.0
        %2148 = vmatpush1.msra.mxu0 0.0
        %2149 = vmatprep.subr.mxu0 0.0
        %2150 = vmatpush1.msra.mxu0 0.0
        %2151 = vmatprep.subr.mxu0 0.0
        %2152 = vmatpush1.msra.mxu0 0.0
        %2153 = vmatprep.subr.mxu0 0.0
        %2154 = vmatpush1.msra.mxu0 0.0
        %2155 = vmatprep.subr.mxu0 0.0
        %2156 = vmatpush1.msra.mxu0 0.0
        %2157 = vmatprep.subr.mxu0 0.0
        %2158 = vmatpush1.msra.mxu0 0.0
        %2159 = vmatprep.subr.mxu0 0.0
        %2160 = vmatpush1.msra.mxu0 0.0
        %2161 = vmatprep.subr.mxu0 0.0
        %2162 = vmatpush1.msra.mxu0 0.0
        %2163 = vmatprep.subr.mxu0 0.0
        %2164 = vmatpush1.msra.mxu0 0.0
        %2165 = vmatprep.subr.mxu0 0.0
        %2166 = vmatpush1.msra.mxu0 0.0
        %2167 = vmatprep.subr.mxu0 0.0
        %2168 = vmatpush1.msra.mxu0 0.0
        %2169 = vmatprep.subr.mxu0 0.0
        %2170 = vmatpush1.msra.mxu0 0.0
        %2171 = vmatprep.subr.mxu0 0.0
        %2172 = vmatpush1.msra.mxu0 0.0
        %2173 = vmatprep.subr.mxu0 0.0
        %2174 = vmatpush1.msra.mxu0 %v1476
        %2175 = vmatprep.subr.mxu0 0.0
        %2176 = vmatpush2.msra.mxu0 0.0
        %2177 = vmatprep.subr.mxu0 0.0
        %2178 = vmatpush2.msra.mxu0 0.0
        %2179 = vmatprep.subr.mxu0 0.0
        %2180 = vmatpush2.msra.mxu0 0.0
        %2181 = vmatprep.subr.mxu0 0.0
        %2182 = vmatpush2.msra.mxu0 0.0
        %2183 = vmatprep.subr.mxu0 0.0
        %2184 = vmatpush2.msra.mxu0 0.0
        %2185 = vmatprep.subr.mxu0 0.0
        %2186 = vmatpush2.msra.mxu0 0.0
        %2187 = vmatprep.subr.mxu0 0.0
        %2188 = vmatpush2.msra.mxu0 0.0
        %2189 = vmatprep.subr.mxu0 0.0
        %2190 = vmatpush2.msra.mxu0 0.0
        %2191 = vmatprep.subr.mxu0 0.0
        %2192 = vmatpush2.msra.mxu0 0.0
        %2193 = vmatprep.subr.mxu0 0.0
        %2194 = vmatpush2.msra.mxu0 0.0
        %2195 = vmatprep.subr.mxu0 0.0
        %2196 = vmatpush2.msra.mxu0 0.0
        %2197 = vmatprep.subr.mxu0 0.0
        %2198 = vmatpush2.msra.mxu0 0.0
        %2199 = vmatprep.subr.mxu0 0.0
        %2200 = vmatpush2.msra.mxu0 0.0
        %2201 = vmatprep.subr.mxu0 0.0
        %2202 = vmatpush2.msra.mxu0 0.0
        %2203 = vmatprep.subr.mxu0 0.0
        %2204 = vmatpush2.msra.mxu0 0.0
        %2205 = vmatprep.subr.mxu0 0.0
        %2206 = vmatpush2.msra.mxu0 0.0
        %2207 = vmatprep.mubr.f32.mxu0 0.0
        %2208 = vmatmul.mubr.f32.gmra.mxu0 %v2138
        %v2209 = vpop.f32.mrf.mxu0
        %v2210 = vadd.f32 %v2129, %v2209
        %v2211 = vpop.f32.mrf.mxu0
        %2212 = vmatprep.mubr.f32.mxu0 0.0
        %2213 = vmatmul.mubr.f32.gmra.mxu0 %v2141
        %v2214 = vpop.f32.mrf.mxu0
        %v2215 = vadd.f32 %v2134, %v2214
        %v2216 = vpop.f32.mrf.mxu0
        %2217 = vdwg.mxu0
        %s2218 = scalar_lea.vmem %s785, 64
        %v2219 = vld [vmem:[%s2218] sm:$0xff]
        %v2220 = vld [vmem:[%s2218 + $0x8] sm:$0xff]
        %v2221 = vld [vmem:[%s2218 + $0x10] sm:$0xff]
        %v2222 = vld [vmem:[%s2218 + $0x18] sm:$0xff]
        %v2223 = vld [vmem:[%s789 + $0x2] sm:$0x1]
        %v2224 = vlaneseq
        %v2225 = vshrl.u32 %v2224, 7
        %v2226 = vsub.s32 0, %v2225
        %v2227 = vrot.slane %v2223, %v2226
        %2228 = vmatprep.subr.mxu0 0.0
        %2229 = vmatpush1.msra.mxu0 0.0
        %2230 = vmatprep.subr.mxu0 0.0
        %2231 = vmatpush1.msra.mxu0 0.0
        %2232 = vmatprep.subr.mxu0 0.0
        %2233 = vmatpush1.msra.mxu0 0.0
        %2234 = vmatprep.subr.mxu0 0.0
        %2235 = vmatpush1.msra.mxu0 0.0
        %2236 = vmatprep.subr.mxu0 0.0
        %2237 = vmatpush1.msra.mxu0 0.0
        %2238 = vmatprep.subr.mxu0 0.0
        %2239 = vmatpush1.msra.mxu0 0.0
        %2240 = vmatprep.subr.mxu0 0.0
        %2241 = vmatpush1.msra.mxu0 0.0
        %2242 = vmatprep.subr.mxu0 0.0
        %2243 = vmatpush1.msra.mxu0 0.0
        %2244 = vmatprep.subr.mxu0 0.0
        %2245 = vmatpush1.msra.mxu0 0.0
        %2246 = vmatprep.subr.mxu0 0.0
        %2247 = vmatpush1.msra.mxu0 0.0
        %2248 = vmatprep.subr.mxu0 0.0
        %2249 = vmatpush1.msra.mxu0 0.0
        %2250 = vmatprep.subr.mxu0 0.0
        %2251 = vmatpush1.msra.mxu0 0.0
        %2252 = vmatprep.subr.mxu0 0.0
        %2253 = vmatpush1.msra.mxu0 %v2222
        %2254 = vmatprep.subr.mxu0 0.0
        %2255 = vmatpush1.msra.mxu0 %v2221
        %2256 = vmatprep.subr.mxu0 0.0
        %2257 = vmatpush1.msra.mxu0 %v2220
        %2258 = vmatprep.subr.mxu0 0.0
        %2259 = vmatpush1.msra.mxu0 %v2219
        %2260 = vmatprep.subr.mxu0 0.0
        %2261 = vmatpush2.msra.mxu0 0.0
        %2262 = vmatprep.subr.mxu0 0.0
        %2263 = vmatpush2.msra.mxu0 0.0
        %2264 = vmatprep.subr.mxu0 0.0
        %2265 = vmatpush2.msra.mxu0 0.0
        %2266 = vmatprep.subr.mxu0 0.0
        %2267 = vmatpush2.msra.mxu0 0.0
        %2268 = vmatprep.subr.mxu0 0.0
        %2269 = vmatpush2.msra.mxu0 0.0
        %2270 = vmatprep.subr.mxu0 0.0
        %2271 = vmatpush2.msra.mxu0 0.0
        %2272 = vmatprep.subr.mxu0 0.0
        %2273 = vmatpush2.msra.mxu0 0.0
        %2274 = vmatprep.subr.mxu0 0.0
        %2275 = vmatpush2.msra.mxu0 0.0
        %2276 = vmatprep.subr.mxu0 0.0
        %2277 = vmatpush2.msra.mxu0 0.0
        %2278 = vmatprep.subr.mxu0 0.0
        %2279 = vmatpush2.msra.mxu0 0.0
        %2280 = vmatprep.subr.mxu0 0.0
        %2281 = vmatpush2.msra.mxu0 0.0
        %2282 = vmatprep.subr.mxu0 0.0
        %2283 = vmatpush2.msra.mxu0 0.0
        %2284 = vmatprep.subr.mxu0 0.0
        %2285 = vmatpush2.msra.mxu0 0.0
        %2286 = vmatprep.subr.mxu0 0.0
        %2287 = vmatpush2.msra.mxu0 0.0
        %2288 = vmatprep.subr.mxu0 0.0
        %2289 = vmatpush2.msra.mxu0 0.0
        %2290 = vmatprep.subr.mxu0 0.0
        %2291 = vmatpush2.msra.mxu0 0.0
        %2292 = vmatprep.mubr.f32.mxu0 0.0
        %2293 = vmatmul.mubr.f32.gmra.mxu0 %v905
        %v2294 = vpop.f32.mrf.mxu0
        %v2295 = vadd.f32 %v2227, %v2294
        %v2296 = vpop.f32.mrf.mxu0
        %2297 = vmatprep.mubr.f32.mxu0 0.0
        %2298 = vmatmul.mubr.f32.gmra.mxu0 %v908
        %v2299 = vpop.f32.mrf.mxu0
        %v2300 = vadd.f32 %v2227, %v2299
        %v2301 = vpop.f32.mrf.mxu0
        %2302 = vdwg.mxu0
        %s2303 = scalar_lea.vmem %s794, 64
        %v2304 = vld [vmem:[%s2303] sm:$0xff]
        %v2305 = vld [vmem:[%s2303 + $0x8] sm:$0xff]
        %v2306 = vld [vmem:[%s2303 + $0x10] sm:$0xff]
        %v2307 = vld [vmem:[%s2303 + $0x18] sm:$0xff]
        %v2308 = vld [vmem:[%s798 + $0x2] sm:$0x1]
        %v2309 = vlaneseq
        %v2310 = vshrl.u32 %v2309, 7
        %v2311 = vsub.s32 0, %v2310
        %v2312 = vrot.slane %v2308, %v2311
        %2313 = vmatprep.subr.mxu0 0.0
        %2314 = vmatpush1.msra.mxu0 0.0
        %2315 = vmatprep.subr.mxu0 0.0
        %2316 = vmatpush1.msra.mxu0 0.0
        %2317 = vmatprep.subr.mxu0 0.0
        %2318 = vmatpush1.msra.mxu0 0.0
        %2319 = vmatprep.subr.mxu0 0.0
        %2320 = vmatpush1.msra.mxu0 0.0
        %2321 = vmatprep.subr.mxu0 0.0
        %2322 = vmatpush1.msra.mxu0 0.0
        %2323 = vmatprep.subr.mxu0 0.0
        %2324 = vmatpush1.msra.mxu0 0.0
        %2325 = vmatprep.subr.mxu0 0.0
        %2326 = vmatpush1.msra.mxu0 0.0
        %2327 = vmatprep.subr.mxu0 0.0
        %2328 = vmatpush1.msra.mxu0 0.0
        %2329 = vmatprep.subr.mxu0 0.0
        %2330 = vmatpush1.msra.mxu0 0.0
        %2331 = vmatprep.subr.mxu0 0.0
        %2332 = vmatpush1.msra.mxu0 0.0
        %2333 = vmatprep.subr.mxu0 0.0
        %2334 = vmatpush1.msra.mxu0 0.0
        %2335 = vmatprep.subr.mxu0 0.0
        %2336 = vmatpush1.msra.mxu0 0.0
        %2337 = vmatprep.subr.mxu0 0.0
        %2338 = vmatpush1.msra.mxu0 %v2307
        %2339 = vmatprep.subr.mxu0 0.0
        %2340 = vmatpush1.msra.mxu0 %v2306
        %2341 = vmatprep.subr.mxu0 0.0
        %2342 = vmatpush1.msra.mxu0 %v2305
        %2343 = vmatprep.subr.mxu0 0.0
        %2344 = vmatpush1.msra.mxu0 %v2304
        %2345 = vmatprep.subr.mxu0 0.0
        %2346 = vmatpush2.msra.mxu0 0.0
        %2347 = vmatprep.subr.mxu0 0.0
        %2348 = vmatpush2.msra.mxu0 0.0
        %2349 = vmatprep.subr.mxu0 0.0
        %2350 = vmatpush2.msra.mxu0 0.0
        %2351 = vmatprep.subr.mxu0 0.0
        %2352 = vmatpush2.msra.mxu0 0.0
        %2353 = vmatprep.subr.mxu0 0.0
        %2354 = vmatpush2.msra.mxu0 0.0
        %2355 = vmatprep.subr.mxu0 0.0
        %2356 = vmatpush2.msra.mxu0 0.0
        %2357 = vmatprep.subr.mxu0 0.0
        %2358 = vmatpush2.msra.mxu0 0.0
        %2359 = vmatprep.subr.mxu0 0.0
        %2360 = vmatpush2.msra.mxu0 0.0
        %2361 = vmatprep.subr.mxu0 0.0
        %2362 = vmatpush2.msra.mxu0 0.0
        %2363 = vmatprep.subr.mxu0 0.0
        %2364 = vmatpush2.msra.mxu0 0.0
        %2365 = vmatprep.subr.mxu0 0.0
        %2366 = vmatpush2.msra.mxu0 0.0
        %2367 = vmatprep.subr.mxu0 0.0
        %2368 = vmatpush2.msra.mxu0 0.0
        %2369 = vmatprep.subr.mxu0 0.0
        %2370 = vmatpush2.msra.mxu0 0.0
        %2371 = vmatprep.subr.mxu0 0.0
        %2372 = vmatpush2.msra.mxu0 0.0
        %2373 = vmatprep.subr.mxu0 0.0
        %2374 = vmatpush2.msra.mxu0 0.0
        %2375 = vmatprep.subr.mxu0 0.0
        %2376 = vmatpush2.msra.mxu0 0.0
        %2377 = vmatprep.mubr.f32.mxu0 0.0
        %2378 = vmatmul.mubr.f32.gmra.mxu0 %v905
        %v2379 = vpop.f32.mrf.mxu0
        %v2380 = vadd.f32 %v2312, %v2379
        %v2381 = vpop.f32.mrf.mxu0
        %2382 = vmatprep.mubr.f32.mxu0 0.0
        %2383 = vmatmul.mubr.f32.gmra.mxu0 %v908
        %v2384 = vpop.f32.mrf.mxu0
        %v2385 = vadd.f32 %v2312, %v2384
        %v2386 = vpop.f32.mrf.mxu0
        %2387 = vdwg.mxu0
        %s2388 = scalar_lea.vmem %s803, 64
        %v2389 = vld [vmem:[%s2388] sm:$0xff]
        %v2390 = vld [vmem:[%s2388 + $0x8] sm:$0xff]
        %v2391 = vld [vmem:[%s2388 + $0x10] sm:$0xff]
        %v2392 = vld [vmem:[%s2388 + $0x18] sm:$0xff]
        %v2393 = vld [vmem:[%s807 + $0x2] sm:$0x1]
        %v2394 = vlaneseq
        %v2395 = vshrl.u32 %v2394, 7
        %v2396 = vsub.s32 0, %v2395
        %v2397 = vrot.slane %v2393, %v2396
        %2398 = vmatprep.subr.mxu0 0.0
        %2399 = vmatpush1.msra.mxu0 0.0
        %2400 = vmatprep.subr.mxu0 0.0
        %2401 = vmatpush1.msra.mxu0 0.0
        %2402 = vmatprep.subr.mxu0 0.0
        %2403 = vmatpush1.msra.mxu0 0.0
        %2404 = vmatprep.subr.mxu0 0.0
        %2405 = vmatpush1.msra.mxu0 0.0
        %2406 = vmatprep.subr.mxu0 0.0
        %2407 = vmatpush1.msra.mxu0 0.0
        %2408 = vmatprep.subr.mxu0 0.0
        %2409 = vmatpush1.msra.mxu0 0.0
        %2410 = vmatprep.subr.mxu0 0.0
        %2411 = vmatpush1.msra.mxu0 0.0
        %2412 = vmatprep.subr.mxu0 0.0
        %2413 = vmatpush1.msra.mxu0 0.0
        %2414 = vmatprep.subr.mxu0 0.0
        %2415 = vmatpush1.msra.mxu0 0.0
        %2416 = vmatprep.subr.mxu0 0.0
        %2417 = vmatpush1.msra.mxu0 0.0
        %2418 = vmatprep.subr.mxu0 0.0
        %2419 = vmatpush1.msra.mxu0 0.0
        %2420 = vmatprep.subr.mxu0 0.0
        %2421 = vmatpush1.msra.mxu0 0.0
        %2422 = vmatprep.subr.mxu0 0.0
        %2423 = vmatpush1.msra.mxu0 %v2392
        %2424 = vmatprep.subr.mxu0 0.0
        %2425 = vmatpush1.msra.mxu0 %v2391
        %2426 = vmatprep.subr.mxu0 0.0
        %2427 = vmatpush1.msra.mxu0 %v2390
        %2428 = vmatprep.subr.mxu0 0.0
        %2429 = vmatpush1.msra.mxu0 %v2389
        %2430 = vmatprep.subr.mxu0 0.0
        %2431 = vmatpush2.msra.mxu0 0.0
        %2432 = vmatprep.subr.mxu0 0.0
        %2433 = vmatpush2.msra.mxu0 0.0
        %2434 = vmatprep.subr.mxu0 0.0
        %2435 = vmatpush2.msra.mxu0 0.0
        %2436 = vmatprep.subr.mxu0 0.0
        %2437 = vmatpush2.msra.mxu0 0.0
        %2438 = vmatprep.subr.mxu0 0.0
        %2439 = vmatpush2.msra.mxu0 0.0
        %2440 = vmatprep.subr.mxu0 0.0
        %2441 = vmatpush2.msra.mxu0 0.0
        %2442 = vmatprep.subr.mxu0 0.0
        %2443 = vmatpush2.msra.mxu0 0.0
        %2444 = vmatprep.subr.mxu0 0.0
        %2445 = vmatpush2.msra.mxu0 0.0
        %2446 = vmatprep.subr.mxu0 0.0
        %2447 = vmatpush2.msra.mxu0 0.0
        %2448 = vmatprep.subr.mxu0 0.0
        %2449 = vmatpush2.msra.mxu0 0.0
        %2450 = vmatprep.subr.mxu0 0.0
        %2451 = vmatpush2.msra.mxu0 0.0
        %2452 = vmatprep.subr.mxu0 0.0
        %2453 = vmatpush2.msra.mxu0 0.0
        %2454 = vmatprep.subr.mxu0 0.0
        %2455 = vmatpush2.msra.mxu0 0.0
        %2456 = vmatprep.subr.mxu0 0.0
        %2457 = vmatpush2.msra.mxu0 0.0
        %2458 = vmatprep.subr.mxu0 0.0
        %2459 = vmatpush2.msra.mxu0 0.0
        %2460 = vmatprep.subr.mxu0 0.0
        %2461 = vmatpush2.msra.mxu0 0.0
        %2462 = vmatprep.mubr.f32.mxu0 0.0
        %2463 = vmatmul.mubr.f32.gmra.mxu0 %v905
        %v2464 = vpop.f32.mrf.mxu0
        %v2465 = vadd.f32 %v2397, %v2464
        %v2466 = vpop.f32.mrf.mxu0
        %2467 = vmatprep.mubr.f32.mxu0 0.0
        %2468 = vmatmul.mubr.f32.gmra.mxu0 %v908
        %v2469 = vpop.f32.mrf.mxu0
        %v2470 = vadd.f32 %v2397, %v2469
        %v2471 = vpop.f32.mrf.mxu0
        %2472 = vdwg.mxu0
        %v2474 = vsel %vm1153, %v2295, 0
        %v2477 = vsel %vm1153, %v2380, 0
        %2479 = vmatprep.subr.mxu0 0.0
        %2480 = vmatpush1.xpose.msra.mxu0 0.0
        %2481 = vmatprep.subr.mxu0 0.0
        %2482 = vmatpush1.xpose.msra.mxu0 0.0
        %2483 = vmatprep.subr.mxu0 0.0
        %2484 = vmatpush1.xpose.msra.mxu0 0.0
        %2485 = vmatprep.subr.mxu0 0.0
        %2486 = vmatpush1.xpose.msra.mxu0 0.0
        %2487 = vmatprep.subr.mxu0 0.0
        %2488 = vmatpush1.xpose.msra.mxu0 0.0
        %2489 = vmatprep.subr.mxu0 0.0
        %2490 = vmatpush1.xpose.msra.mxu0 0.0
        %2491 = vmatprep.subr.mxu0 0.0
        %2492 = vmatpush1.xpose.msra.mxu0 0.0
        %2493 = vmatprep.subr.mxu0 0.0
        %2494 = vmatpush1.xpose.msra.mxu0 0.0
        %2495 = vmatprep.subr.mxu0 0.0
        %2496 = vmatpush1.xpose.msra.mxu0 0.0
        %2497 = vmatprep.subr.mxu0 0.0
        %2498 = vmatpush1.xpose.msra.mxu0 0.0
        %2499 = vmatprep.subr.mxu0 0.0
        %2500 = vmatpush1.xpose.msra.mxu0 0.0
        %2501 = vmatprep.subr.mxu0 0.0
        %2502 = vmatpush1.xpose.msra.mxu0 0.0
        %2503 = vmatprep.subr.mxu0 0.0
        %2504 = vmatpush1.xpose.msra.mxu0 0.0
        %2505 = vmatprep.subr.mxu0 0.0
        %2506 = vmatpush1.xpose.msra.mxu0 0.0
        %2507 = vmatprep.subr.mxu0 0.0
        %2508 = vmatpush1.xpose.msra.mxu0 0.0
        %2509 = vmatprep.subr.mxu0 0.0
        %2510 = vmatpush1.xpose.msra.mxu0 %v2477
        %2511 = vmatprep.subr.mxu0 0.0
        %2512 = vmatpush2.xpose.msra.mxu0 0.0
        %2513 = vmatprep.subr.mxu0 0.0
        %2514 = vmatpush2.xpose.msra.mxu0 0.0
        %2515 = vmatprep.subr.mxu0 0.0
        %2516 = vmatpush2.xpose.msra.mxu0 0.0
        %2517 = vmatprep.subr.mxu0 0.0
        %2518 = vmatpush2.xpose.msra.mxu0 0.0
        %2519 = vmatprep.subr.mxu0 0.0
        %2520 = vmatpush2.xpose.msra.mxu0 0.0
        %2521 = vmatprep.subr.mxu0 0.0
        %2522 = vmatpush2.xpose.msra.mxu0 0.0
        %2523 = vmatprep.subr.mxu0 0.0
        %2524 = vmatpush2.xpose.msra.mxu0 0.0
        %2525 = vmatprep.subr.mxu0 0.0
        %2526 = vmatpush2.xpose.msra.mxu0 0.0
        %2527 = vmatprep.subr.mxu0 0.0
        %2528 = vmatpush2.xpose.msra.mxu0 0.0
        %2529 = vmatprep.subr.mxu0 0.0
        %2530 = vmatpush2.xpose.msra.mxu0 0.0
        %2531 = vmatprep.subr.mxu0 0.0
        %2532 = vmatpush2.xpose.msra.mxu0 0.0
        %2533 = vmatprep.subr.mxu0 0.0
        %2534 = vmatpush2.xpose.msra.mxu0 0.0
        %2535 = vmatprep.subr.mxu0 0.0
        %2536 = vmatpush2.xpose.msra.mxu0 0.0
        %2537 = vmatprep.subr.mxu0 0.0
        %2538 = vmatpush2.xpose.msra.mxu0 0.0
        %2539 = vmatprep.subr.mxu0 0.0
        %2540 = vmatpush2.xpose.msra.mxu0 0.0
        %2541 = vmatprep.subr.mxu0 0.0
        %2542 = vmatpush2.xpose.msra.mxu0 0.0
        %2543 = vmatprep.mubr.f32.mxu0 0.0
        %2544 = vmatmul.mubr.f32.gmra.mxu0 %v2474
        %v2545 = vpop.f32.mrf.mxu0
        %v2546 = vadd.f32 0.0, %v2545
        %v2547 = vpop.f32.mrf.mxu0
        %2548 = vdwg.mxu0
        %v2550 = vsel %vm1153, %v2300, 0
        %v2553 = vsel %vm1153, %v2385, 0
        %2555 = vmatprep.subr.mxu0 0.0
        %2556 = vmatpush1.xpose.msra.mxu0 0.0
        %2557 = vmatprep.subr.mxu0 0.0
        %2558 = vmatpush1.xpose.msra.mxu0 0.0
        %2559 = vmatprep.subr.mxu0 0.0
        %2560 = vmatpush1.xpose.msra.mxu0 0.0
        %2561 = vmatprep.subr.mxu0 0.0
        %2562 = vmatpush1.xpose.msra.mxu0 0.0
        %2563 = vmatprep.subr.mxu0 0.0
        %2564 = vmatpush1.xpose.msra.mxu0 0.0
        %2565 = vmatprep.subr.mxu0 0.0
        %2566 = vmatpush1.xpose.msra.mxu0 0.0
        %2567 = vmatprep.subr.mxu0 0.0
        %2568 = vmatpush1.xpose.msra.mxu0 0.0
        %2569 = vmatprep.subr.mxu0 0.0
        %2570 = vmatpush1.xpose.msra.mxu0 0.0
        %2571 = vmatprep.subr.mxu0 0.0
        %2572 = vmatpush1.xpose.msra.mxu0 0.0
        %2573 = vmatprep.subr.mxu0 0.0
        %2574 = vmatpush1.xpose.msra.mxu0 0.0
        %2575 = vmatprep.subr.mxu0 0.0
        %2576 = vmatpush1.xpose.msra.mxu0 0.0
        %2577 = vmatprep.subr.mxu0 0.0
        %2578 = vmatpush1.xpose.msra.mxu0 0.0
        %2579 = vmatprep.subr.mxu0 0.0
        %2580 = vmatpush1.xpose.msra.mxu0 0.0
        %2581 = vmatprep.subr.mxu0 0.0
        %2582 = vmatpush1.xpose.msra.mxu0 0.0
        %2583 = vmatprep.subr.mxu0 0.0
        %2584 = vmatpush1.xpose.msra.mxu0 0.0
        %2585 = vmatprep.subr.mxu0 0.0
        %2586 = vmatpush1.xpose.msra.mxu0 %v2553
        %2587 = vmatprep.subr.mxu0 0.0
        %2588 = vmatpush2.xpose.msra.mxu0 0.0
        %2589 = vmatprep.subr.mxu0 0.0
        %2590 = vmatpush2.xpose.msra.mxu0 0.0
        %2591 = vmatprep.subr.mxu0 0.0
        %2592 = vmatpush2.xpose.msra.mxu0 0.0
        %2593 = vmatprep.subr.mxu0 0.0
        %2594 = vmatpush2.xpose.msra.mxu0 0.0
        %2595 = vmatprep.subr.mxu0 0.0
        %2596 = vmatpush2.xpose.msra.mxu0 0.0
        %2597 = vmatprep.subr.mxu0 0.0
        %2598 = vmatpush2.xpose.msra.mxu0 0.0
        %2599 = vmatprep.subr.mxu0 0.0
        %2600 = vmatpush2.xpose.msra.mxu0 0.0
        %2601 = vmatprep.subr.mxu0 0.0
        %2602 = vmatpush2.xpose.msra.mxu0 0.0
        %2603 = vmatprep.subr.mxu0 0.0
        %2604 = vmatpush2.xpose.msra.mxu0 0.0
        %2605 = vmatprep.subr.mxu0 0.0
        %2606 = vmatpush2.xpose.msra.mxu0 0.0
        %2607 = vmatprep.subr.mxu0 0.0
        %2608 = vmatpush2.xpose.msra.mxu0 0.0
        %2609 = vmatprep.subr.mxu0 0.0
        %2610 = vmatpush2.xpose.msra.mxu0 0.0
        %2611 = vmatprep.subr.mxu0 0.0
        %2612 = vmatpush2.xpose.msra.mxu0 0.0
        %2613 = vmatprep.subr.mxu0 0.0
        %2614 = vmatpush2.xpose.msra.mxu0 0.0
        %2615 = vmatprep.subr.mxu0 0.0
        %2616 = vmatpush2.xpose.msra.mxu0 0.0
        %2617 = vmatprep.subr.mxu0 0.0
        %2618 = vmatpush2.xpose.msra.mxu0 0.0
        %2619 = vmatprep.mubr.f32.mxu0 0.0
        %2620 = vmatmul.mubr.f32.gmra.mxu0 %v2550
        %v2621 = vpop.f32.mrf.mxu0
        %v2622 = vadd.f32 0.0, %v2621
        %v2623 = vpop.f32.mrf.mxu0
        %2624 = vdwg.mxu0
        %v2625 = vmul.f32 %v2546, 0.35355338
        %v2626 = vmul.f32 %v2622, 0.35355338
        %v2627 = vsel %vm1153, %v2625, -inf
        %2628 = vmax.xlane.f32.xlu0 %v2627
        %v2629 = vpop.xlane.xlu0 %2628
        %v2630 = vsel %vm1153, %v2626, -inf
        %2631 = vmax.xlane.f32.xlu0 %v2630
        %v2632 = vpop.xlane.xlu0 %2631
        %v2633 = vsub.f32 %v2625, %v2629
        %v2634 = vsub.f32 %v2626, %v2632
        %v2635 = vmul.f32 %v2633, 1.442695
        %v2636 = vpow.pop %v2635
        %v2637 = vmul.f32 %v2634, 1.442695
        %v2638 = vpow.pop %v2637
        %v2639 = vsel %vm1153, %v2636, 0.0
        %2640 = vadd.xlane.f32.xlu0 %v2639
        %v2641 = vpop.xlane.xlu0 %2640
        %v2642 = vsel %vm1153, %v2638, 0.0
        %2643 = vadd.xlane.f32.xlu0 %v2642
        %v2644 = vpop.xlane.xlu0 %2643
        %v2645 = vrcp.pop %v2641
        %v2646 = vmul.f32 %v2636, %v2645
        %v2647 = vrcp.pop %v2644
        %v2648 = vmul.f32 %v2638, %v2647
        %v2650 = vsel %vm1153, %v2646, 0
        %2652 = vmatprep.subr.mxu0 0.0
        %2653 = vmatpush1.msra.mxu0 0.0
        %2654 = vmatprep.subr.mxu0 0.0
        %2655 = vmatpush1.msra.mxu0 0.0
        %2656 = vmatprep.subr.mxu0 0.0
        %2657 = vmatpush1.msra.mxu0 0.0
        %2658 = vmatprep.subr.mxu0 0.0
        %2659 = vmatpush1.msra.mxu0 0.0
        %2660 = vmatprep.subr.mxu0 0.0
        %2661 = vmatpush1.msra.mxu0 0.0
        %2662 = vmatprep.subr.mxu0 0.0
        %2663 = vmatpush1.msra.mxu0 0.0
        %2664 = vmatprep.subr.mxu0 0.0
        %2665 = vmatpush1.msra.mxu0 0.0
        %2666 = vmatprep.subr.mxu0 0.0
        %2667 = vmatpush1.msra.mxu0 0.0
        %2668 = vmatprep.subr.mxu0 0.0
        %2669 = vmatpush1.msra.mxu0 0.0
        %2670 = vmatprep.subr.mxu0 0.0
        %2671 = vmatpush1.msra.mxu0 0.0
        %2672 = vmatprep.subr.mxu0 0.0
        %2673 = vmatpush1.msra.mxu0 0.0
        %2674 = vmatprep.subr.mxu0 0.0
        %2675 = vmatpush1.msra.mxu0 0.0
        %2676 = vmatprep.subr.mxu0 0.0
        %2677 = vmatpush1.msra.mxu0 0.0
        %2678 = vmatprep.subr.mxu0 0.0
        %2679 = vmatpush1.msra.mxu0 0.0
        %2680 = vmatprep.subr.mxu0 0.0
        %2681 = vmatpush1.msra.mxu0 0.0
        %2682 = vmatprep.subr.mxu0 0.0
        %2683 = vmatpush1.msra.mxu0 %v2465
        %2684 = vmatprep.subr.mxu0 0.0
        %2685 = vmatpush2.msra.mxu0 0.0
        %2686 = vmatprep.subr.mxu0 0.0
        %2687 = vmatpush2.msra.mxu0 0.0
        %2688 = vmatprep.subr.mxu0 0.0
        %2689 = vmatpush2.msra.mxu0 0.0
        %2690 = vmatprep.subr.mxu0 0.0
        %2691 = vmatpush2.msra.mxu0 0.0
        %2692 = vmatprep.subr.mxu0 0.0
        %2693 = vmatpush2.msra.mxu0 0.0
        %2694 = vmatprep.subr.mxu0 0.0
        %2695 = vmatpush2.msra.mxu0 0.0
        %2696 = vmatprep.subr.mxu0 0.0
        %2697 = vmatpush2.msra.mxu0 0.0
        %2698 = vmatprep.subr.mxu0 0.0
        %2699 = vmatpush2.msra.mxu0 0.0
        %2700 = vmatprep.subr.mxu0 0.0
        %2701 = vmatpush2.msra.mxu0 0.0
        %2702 = vmatprep.subr.mxu0 0.0
        %2703 = vmatpush2.msra.mxu0 0.0
        %2704 = vmatprep.subr.mxu0 0.0
        %2705 = vmatpush2.msra.mxu0 0.0
        %2706 = vmatprep.subr.mxu0 0.0
        %2707 = vmatpush2.msra.mxu0 0.0
        %2708 = vmatprep.subr.mxu0 0.0
        %2709 = vmatpush2.msra.mxu0 0.0
        %2710 = vmatprep.subr.mxu0 0.0
        %2711 = vmatpush2.msra.mxu0 0.0
        %2712 = vmatprep.subr.mxu0 0.0
        %2713 = vmatpush2.msra.mxu0 0.0
        %2714 = vmatprep.subr.mxu0 0.0
        %2715 = vmatpush2.msra.mxu0 0.0
        %2716 = vmatprep.mubr.f32.mxu0 0.0
        %2717 = vmatmul.mubr.f32.gmra.mxu0 %v2650
        %v2718 = vpop.f32.mrf.mxu0
        %v2719 = vadd.f32 0.0, %v2718
        %v2720 = vpop.f32.mrf.mxu0
        %2721 = vdwg.mxu0
        %v2723 = vsel %vm1153, %v2648, 0
        %2725 = vmatprep.subr.mxu0 0.0
        %2726 = vmatpush1.msra.mxu0 0.0
        %2727 = vmatprep.subr.mxu0 0.0
        %2728 = vmatpush1.msra.mxu0 0.0
        %2729 = vmatprep.subr.mxu0 0.0
        %2730 = vmatpush1.msra.mxu0 0.0
        %2731 = vmatprep.subr.mxu0 0.0
        %2732 = vmatpush1.msra.mxu0 0.0
        %2733 = vmatprep.subr.mxu0 0.0
        %2734 = vmatpush1.msra.mxu0 0.0
        %2735 = vmatprep.subr.mxu0 0.0
        %2736 = vmatpush1.msra.mxu0 0.0
        %2737 = vmatprep.subr.mxu0 0.0
        %2738 = vmatpush1.msra.mxu0 0.0
        %2739 = vmatprep.subr.mxu0 0.0
        %2740 = vmatpush1.msra.mxu0 0.0
        %2741 = vmatprep.subr.mxu0 0.0
        %2742 = vmatpush1.msra.mxu0 0.0
        %2743 = vmatprep.subr.mxu0 0.0
        %2744 = vmatpush1.msra.mxu0 0.0
        %2745 = vmatprep.subr.mxu0 0.0
        %2746 = vmatpush1.msra.mxu0 0.0
        %2747 = vmatprep.subr.mxu0 0.0
        %2748 = vmatpush1.msra.mxu0 0.0
        %2749 = vmatprep.subr.mxu0 0.0
        %2750 = vmatpush1.msra.mxu0 0.0
        %2751 = vmatprep.subr.mxu0 0.0
        %2752 = vmatpush1.msra.mxu0 0.0
        %2753 = vmatprep.subr.mxu0 0.0
        %2754 = vmatpush1.msra.mxu0 0.0
        %2755 = vmatprep.subr.mxu0 0.0
        %2756 = vmatpush1.msra.mxu0 %v2470
        %2757 = vmatprep.subr.mxu0 0.0
        %2758 = vmatpush2.msra.mxu0 0.0
        %2759 = vmatprep.subr.mxu0 0.0
        %2760 = vmatpush2.msra.mxu0 0.0
        %2761 = vmatprep.subr.mxu0 0.0
        %2762 = vmatpush2.msra.mxu0 0.0
        %2763 = vmatprep.subr.mxu0 0.0
        %2764 = vmatpush2.msra.mxu0 0.0
        %2765 = vmatprep.subr.mxu0 0.0
        %2766 = vmatpush2.msra.mxu0 0.0
        %2767 = vmatprep.subr.mxu0 0.0
        %2768 = vmatpush2.msra.mxu0 0.0
        %2769 = vmatprep.subr.mxu0 0.0
        %2770 = vmatpush2.msra.mxu0 0.0
        %2771 = vmatprep.subr.mxu0 0.0
        %2772 = vmatpush2.msra.mxu0 0.0
        %2773 = vmatprep.subr.mxu0 0.0
        %2774 = vmatpush2.msra.mxu0 0.0
        %2775 = vmatprep.subr.mxu0 0.0
        %2776 = vmatpush2.msra.mxu0 0.0
        %2777 = vmatprep.subr.mxu0 0.0
        %2778 = vmatpush2.msra.mxu0 0.0
        %2779 = vmatprep.subr.mxu0 0.0
        %2780 = vmatpush2.msra.mxu0 0.0
        %2781 = vmatprep.subr.mxu0 0.0
        %2782 = vmatpush2.msra.mxu0 0.0
        %2783 = vmatprep.subr.mxu0 0.0
        %2784 = vmatpush2.msra.mxu0 0.0
        %2785 = vmatprep.subr.mxu0 0.0
        %2786 = vmatpush2.msra.mxu0 0.0
        %2787 = vmatprep.subr.mxu0 0.0
        %2788 = vmatpush2.msra.mxu0 0.0
        %2789 = vmatprep.mubr.f32.mxu0 0.0
        %2790 = vmatmul.mubr.f32.gmra.mxu0 %v2723
        %v2791 = vpop.f32.mrf.mxu0
        %v2792 = vadd.f32 0.0, %v2791
        %v2793 = vpop.f32.mrf.mxu0
        %2794 = vdwg.mxu0
        %s2795 = scalar_lea.vmem %s812, 16
        %v2796 = vld [vmem:[%s2795] sm:$0xff]
        %v2798 = vsel %vm1153, %v2719, 0
        %v2801 = vsel %vm1153, %v2792, 0
        %2803 = vmatprep.subr.mxu0 0.0
        %2804 = vmatpush1.msra.mxu0 0.0
        %2805 = vmatprep.subr.mxu0 0.0
        %2806 = vmatpush1.msra.mxu0 0.0
        %2807 = vmatprep.subr.mxu0 0.0
        %2808 = vmatpush1.msra.mxu0 0.0
        %2809 = vmatprep.subr.mxu0 0.0
        %2810 = vmatpush1.msra.mxu0 0.0
        %2811 = vmatprep.subr.mxu0 0.0
        %2812 = vmatpush1.msra.mxu0 0.0
        %2813 = vmatprep.subr.mxu0 0.0
        %2814 = vmatpush1.msra.mxu0 0.0
        %2815 = vmatprep.subr.mxu0 0.0
        %2816 = vmatpush1.msra.mxu0 0.0
        %2817 = vmatprep.subr.mxu0 0.0
        %2818 = vmatpush1.msra.mxu0 0.0
        %2819 = vmatprep.subr.mxu0 0.0
        %2820 = vmatpush1.msra.mxu0 0.0
        %2821 = vmatprep.subr.mxu0 0.0
        %2822 = vmatpush1.msra.mxu0 0.0
        %2823 = vmatprep.subr.mxu0 0.0
        %2824 = vmatpush1.msra.mxu0 0.0
        %2825 = vmatprep.subr.mxu0 0.0
        %2826 = vmatpush1.msra.mxu0 0.0
        %2827 = vmatprep.subr.mxu0 0.0
        %2828 = vmatpush1.msra.mxu0 0.0
        %2829 = vmatprep.subr.mxu0 0.0
        %2830 = vmatpush1.msra.mxu0 0.0
        %2831 = vmatprep.subr.mxu0 0.0
        %2832 = vmatpush1.msra.mxu0 0.0
        %2833 = vmatprep.subr.mxu0 0.0
        %2834 = vmatpush1.msra.mxu0 %v2796
        %2835 = vmatprep.subr.mxu0 0.0
        %2836 = vmatpush2.msra.mxu0 0.0
        %2837 = vmatprep.subr.mxu0 0.0
        %2838 = vmatpush2.msra.mxu0 0.0
        %2839 = vmatprep.subr.mxu0 0.0
        %2840 = vmatpush2.msra.mxu0 0.0
        %2841 = vmatprep.subr.mxu0 0.0
        %2842 = vmatpush2.msra.mxu0 0.0
        %2843 = vmatprep.subr.mxu0 0.0
        %2844 = vmatpush2.msra.mxu0 0.0
        %2845 = vmatprep.subr.mxu0 0.0
        %2846 = vmatpush2.msra.mxu0 0.0
        %2847 = vmatprep.subr.mxu0 0.0
        %2848 = vmatpush2.msra.mxu0 0.0
        %2849 = vmatprep.subr.mxu0 0.0
        %2850 = vmatpush2.msra.mxu0 0.0
        %2851 = vmatprep.subr.mxu0 0.0
        %2852 = vmatpush2.msra.mxu0 0.0
        %2853 = vmatprep.subr.mxu0 0.0
        %2854 = vmatpush2.msra.mxu0 0.0
        %2855 = vmatprep.subr.mxu0 0.0
        %2856 = vmatpush2.msra.mxu0 0.0
        %2857 = vmatprep.subr.mxu0 0.0
        %2858 = vmatpush2.msra.mxu0 0.0
        %2859 = vmatprep.subr.mxu0 0.0
        %2860 = vmatpush2.msra.mxu0 0.0
        %2861 = vmatprep.subr.mxu0 0.0
        %2862 = vmatpush2.msra.mxu0 0.0
        %2863 = vmatprep.subr.mxu0 0.0
        %2864 = vmatpush2.msra.mxu0 0.0
        %2865 = vmatprep.subr.mxu0 0.0
        %2866 = vmatpush2.msra.mxu0 0.0
        %2867 = vmatprep.mubr.f32.mxu0 0.0
        %2868 = vmatmul.mubr.f32.gmra.mxu0 %v2798
        %v2869 = vpop.f32.mrf.mxu0
        %v2870 = vadd.f32 0.0, %v2869
        %v2871 = vpop.f32.mrf.mxu0
        %2872 = vmatprep.mubr.f32.mxu0 0.0
        %2873 = vmatmul.mubr.f32.gmra.mxu0 %v2801
        %v2874 = vpop.f32.mrf.mxu0
        %v2875 = vadd.f32 0.0, %v2874
        %v2876 = vpop.f32.mrf.mxu0
        %2877 = vdwg.mxu0
        %v2878 = vadd.f32 %v2210, %v2870
        %v2879 = vadd.f32 %v2215, %v2875
        %s2880 = scalar_lea.vmem %s785, 96
        %v2881 = vld [vmem:[%s2880] sm:$0xff]
        %v2882 = vld [vmem:[%s2880 + $0x8] sm:$0xff]
        %v2883 = vld [vmem:[%s2880 + $0x10] sm:$0xff]
        %v2884 = vld [vmem:[%s2880 + $0x18] sm:$0xff]
        %v2885 = vld [vmem:[%s789 + $0x3] sm:$0x1]
        %v2886 = vlaneseq
        %v2887 = vshrl.u32 %v2886, 7
        %v2888 = vsub.s32 0, %v2887
        %v2889 = vrot.slane %v2885, %v2888
        %2890 = vmatprep.subr.mxu0 0.0
        %2891 = vmatpush1.msra.mxu0 0.0
        %2892 = vmatprep.subr.mxu0 0.0
        %2893 = vmatpush1.msra.mxu0 0.0
        %2894 = vmatprep.subr.mxu0 0.0
        %2895 = vmatpush1.msra.mxu0 0.0
        %2896 = vmatprep.subr.mxu0 0.0
        %2897 = vmatpush1.msra.mxu0 0.0
        %2898 = vmatprep.subr.mxu0 0.0
        %2899 = vmatpush1.msra.mxu0 0.0
        %2900 = vmatprep.subr.mxu0 0.0
        %2901 = vmatpush1.msra.mxu0 0.0
        %2902 = vmatprep.subr.mxu0 0.0
        %2903 = vmatpush1.msra.mxu0 0.0
        %2904 = vmatprep.subr.mxu0 0.0
        %2905 = vmatpush1.msra.mxu0 0.0
        %2906 = vmatprep.subr.mxu0 0.0
        %2907 = vmatpush1.msra.mxu0 0.0
        %2908 = vmatprep.subr.mxu0 0.0
        %2909 = vmatpush1.msra.mxu0 0.0
        %2910 = vmatprep.subr.mxu0 0.0
        %2911 = vmatpush1.msra.mxu0 0.0
        %2912 = vmatprep.subr.mxu0 0.0
        %2913 = vmatpush1.msra.mxu0 0.0
        %2914 = vmatprep.subr.mxu0 0.0
        %2915 = vmatpush1.msra.mxu0 %v2884
        %2916 = vmatprep.subr.mxu0 0.0
        %2917 = vmatpush1.msra.mxu0 %v2883
        %2918 = vmatprep.subr.mxu0 0.0
        %2919 = vmatpush1.msra.mxu0 %v2882
        %2920 = vmatprep.subr.mxu0 0.0
        %2921 = vmatpush1.msra.mxu0 %v2881
        %2922 = vmatprep.subr.mxu0 0.0
        %2923 = vmatpush2.msra.mxu0 0.0
        %2924 = vmatprep.subr.mxu0 0.0
        %2925 = vmatpush2.msra.mxu0 0.0
        %2926 = vmatprep.subr.mxu0 0.0
        %2927 = vmatpush2.msra.mxu0 0.0
        %2928 = vmatprep.subr.mxu0 0.0
        %2929 = vmatpush2.msra.mxu0 0.0
        %2930 = vmatprep.subr.mxu0 0.0
        %2931 = vmatpush2.msra.mxu0 0.0
        %2932 = vmatprep.subr.mxu0 0.0
        %2933 = vmatpush2.msra.mxu0 0.0
        %2934 = vmatprep.subr.mxu0 0.0
        %2935 = vmatpush2.msra.mxu0 0.0
        %2936 = vmatprep.subr.mxu0 0.0
        %2937 = vmatpush2.msra.mxu0 0.0
        %2938 = vmatprep.subr.mxu0 0.0
        %2939 = vmatpush2.msra.mxu0 0.0
        %2940 = vmatprep.subr.mxu0 0.0
        %2941 = vmatpush2.msra.mxu0 0.0
        %2942 = vmatprep.subr.mxu0 0.0
        %2943 = vmatpush2.msra.mxu0 0.0
        %2944 = vmatprep.subr.mxu0 0.0
        %2945 = vmatpush2.msra.mxu0 0.0
        %2946 = vmatprep.subr.mxu0 0.0
        %2947 = vmatpush2.msra.mxu0 0.0
        %2948 = vmatprep.subr.mxu0 0.0
        %2949 = vmatpush2.msra.mxu0 0.0
        %2950 = vmatprep.subr.mxu0 0.0
        %2951 = vmatpush2.msra.mxu0 0.0
        %2952 = vmatprep.subr.mxu0 0.0
        %2953 = vmatpush2.msra.mxu0 0.0
        %2954 = vmatprep.mubr.f32.mxu0 0.0
        %2955 = vmatmul.mubr.f32.gmra.mxu0 %v905
        %v2956 = vpop.f32.mrf.mxu0
        %v2957 = vadd.f32 %v2889, %v2956
        %v2958 = vpop.f32.mrf.mxu0
        %2959 = vmatprep.mubr.f32.mxu0 0.0
        %2960 = vmatmul.mubr.f32.gmra.mxu0 %v908
        %v2961 = vpop.f32.mrf.mxu0
        %v2962 = vadd.f32 %v2889, %v2961
        %v2963 = vpop.f32.mrf.mxu0
        %2964 = vdwg.mxu0
        %s2965 = scalar_lea.vmem %s794, 96
        %v2966 = vld [vmem:[%s2965] sm:$0xff]
        %v2967 = vld [vmem:[%s2965 + $0x8] sm:$0xff]
        %v2968 = vld [vmem:[%s2965 + $0x10] sm:$0xff]
        %v2969 = vld [vmem:[%s2965 + $0x18] sm:$0xff]
        %v2970 = vld [vmem:[%s798 + $0x3] sm:$0x1]
        %v2971 = vlaneseq
        %v2972 = vshrl.u32 %v2971, 7
        %v2973 = vsub.s32 0, %v2972
        %v2974 = vrot.slane %v2970, %v2973
        %2975 = vmatprep.subr.mxu0 0.0
        %2976 = vmatpush1.msra.mxu0 0.0
        %2977 = vmatprep.subr.mxu0 0.0
        %2978 = vmatpush1.msra.mxu0 0.0
        %2979 = vmatprep.subr.mxu0 0.0
        %2980 = vmatpush1.msra.mxu0 0.0
        %2981 = vmatprep.subr.mxu0 0.0
        %2982 = vmatpush1.msra.mxu0 0.0
        %2983 = vmatprep.subr.mxu0 0.0
        %2984 = vmatpush1.msra.mxu0 0.0
        %2985 = vmatprep.subr.mxu0 0.0
        %2986 = vmatpush1.msra.mxu0 0.0
        %2987 = vmatprep.subr.mxu0 0.0
        %2988 = vmatpush1.msra.mxu0 0.0
        %2989 = vmatprep.subr.mxu0 0.0
        %2990 = vmatpush1.msra.mxu0 0.0
        %2991 = vmatprep.subr.mxu0 0.0
        %2992 = vmatpush1.msra.mxu0 0.0
        %2993 = vmatprep.subr.mxu0 0.0
        %2994 = vmatpush1.msra.mxu0 0.0
        %2995 = vmatprep.subr.mxu0 0.0
        %2996 = vmatpush1.msra.mxu0 0.0
        %2997 = vmatprep.subr.mxu0 0.0
        %2998 = vmatpush1.msra.mxu0 0.0
        %2999 = vmatprep.subr.mxu0 0.0
        %3000 = vmatpush1.msra.mxu0 %v2969
        %3001 = vmatprep.subr.mxu0 0.0
        %3002 = vmatpush1.msra.mxu0 %v2968
        %3003 = vmatprep.subr.mxu0 0.0
        %3004 = vmatpush1.msra.mxu0 %v2967
        %3005 = vmatprep.subr.mxu0 0.0
        %3006 = vmatpush1.msra.mxu0 %v2966
        %3007 = vmatprep.subr.mxu0 0.0
        %3008 = vmatpush2.msra.mxu0 0.0
        %3009 = vmatprep.subr.mxu0 0.0
        %3010 = vmatpush2.msra.mxu0 0.0
        %3011 = vmatprep.subr.mxu0 0.0
        %3012 = vmatpush2.msra.mxu0 0.0
        %3013 = vmatprep.subr.mxu0 0.0
        %3014 = vmatpush2.msra.mxu0 0.0
        %3015 = vmatprep.subr.mxu0 0.0
        %3016 = vmatpush2.msra.mxu0 0.0
        %3017 = vmatprep.subr.mxu0 0.0
        %3018 = vmatpush2.msra.mxu0 0.0
        %3019 = vmatprep.subr.mxu0 0.0
        %3020 = vmatpush2.msra.mxu0 0.0
        %3021 = vmatprep.subr.mxu0 0.0
        %3022 = vmatpush2.msra.mxu0 0.0
        %3023 = vmatprep.subr.mxu0 0.0
        %3024 = vmatpush2.msra.mxu0 0.0
        %3025 = vmatprep.subr.mxu0 0.0
        %3026 = vmatpush2.msra.mxu0 0.0
        %3027 = vmatprep.subr.mxu0 0.0
        %3028 = vmatpush2.msra.mxu0 0.0
        %3029 = vmatprep.subr.mxu0 0.0
        %3030 = vmatpush2.msra.mxu0 0.0
        %3031 = vmatprep.subr.mxu0 0.0
        %3032 = vmatpush2.msra.mxu0 0.0
        %3033 = vmatprep.subr.mxu0 0.0
        %3034 = vmatpush2.msra.mxu0 0.0
        %3035 = vmatprep.subr.mxu0 0.0
        %3036 = vmatpush2.msra.mxu0 0.0
        %3037 = vmatprep.subr.mxu0 0.0
        %3038 = vmatpush2.msra.mxu0 0.0
        %3039 = vmatprep.mubr.f32.mxu0 0.0
        %3040 = vmatmul.mubr.f32.gmra.mxu0 %v905
        %v3041 = vpop.f32.mrf.mxu0
        %v3042 = vadd.f32 %v2974, %v3041
        %v3043 = vpop.f32.mrf.mxu0
        %3044 = vmatprep.mubr.f32.mxu0 0.0
        %3045 = vmatmul.mubr.f32.gmra.mxu0 %v908
        %v3046 = vpop.f32.mrf.mxu0
        %v3047 = vadd.f32 %v2974, %v3046
        %v3048 = vpop.f32.mrf.mxu0
        %3049 = vdwg.mxu0
        %s3050 = scalar_lea.vmem %s803, 96
        %v3051 = vld [vmem:[%s3050] sm:$0xff]
        %v3052 = vld [vmem:[%s3050 + $0x8] sm:$0xff]
        %v3053 = vld [vmem:[%s3050 + $0x10] sm:$0xff]
        %v3054 = vld [vmem:[%s3050 + $0x18] sm:$0xff]
        %v3055 = vld [vmem:[%s807 + $0x3] sm:$0x1]
        %v3056 = vlaneseq
        %v3057 = vshrl.u32 %v3056, 7
        %v3058 = vsub.s32 0, %v3057
        %v3059 = vrot.slane %v3055, %v3058
        %3060 = vmatprep.subr.mxu0 0.0
        %3061 = vmatpush1.msra.mxu0 0.0
        %3062 = vmatprep.subr.mxu0 0.0
        %3063 = vmatpush1.msra.mxu0 0.0
        %3064 = vmatprep.subr.mxu0 0.0
        %3065 = vmatpush1.msra.mxu0 0.0
        %3066 = vmatprep.subr.mxu0 0.0
        %3067 = vmatpush1.msra.mxu0 0.0
        %3068 = vmatprep.subr.mxu0 0.0
        %3069 = vmatpush1.msra.mxu0 0.0
        %3070 = vmatprep.subr.mxu0 0.0
        %3071 = vmatpush1.msra.mxu0 0.0
        %3072 = vmatprep.subr.mxu0 0.0
        %3073 = vmatpush1.msra.mxu0 0.0
        %3074 = vmatprep.subr.mxu0 0.0
        %3075 = vmatpush1.msra.mxu0 0.0
        %3076 = vmatprep.subr.mxu0 0.0
        %3077 = vmatpush1.msra.mxu0 0.0
        %3078 = vmatprep.subr.mxu0 0.0
        %3079 = vmatpush1.msra.mxu0 0.0
        %3080 = vmatprep.subr.mxu0 0.0
        %3081 = vmatpush1.msra.mxu0 0.0
        %3082 = vmatprep.subr.mxu0 0.0
        %3083 = vmatpush1.msra.mxu0 0.0
        %3084 = vmatprep.subr.mxu0 0.0
        %3085 = vmatpush1.msra.mxu0 %v3054
        %3086 = vmatprep.subr.mxu0 0.0
        %3087 = vmatpush1.msra.mxu0 %v3053
        %3088 = vmatprep.subr.mxu0 0.0
        %3089 = vmatpush1.msra.mxu0 %v3052
        %3090 = vmatprep.subr.mxu0 0.0
        %3091 = vmatpush1.msra.mxu0 %v3051
        %3092 = vmatprep.subr.mxu0 0.0
        %3093 = vmatpush2.msra.mxu0 0.0
        %3094 = vmatprep.subr.mxu0 0.0
        %3095 = vmatpush2.msra.mxu0 0.0
        %3096 = vmatprep.subr.mxu0 0.0
        %3097 = vmatpush2.msra.mxu0 0.0
        %3098 = vmatprep.subr.mxu0 0.0
        %3099 = vmatpush2.msra.mxu0 0.0
        %3100 = vmatprep.subr.mxu0 0.0
        %3101 = vmatpush2.msra.mxu0 0.0
        %3102 = vmatprep.subr.mxu0 0.0
        %3103 = vmatpush2.msra.mxu0 0.0
        %3104 = vmatprep.subr.mxu0 0.0
        %3105 = vmatpush2.msra.mxu0 0.0
        %3106 = vmatprep.subr.mxu0 0.0
        %3107 = vmatpush2.msra.mxu0 0.0
        %3108 = vmatprep.subr.mxu0 0.0
        %3109 = vmatpush2.msra.mxu0 0.0
        %3110 = vmatprep.subr.mxu0 0.0
        %3111 = vmatpush2.msra.mxu0 0.0
        %3112 = vmatprep.subr.mxu0 0.0
        %3113 = vmatpush2.msra.mxu0 0.0
        %3114 = vmatprep.subr.mxu0 0.0
        %3115 = vmatpush2.msra.mxu0 0.0
        %3116 = vmatprep.subr.mxu0 0.0
        %3117 = vmatpush2.msra.mxu0 0.0
        %3118 = vmatprep.subr.mxu0 0.0
        %3119 = vmatpush2.msra.mxu0 0.0
        %3120 = vmatprep.subr.mxu0 0.0
        %3121 = vmatpush2.msra.mxu0 0.0
        %3122 = vmatprep.subr.mxu0 0.0
        %3123 = vmatpush2.msra.mxu0 0.0
        %3124 = vmatprep.mubr.f32.mxu0 0.0
        %3125 = vmatmul.mubr.f32.gmra.mxu0 %v905
        %v3126 = vpop.f32.mrf.mxu0
        %v3127 = vadd.f32 %v3059, %v3126
        %v3128 = vpop.f32.mrf.mxu0
        %3129 = vmatprep.mubr.f32.mxu0 0.0
        %3130 = vmatmul.mubr.f32.gmra.mxu0 %v908
        %v3131 = vpop.f32.mrf.mxu0
        %v3132 = vadd.f32 %v3059, %v3131
        %v3133 = vpop.f32.mrf.mxu0
        %3134 = vdwg.mxu0
        %v3136 = vsel %vm1153, %v2957, 0
        %v3139 = vsel %vm1153, %v3042, 0
        %3141 = vmatprep.subr.mxu0 0.0
        %3142 = vmatpush1.xpose.msra.mxu0 0.0
        %3143 = vmatprep.subr.mxu0 0.0
        %3144 = vmatpush1.xpose.msra.mxu0 0.0
        %3145 = vmatprep.subr.mxu0 0.0
        %3146 = vmatpush1.xpose.msra.mxu0 0.0
        %3147 = vmatprep.subr.mxu0 0.0
        %3148 = vmatpush1.xpose.msra.mxu0 0.0
        %3149 = vmatprep.subr.mxu0 0.0
        %3150 = vmatpush1.xpose.msra.mxu0 0.0
        %3151 = vmatprep.subr.mxu0 0.0
        %3152 = vmatpush1.xpose.msra.mxu0 0.0
        %3153 = vmatprep.subr.mxu0 0.0
        %3154 = vmatpush1.xpose.msra.mxu0 0.0
        %3155 = vmatprep.subr.mxu0 0.0
        %3156 = vmatpush1.xpose.msra.mxu0 0.0
        %3157 = vmatprep.subr.mxu0 0.0
        %3158 = vmatpush1.xpose.msra.mxu0 0.0
        %3159 = vmatprep.subr.mxu0 0.0
        %3160 = vmatpush1.xpose.msra.mxu0 0.0
        %3161 = vmatprep.subr.mxu0 0.0
        %3162 = vmatpush1.xpose.msra.mxu0 0.0
        %3163 = vmatprep.subr.mxu0 0.0
        %3164 = vmatpush1.xpose.msra.mxu0 0.0
        %3165 = vmatprep.subr.mxu0 0.0
        %3166 = vmatpush1.xpose.msra.mxu0 0.0
        %3167 = vmatprep.subr.mxu0 0.0
        %3168 = vmatpush1.xpose.msra.mxu0 0.0
        %3169 = vmatprep.subr.mxu0 0.0
        %3170 = vmatpush1.xpose.msra.mxu0 0.0
        %3171 = vmatprep.subr.mxu0 0.0
        %3172 = vmatpush1.xpose.msra.mxu0 %v3139
        %3173 = vmatprep.subr.mxu0 0.0
        %3174 = vmatpush2.xpose.msra.mxu0 0.0
        %3175 = vmatprep.subr.mxu0 0.0
        %3176 = vmatpush2.xpose.msra.mxu0 0.0
        %3177 = vmatprep.subr.mxu0 0.0
        %3178 = vmatpush2.xpose.msra.mxu0 0.0
        %3179 = vmatprep.subr.mxu0 0.0
        %3180 = vmatpush2.xpose.msra.mxu0 0.0
        %3181 = vmatprep.subr.mxu0 0.0
        %3182 = vmatpush2.xpose.msra.mxu0 0.0
        %3183 = vmatprep.subr.mxu0 0.0
        %3184 = vmatpush2.xpose.msra.mxu0 0.0
        %3185 = vmatprep.subr.mxu0 0.0
        %3186 = vmatpush2.xpose.msra.mxu0 0.0
        %3187 = vmatprep.subr.mxu0 0.0
        %3188 = vmatpush2.xpose.msra.mxu0 0.0
        %3189 = vmatprep.subr.mxu0 0.0
        %3190 = vmatpush2.xpose.msra.mxu0 0.0
        %3191 = vmatprep.subr.mxu0 0.0
        %3192 = vmatpush2.xpose.msra.mxu0 0.0
        %3193 = vmatprep.subr.mxu0 0.0
        %3194 = vmatpush2.xpose.msra.mxu0 0.0
        %3195 = vmatprep.subr.mxu0 0.0
        %3196 = vmatpush2.xpose.msra.mxu0 0.0
        %3197 = vmatprep.subr.mxu0 0.0
        %3198 = vmatpush2.xpose.msra.mxu0 0.0
        %3199 = vmatprep.subr.mxu0 0.0
        %3200 = vmatpush2.xpose.msra.mxu0 0.0
        %3201 = vmatprep.subr.mxu0 0.0
        %3202 = vmatpush2.xpose.msra.mxu0 0.0
        %3203 = vmatprep.subr.mxu0 0.0
        %3204 = vmatpush2.xpose.msra.mxu0 0.0
        %3205 = vmatprep.mubr.f32.mxu0 0.0
        %3206 = vmatmul.mubr.f32.gmra.mxu0 %v3136
        %v3207 = vpop.f32.mrf.mxu0
        %v3208 = vadd.f32 0.0, %v3207
        %v3209 = vpop.f32.mrf.mxu0
        %3210 = vdwg.mxu0
        %v3212 = vsel %vm1153, %v2962, 0
        %v3215 = vsel %vm1153, %v3047, 0
        %3217 = vmatprep.subr.mxu0 0.0
        %3218 = vmatpush1.xpose.msra.mxu0 0.0
        %3219 = vmatprep.subr.mxu0 0.0
        %3220 = vmatpush1.xpose.msra.mxu0 0.0
        %3221 = vmatprep.subr.mxu0 0.0
        %3222 = vmatpush1.xpose.msra.mxu0 0.0
        %3223 = vmatprep.subr.mxu0 0.0
        %3224 = vmatpush1.xpose.msra.mxu0 0.0
        %3225 = vmatprep.subr.mxu0 0.0
        %3226 = vmatpush1.xpose.msra.mxu0 0.0
        %3227 = vmatprep.subr.mxu0 0.0
        %3228 = vmatpush1.xpose.msra.mxu0 0.0
        %3229 = vmatprep.subr.mxu0 0.0
        %3230 = vmatpush1.xpose.msra.mxu0 0.0
        %3231 = vmatprep.subr.mxu0 0.0
        %3232 = vmatpush1.xpose.msra.mxu0 0.0
        %3233 = vmatprep.subr.mxu0 0.0
        %3234 = vmatpush1.xpose.msra.mxu0 0.0
        %3235 = vmatprep.subr.mxu0 0.0
        %3236 = vmatpush1.xpose.msra.mxu0 0.0
        %3237 = vmatprep.subr.mxu0 0.0
        %3238 = vmatpush1.xpose.msra.mxu0 0.0
        %3239 = vmatprep.subr.mxu0 0.0
        %3240 = vmatpush1.xpose.msra.mxu0 0.0
        %3241 = vmatprep.subr.mxu0 0.0
        %3242 = vmatpush1.xpose.msra.mxu0 0.0
        %3243 = vmatprep.subr.mxu0 0.0
        %3244 = vmatpush1.xpose.msra.mxu0 0.0
        %3245 = vmatprep.subr.mxu0 0.0
        %3246 = vmatpush1.xpose.msra.mxu0 0.0
        %3247 = vmatprep.subr.mxu0 0.0
        %3248 = vmatpush1.xpose.msra.mxu0 %v3215
        %3249 = vmatprep.subr.mxu0 0.0
        %3250 = vmatpush2.xpose.msra.mxu0 0.0
        %3251 = vmatprep.subr.mxu0 0.0
        %3252 = vmatpush2.xpose.msra.mxu0 0.0
        %3253 = vmatprep.subr.mxu0 0.0
        %3254 = vmatpush2.xpose.msra.mxu0 0.0
        %3255 = vmatprep.subr.mxu0 0.0
        %3256 = vmatpush2.xpose.msra.mxu0 0.0
        %3257 = vmatprep.subr.mxu0 0.0
        %3258 = vmatpush2.xpose.msra.mxu0 0.0
        %3259 = vmatprep.subr.mxu0 0.0
        %3260 = vmatpush2.xpose.msra.mxu0 0.0
        %3261 = vmatprep.subr.mxu0 0.0
        %3262 = vmatpush2.xpose.msra.mxu0 0.0
        %3263 = vmatprep.subr.mxu0 0.0
        %3264 = vmatpush2.xpose.msra.mxu0 0.0
        %3265 = vmatprep.subr.mxu0 0.0
        %3266 = vmatpush2.xpose.msra.mxu0 0.0
        %3267 = vmatprep.subr.mxu0 0.0
        %3268 = vmatpush2.xpose.msra.mxu0 0.0
        %3269 = vmatprep.subr.mxu0 0.0
        %3270 = vmatpush2.xpose.msra.mxu0 0.0
        %3271 = vmatprep.subr.mxu0 0.0
        %3272 = vmatpush2.xpose.msra.mxu0 0.0
        %3273 = vmatprep.subr.mxu0 0.0
        %3274 = vmatpush2.xpose.msra.mxu0 0.0
        %3275 = vmatprep.subr.mxu0 0.0
        %3276 = vmatpush2.xpose.msra.mxu0 0.0
        %3277 = vmatprep.subr.mxu0 0.0
        %3278 = vmatpush2.xpose.msra.mxu0 0.0
        %3279 = vmatprep.subr.mxu0 0.0
        %3280 = vmatpush2.xpose.msra.mxu0 0.0
        %3281 = vmatprep.mubr.f32.mxu0 0.0
        %3282 = vmatmul.mubr.f32.gmra.mxu0 %v3212
        %v3283 = vpop.f32.mrf.mxu0
        %v3284 = vadd.f32 0.0, %v3283
        %v3285 = vpop.f32.mrf.mxu0
        %3286 = vdwg.mxu0
        %v3287 = vmul.f32 %v3208, 0.35355338
        %v3288 = vmul.f32 %v3284, 0.35355338
        %v3289 = vsel %vm1153, %v3287, -inf
        %3290 = vmax.xlane.f32.xlu0 %v3289
        %v3291 = vpop.xlane.xlu0 %3290
        %v3292 = vsel %vm1153, %v3288, -inf
        %3293 = vmax.xlane.f32.xlu0 %v3292
        %v3294 = vpop.xlane.xlu0 %3293
        %v3295 = vsub.f32 %v3287, %v3291
        %v3296 = vsub.f32 %v3288, %v3294
        %v3297 = vmul.f32 %v3295, 1.442695
        %v3298 = vpow.pop %v3297
        %v3299 = vmul.f32 %v3296, 1.442695
        %v3300 = vpow.pop %v3299
        %v3301 = vsel %vm1153, %v3298, 0.0
        %3302 = vadd.xlane.f32.xlu0 %v3301
        %v3303 = vpop.xlane.xlu0 %3302
        %v3304 = vsel %vm1153, %v3300, 0.0
        %3305 = vadd.xlane.f32.xlu0 %v3304
        %v3306 = vpop.xlane.xlu0 %3305
        %v3307 = vrcp.pop %v3303
        %v3308 = vmul.f32 %v3298, %v3307
        %v3309 = vrcp.pop %v3306
        %v3310 = vmul.f32 %v3300, %v3309
        %v3312 = vsel %vm1153, %v3308, 0
        %3314 = vmatprep.subr.mxu0 0.0
        %3315 = vmatpush1.msra.mxu0 0.0
        %3316 = vmatprep.subr.mxu0 0.0
        %3317 = vmatpush1.msra.mxu0 0.0
        %3318 = vmatprep.subr.mxu0 0.0
        %3319 = vmatpush1.msra.mxu0 0.0
        %3320 = vmatprep.subr.mxu0 0.0
        %3321 = vmatpush1.msra.mxu0 0.0
        %3322 = vmatprep.subr.mxu0 0.0
        %3323 = vmatpush1.msra.mxu0 0.0
        %3324 = vmatprep.subr.mxu0 0.0
        %3325 = vmatpush1.msra.mxu0 0.0
        %3326 = vmatprep.subr.mxu0 0.0
        %3327 = vmatpush1.msra.mxu0 0.0
        %3328 = vmatprep.subr.mxu0 0.0
        %3329 = vmatpush1.msra.mxu0 0.0
        %3330 = vmatprep.subr.mxu0 0.0
        %3331 = vmatpush1.msra.mxu0 0.0
        %3332 = vmatprep.subr.mxu0 0.0
        %3333 = vmatpush1.msra.mxu0 0.0
        %3334 = vmatprep.subr.mxu0 0.0
        %3335 = vmatpush1.msra.mxu0 0.0
        %3336 = vmatprep.subr.mxu0 0.0
        %3337 = vmatpush1.msra.mxu0 0.0
        %3338 = vmatprep.subr.mxu0 0.0
        %3339 = vmatpush1.msra.mxu0 0.0
        %3340 = vmatprep.subr.mxu0 0.0
        %3341 = vmatpush1.msra.mxu0 0.0
        %3342 = vmatprep.subr.mxu0 0.0
        %3343 = vmatpush1.msra.mxu0 0.0
        %3344 = vmatprep.subr.mxu0 0.0
        %3345 = vmatpush1.msra.mxu0 %v3127
        %3346 = vmatprep.subr.mxu0 0.0
        %3347 = vmatpush2.msra.mxu0 0.0
        %3348 = vmatprep.subr.mxu0 0.0
        %3349 = vmatpush2.msra.mxu0 0.0
        %3350 = vmatprep.subr.mxu0 0.0
        %3351 = vmatpush2.msra.mxu0 0.0
        %3352 = vmatprep.subr.mxu0 0.0
        %3353 = vmatpush2.msra.mxu0 0.0
        %3354 = vmatprep.subr.mxu0 0.0
        %3355 = vmatpush2.msra.mxu0 0.0
        %3356 = vmatprep.subr.mxu0 0.0
        %3357 = vmatpush2.msra.mxu0 0.0
        %3358 = vmatprep.subr.mxu0 0.0
        %3359 = vmatpush2.msra.mxu0 0.0
        %3360 = vmatprep.subr.mxu0 0.0
        %3361 = vmatpush2.msra.mxu0 0.0
        %3362 = vmatprep.subr.mxu0 0.0
        %3363 = vmatpush2.msra.mxu0 0.0
        %3364 = vmatprep.subr.mxu0 0.0
        %3365 = vmatpush2.msra.mxu0 0.0
        %3366 = vmatprep.subr.mxu0 0.0
        %3367 = vmatpush2.msra.mxu0 0.0
        %3368 = vmatprep.subr.mxu0 0.0
        %3369 = vmatpush2.msra.mxu0 0.0
        %3370 = vmatprep.subr.mxu0 0.0
        %3371 = vmatpush2.msra.mxu0 0.0
        %3372 = vmatprep.subr.mxu0 0.0
        %3373 = vmatpush2.msra.mxu0 0.0
        %3374 = vmatprep.subr.mxu0 0.0
        %3375 = vmatpush2.msra.mxu0 0.0
        %3376 = vmatprep.subr.mxu0 0.0
        %3377 = vmatpush2.msra.mxu0 0.0
        %3378 = vmatprep.mubr.f32.mxu0 0.0
        %3379 = vmatmul.mubr.f32.gmra.mxu0 %v3312
        %v3380 = vpop.f32.mrf.mxu0
        %v3381 = vadd.f32 0.0, %v3380
        %v3382 = vpop.f32.mrf.mxu0
        %3383 = vdwg.mxu0
        %v3385 = vsel %vm1153, %v3310, 0
        %3387 = vmatprep.subr.mxu0 0.0
        %3388 = vmatpush1.msra.mxu0 0.0
        %3389 = vmatprep.subr.mxu0 0.0
        %3390 = vmatpush1.msra.mxu0 0.0
        %3391 = vmatprep.subr.mxu0 0.0
        %3392 = vmatpush1.msra.mxu0 0.0
        %3393 = vmatprep.subr.mxu0 0.0
        %3394 = vmatpush1.msra.mxu0 0.0
        %3395 = vmatprep.subr.mxu0 0.0
        %3396 = vmatpush1.msra.mxu0 0.0
        %3397 = vmatprep.subr.mxu0 0.0
        %3398 = vmatpush1.msra.mxu0 0.0
        %3399 = vmatprep.subr.mxu0 0.0
        %3400 = vmatpush1.msra.mxu0 0.0
        %3401 = vmatprep.subr.mxu0 0.0
        %3402 = vmatpush1.msra.mxu0 0.0
        %3403 = vmatprep.subr.mxu0 0.0
        %3404 = vmatpush1.msra.mxu0 0.0
        %3405 = vmatprep.subr.mxu0 0.0
        %3406 = vmatpush1.msra.mxu0 0.0
        %3407 = vmatprep.subr.mxu0 0.0
        %3408 = vmatpush1.msra.mxu0 0.0
        %3409 = vmatprep.subr.mxu0 0.0
        %3410 = vmatpush1.msra.mxu0 0.0
        %3411 = vmatprep.subr.mxu0 0.0
        %3412 = vmatpush1.msra.mxu0 0.0
        %3413 = vmatprep.subr.mxu0 0.0
        %3414 = vmatpush1.msra.mxu0 0.0
        %3415 = vmatprep.subr.mxu0 0.0
        %3416 = vmatpush1.msra.mxu0 0.0
        %3417 = vmatprep.subr.mxu0 0.0
        %3418 = vmatpush1.msra.mxu0 %v3132
        %3419 = vmatprep.subr.mxu0 0.0
        %3420 = vmatpush2.msra.mxu0 0.0
        %3421 = vmatprep.subr.mxu0 0.0
        %3422 = vmatpush2.msra.mxu0 0.0
        %3423 = vmatprep.subr.mxu0 0.0
        %3424 = vmatpush2.msra.mxu0 0.0
        %3425 = vmatprep.subr.mxu0 0.0
        %3426 = vmatpush2.msra.mxu0 0.0
        %3427 = vmatprep.subr.mxu0 0.0
        %3428 = vmatpush2.msra.mxu0 0.0
        %3429 = vmatprep.subr.mxu0 0.0
        %3430 = vmatpush2.msra.mxu0 0.0
        %3431 = vmatprep.subr.mxu0 0.0
        %3432 = vmatpush2.msra.mxu0 0.0
        %3433 = vmatprep.subr.mxu0 0.0
        %3434 = vmatpush2.msra.mxu0 0.0
        %3435 = vmatprep.subr.mxu0 0.0
        %3436 = vmatpush2.msra.mxu0 0.0
        %3437 = vmatprep.subr.mxu0 0.0
        %3438 = vmatpush2.msra.mxu0 0.0
        %3439 = vmatprep.subr.mxu0 0.0
        %3440 = vmatpush2.msra.mxu0 0.0
        %3441 = vmatprep.subr.mxu0 0.0
        %3442 = vmatpush2.msra.mxu0 0.0
        %3443 = vmatprep.subr.mxu0 0.0
        %3444 = vmatpush2.msra.mxu0 0.0
        %3445 = vmatprep.subr.mxu0 0.0
        %3446 = vmatpush2.msra.mxu0 0.0
        %3447 = vmatprep.subr.mxu0 0.0
        %3448 = vmatpush2.msra.mxu0 0.0
        %3449 = vmatprep.subr.mxu0 0.0
        %3450 = vmatpush2.msra.mxu0 0.0
        %3451 = vmatprep.mubr.f32.mxu0 0.0
        %3452 = vmatmul.mubr.f32.gmra.mxu0 %v3385
        %v3453 = vpop.f32.mrf.mxu0
        %v3454 = vadd.f32 0.0, %v3453
        %v3455 = vpop.f32.mrf.mxu0
        %3456 = vdwg.mxu0
        %s3457 = scalar_lea.vmem %s812, 24
        %v3458 = vld [vmem:[%s3457] sm:$0xff]
        %v3460 = vsel %vm1153, %v3381, 0
        %v3463 = vsel %vm1153, %v3454, 0
        %3465 = vmatprep.subr.mxu0 0.0
        %3466 = vmatpush1.msra.mxu0 0.0
        %3467 = vmatprep.subr.mxu0 0.0
        %3468 = vmatpush1.msra.mxu0 0.0
        %3469 = vmatprep.subr.mxu0 0.0
        %3470 = vmatpush1.msra.mxu0 0.0
        %3471 = vmatprep.subr.mxu0 0.0
        %3472 = vmatpush1.msra.mxu0 0.0
        %3473 = vmatprep.subr.mxu0 0.0
        %3474 = vmatpush1.msra.mxu0 0.0
        %3475 = vmatprep.subr.mxu0 0.0
        %3476 = vmatpush1.msra.mxu0 0.0
        %3477 = vmatprep.subr.mxu0 0.0
        %3478 = vmatpush1.msra.mxu0 0.0
        %3479 = vmatprep.subr.mxu0 0.0
        %3480 = vmatpush1.msra.mxu0 0.0
        %3481 = vmatprep.subr.mxu0 0.0
        %3482 = vmatpush1.msra.mxu0 0.0
        %3483 = vmatprep.subr.mxu0 0.0
        %3484 = vmatpush1.msra.mxu0 0.0
        %3485 = vmatprep.subr.mxu0 0.0
        %3486 = vmatpush1.msra.mxu0 0.0
        %3487 = vmatprep.subr.mxu0 0.0
        %3488 = vmatpush1.msra.mxu0 0.0
        %3489 = vmatprep.subr.mxu0 0.0
        %3490 = vmatpush1.msra.mxu0 0.0
        %3491 = vmatprep.subr.mxu0 0.0
        %3492 = vmatpush1.msra.mxu0 0.0
        %3493 = vmatprep.subr.mxu0 0.0
        %3494 = vmatpush1.msra.mxu0 0.0
        %3495 = vmatprep.subr.mxu0 0.0
        %3496 = vmatpush1.msra.mxu0 %v3458
        %3497 = vmatprep.subr.mxu0 0.0
        %3498 = vmatpush2.msra.mxu0 0.0
        %3499 = vmatprep.subr.mxu0 0.0
        %3500 = vmatpush2.msra.mxu0 0.0
        %3501 = vmatprep.subr.mxu0 0.0
        %3502 = vmatpush2.msra.mxu0 0.0
        %3503 = vmatprep.subr.mxu0 0.0
        %3504 = vmatpush2.msra.mxu0 0.0
        %3505 = vmatprep.subr.mxu0 0.0
        %3506 = vmatpush2.msra.mxu0 0.0
        %3507 = vmatprep.subr.mxu0 0.0
        %3508 = vmatpush2.msra.mxu0 0.0
        %3509 = vmatprep.subr.mxu0 0.0
        %3510 = vmatpush2.msra.mxu0 0.0
        %3511 = vmatprep.subr.mxu0 0.0
        %3512 = vmatpush2.msra.mxu0 0.0
        %3513 = vmatprep.subr.mxu0 0.0
        %3514 = vmatpush2.msra.mxu0 0.0
        %3515 = vmatprep.subr.mxu0 0.0
        %3516 = vmatpush2.msra.mxu0 0.0
        %3517 = vmatprep.subr.mxu0 0.0
        %3518 = vmatpush2.msra.mxu0 0.0
        %3519 = vmatprep.subr.mxu0 0.0
        %3520 = vmatpush2.msra.mxu0 0.0
        %3521 = vmatprep.subr.mxu0 0.0
        %3522 = vmatpush2.msra.mxu0 0.0
        %3523 = vmatprep.subr.mxu0 0.0
        %3524 = vmatpush2.msra.mxu0 0.0
        %3525 = vmatprep.subr.mxu0 0.0
        %3526 = vmatpush2.msra.mxu0 0.0
        %3527 = vmatprep.subr.mxu0 0.0
        %3528 = vmatpush2.msra.mxu0 0.0
        %3529 = vmatprep.mubr.f32.mxu0 0.0
        %3530 = vmatmul.mubr.f32.gmra.mxu0 %v3460
        %v3531 = vpop.f32.mrf.mxu0
        %v3532 = vadd.f32 0.0, %v3531
        %v3533 = vpop.f32.mrf.mxu0
        %3534 = vmatprep.mubr.f32.mxu0 0.0
        %3535 = vmatmul.mubr.f32.gmra.mxu0 %v3463
        %v3536 = vpop.f32.mrf.mxu0
        %v3537 = vadd.f32 0.0, %v3536
        %v3538 = vpop.f32.mrf.mxu0
        %3539 = vdwg.mxu0
        %v3540 = vadd.f32 %v2878, %v3532
        %v3541 = vadd.f32 %v2879, %v3537
        %v3542 = vadd.f32 %v847, %v3540
        %v3543 = vadd.f32 %v848, %v3541
        %v3544 = vld [vmem:[%s815] sm:$0x1]
        %v3546 = vlaneseq
        %v3547 = vshrl.u32 %v3546, 7
        %v3548 = vsub.s32 0, %v3547
        %v3549 = vrot.slane %v3544, %v3548
        %v3551 = vadd.f32 %v3542, %v3549
        %v3552 = vadd.f32 %v3543, %v3549
        %v3553 = vld [vmem:[%s818] sm:$0x1]
        %v3554 = vld [vmem:[%s821] sm:$0x1]
        %v3555 = vsel %vm851, %v3551, 0.0
        %3556 = vadd.xlane.f32.xlu0 %v3555
        %v3557 = vpop.xlane.xlu0 %3556
        %v3558 = vsel %vm851, %v3552, 0.0
        %3559 = vadd.xlane.f32.xlu0 %v3558
        %v3560 = vpop.xlane.xlu0 %3559
        %v3561 = vmul.f32 %v3557, %v858
        %v3562 = vmul.f32 %v3560, %v858
        %v3563 = vsub.f32 %v3551, %v3561
        %v3564 = vsub.f32 %v3552, %v3562
        %v3565 = vmul.f32 %v3563, %v3563
        %v3566 = vmul.f32 %v3564, %v3564
        %v3567 = vsel %vm851, %v3565, 0.0
        %3568 = vadd.xlane.f32.xlu0 %v3567
        %v3569 = vpop.xlane.xlu0 %3568
        %v3570 = vsel %vm851, %v3566, 0.0
        %3571 = vadd.xlane.f32.xlu0 %v3570
        %v3572 = vpop.xlane.xlu0 %3571
        %v3573 = vmul.f32 %v3569, %v858
        %v3574 = vmul.f32 %v3572, %v858
        %v3575 = vadd.f32 %v3573, 1e-06
        %v3576 = vadd.f32 %v3574, 1e-06
        %v3577 = vrsqrt.pop %v3575
        %v3578 = vrsqrt.pop %v3576
        %v3579 = vmul.f32 %v3563, %v3577
        %v3580 = vmul.f32 %v3564, %v3578
        %v3582 = vlaneseq
        %v3583 = vshrl.u32 %v3582, 7
        %v3584 = vsub.s32 0, %v3583
        %v3585 = vrot.slane %v3553, %v3584
        %v3587 = vmul.f32 %v3579, %v3585
        %v3588 = vmul.f32 %v3580, %v3585
        %v3590 = vlaneseq
        %v3591 = vshrl.u32 %v3590, 7
        %v3592 = vsub.s32 0, %v3591
        %v3593 = vrot.slane %v3554, %v3592
        %v3595 = vadd.f32 %v3587, %v3593
        %v3596 = vadd.f32 %v3588, %v3593
        %v3597 = vld [vmem:[%s826] sm:$0xff]
        %v3598 = vld [vmem:[%s826 + $0x8] sm:$0xff]
        %v3599 = vld [vmem:[%s826 + $0x10] sm:$0xff]
        %v3600 = vld [vmem:[%s826 + $0x18] sm:$0xff]
        %v3601 = vld [vmem:[%s829] sm:$0x1]
        %v3603 = vlaneseq
        %v3604 = vshrl.u32 %v3603, 7
        %v3605 = vsub.s32 0, %v3604
        %v3606 = vrot.slane %v3601, %v3605
        %v3609 = vsel %vm851, %v3595, 0
        %v3612 = vsel %vm851, %v3596, 0
        %3614 = vmatprep.subr.mxu0 0.0
        %3615 = vmatpush1.msra.mxu0 0.0
        %3616 = vmatprep.subr.mxu0 0.0
        %3617 = vmatpush1.msra.mxu0 0.0
        %3618 = vmatprep.subr.mxu0 0.0
        %3619 = vmatpush1.msra.mxu0 0.0
        %3620 = vmatprep.subr.mxu0 0.0
        %3621 = vmatpush1.msra.mxu0 0.0
        %3622 = vmatprep.subr.mxu0 0.0
        %3623 = vmatpush1.msra.mxu0 0.0
        %3624 = vmatprep.subr.mxu0 0.0
        %3625 = vmatpush1.msra.mxu0 0.0
        %3626 = vmatprep.subr.mxu0 0.0
        %3627 = vmatpush1.msra.mxu0 0.0
        %3628 = vmatprep.subr.mxu0 0.0
        %3629 = vmatpush1.msra.mxu0 0.0
        %3630 = vmatprep.subr.mxu0 0.0
        %3631 = vmatpush1.msra.mxu0 0.0
        %3632 = vmatprep.subr.mxu0 0.0
        %3633 = vmatpush1.msra.mxu0 0.0
        %3634 = vmatprep.subr.mxu0 0.0
        %3635 = vmatpush1.msra.mxu0 0.0
        %3636 = vmatprep.subr.mxu0 0.0
        %3637 = vmatpush1.msra.mxu0 0.0
        %3638 = vmatprep.subr.mxu0 0.0
        %3639 = vmatpush1.msra.mxu0 %v3600
        %3640 = vmatprep.subr.mxu0 0.0
        %3641 = vmatpush1.msra.mxu0 %v3599
        %3642 = vmatprep.subr.mxu0 0.0
        %3643 = vmatpush1.msra.mxu0 %v3598
        %3644 = vmatprep.subr.mxu0 0.0
        %3645 = vmatpush1.msra.mxu0 %v3597
        %3646 = vmatprep.subr.mxu0 0.0
        %3647 = vmatpush2.msra.mxu0 0.0
        %3648 = vmatprep.subr.mxu0 0.0
        %3649 = vmatpush2.msra.mxu0 0.0
        %3650 = vmatprep.subr.mxu0 0.0
        %3651 = vmatpush2.msra.mxu0 0.0
        %3652 = vmatprep.subr.mxu0 0.0
        %3653 = vmatpush2.msra.mxu0 0.0
        %3654 = vmatprep.subr.mxu0 0.0
        %3655 = vmatpush2.msra.mxu0 0.0
        %3656 = vmatprep.subr.mxu0 0.0
        %3657 = vmatpush2.msra.mxu0 0.0
        %3658 = vmatprep.subr.mxu0 0.0
        %3659 = vmatpush2.msra.mxu0 0.0
        %3660 = vmatprep.subr.mxu0 0.0
        %3661 = vmatpush2.msra.mxu0 0.0
        %3662 = vmatprep.subr.mxu0 0.0
        %3663 = vmatpush2.msra.mxu0 0.0
        %3664 = vmatprep.subr.mxu0 0.0
        %3665 = vmatpush2.msra.mxu0 0.0
        %3666 = vmatprep.subr.mxu0 0.0
        %3667 = vmatpush2.msra.mxu0 0.0
        %3668 = vmatprep.subr.mxu0 0.0
        %3669 = vmatpush2.msra.mxu0 0.0
        %3670 = vmatprep.subr.mxu0 0.0
        %3671 = vmatpush2.msra.mxu0 0.0
        %3672 = vmatprep.subr.mxu0 0.0
        %3673 = vmatpush2.msra.mxu0 0.0
        %3674 = vmatprep.subr.mxu0 0.0
        %3675 = vmatpush2.msra.mxu0 0.0
        %3676 = vmatprep.subr.mxu0 0.0
        %3677 = vmatpush2.msra.mxu0 0.0
        %3678 = vmatprep.mubr.f32.mxu0 0.0
        %3679 = vmatmul.mubr.f32.gmra.mxu0 %v3609
        %v3680 = vpop.f32.mrf.mxu0
        %v3681 = vadd.f32 %v3606, %v3680
        %v3682 = vpop.f32.mrf.mxu0
        %3683 = vmatprep.mubr.f32.mxu0 0.0
        %3684 = vmatmul.mubr.f32.gmra.mxu0 %v3612
        %v3685 = vpop.f32.mrf.mxu0
        %v3686 = vadd.f32 %v3606, %v3685
        %v3687 = vpop.f32.mrf.mxu0
        %3688 = vdwg.mxu0
        %v3689 = vmul.f32 %v3681, 0.5
        %v3690 = vmul.f32 %v3686, 0.5
        %v3691 = vmul.f32 %v3681, 0.044715
        %v3692 = vmul.f32 %v3686, 0.044715
        %v3693 = vmul.f32 %v3691, %v3681
        %v3694 = vmul.f32 %v3692, %v3686
        %v3695 = vmul.f32 %v3693, %v3681
        %v3696 = vmul.f32 %v3694, %v3686
        %v3697 = vadd.f32 %v3681, %v3695
        %v3698 = vadd.f32 %v3686, %v3696
        %v3699 = vmul.f32 %v3697, 0.7978846
        %v3700 = vmul.f32 %v3698, 0.7978846
        %v3701 = vtanh.pop %v3699
        %v3702 = vtanh.pop %v3700
        %v3703 = vadd.f32 %v3701, 1.0
        %v3704 = vadd.f32 %v3702, 1.0
        %v3705 = vmul.f32 %v3689, %v3703
        %v3706 = vmul.f32 %v3690, %v3704
        %v3707 = vld [vmem:[%s834] sm:$0xff]
        %v3708 = vld [vmem:[%s834 + $0x8] sm:$0xff]
        %v3709 = vld [vmem:[%s834 + $0x10] sm:$0xff]
        %v3710 = vld [vmem:[%s834 + $0x18] sm:$0xff]
        %v3711 = vld [vmem:[%s834 + $0x20] sm:$0xff]
        %v3712 = vld [vmem:[%s834 + $0x28] sm:$0xff]
        %v3713 = vld [vmem:[%s834 + $0x30] sm:$0xff]
        %v3714 = vld [vmem:[%s834 + $0x38] sm:$0xff]
        %v3715 = vld [vmem:[%s837] sm:$0x1]
        %v3717 = vlaneseq
        %v3718 = vshrl.u32 %v3717, 7
        %v3719 = vsub.s32 0, %v3718
        %v3720 = vrot.slane %v3715, %v3719
        %vm3722 = vcmask 523264
        %v3724 = vsel %vm3722, %v3705, 0
        %v3727 = vsel %vm3722, %v3706, 0
        %3729 = vmatprep.subr.mxu0 0.0
        %3730 = vmatpush1.msra.mxu0 0.0
        %3731 = vmatprep.subr.mxu0 0.0
        %3732 = vmatpush1.msra.mxu0 0.0
        %3733 = vmatprep.subr.mxu0 0.0
        %3734 = vmatpush1.msra.mxu0 0.0
        %3735 = vmatprep.subr.mxu0 0.0
        %3736 = vmatpush1.msra.mxu0 0.0
        %3737 = vmatprep.subr.mxu0 0.0
        %3738 = vmatpush1.msra.mxu0 0.0
        %3739 = vmatprep.subr.mxu0 0.0
        %3740 = vmatpush1.msra.mxu0 0.0
        %3741 = vmatprep.subr.mxu0 0.0
        %3742 = vmatpush1.msra.mxu0 0.0
        %3743 = vmatprep.subr.mxu0 0.0
        %3744 = vmatpush1.msra.mxu0 0.0
        %3745 = vmatprep.subr.mxu0 0.0
        %3746 = vmatpush1.msra.mxu0 %v3714
        %3747 = vmatprep.subr.mxu0 0.0
        %3748 = vmatpush1.msra.mxu0 %v3713
        %3749 = vmatprep.subr.mxu0 0.0
        %3750 = vmatpush1.msra.mxu0 %v3712
        %3751 = vmatprep.subr.mxu0 0.0
        %3752 = vmatpush1.msra.mxu0 %v3711
        %3753 = vmatprep.subr.mxu0 0.0
        %3754 = vmatpush1.msra.mxu0 %v3710
        %3755 = vmatprep.subr.mxu0 0.0
        %3756 = vmatpush1.msra.mxu0 %v3709
        %3757 = vmatprep.subr.mxu0 0.0
        %3758 = vmatpush1.msra.mxu0 %v3708
        %3759 = vmatprep.subr.mxu0 0.0
        %3760 = vmatpush1.msra.mxu0 %v3707
        %3761 = vmatprep.subr.mxu0 0.0
        %3762 = vmatpush2.msra.mxu0 0.0
        %3763 = vmatprep.subr.mxu0 0.0
        %3764 = vmatpush2.msra.mxu0 0.0
        %3765 = vmatprep.subr.mxu0 0.0
        %3766 = vmatpush2.msra.mxu0 0.0
        %3767 = vmatprep.subr.mxu0 0.0
        %3768 = vmatpush2.msra.mxu0 0.0
        %3769 = vmatprep.subr.mxu0 0.0
        %3770 = vmatpush2.msra.mxu0 0.0
        %3771 = vmatprep.subr.mxu0 0.0
        %3772 = vmatpush2.msra.mxu0 0.0
        %3773 = vmatprep.subr.mxu0 0.0
        %3774 = vmatpush2.msra.mxu0 0.0
        %3775 = vmatprep.subr.mxu0 0.0
        %3776 = vmatpush2.msra.mxu0 0.0
        %3777 = vmatprep.subr.mxu0 0.0
        %3778 = vmatpush2.msra.mxu0 0.0
        %3779 = vmatprep.subr.mxu0 0.0
        %3780 = vmatpush2.msra.mxu0 0.0
        %3781 = vmatprep.subr.mxu0 0.0
        %3782 = vmatpush2.msra.mxu0 0.0
        %3783 = vmatprep.subr.mxu0 0.0
        %3784 = vmatpush2.msra.mxu0 0.0
        %3785 = vmatprep.subr.mxu0 0.0
        %3786 = vmatpush2.msra.mxu0 0.0
        %3787 = vmatprep.subr.mxu0 0.0
        %3788 = vmatpush2.msra.mxu0 0.0
        %3789 = vmatprep.subr.mxu0 0.0
        %3790 = vmatpush2.msra.mxu0 0.0
        %3791 = vmatprep.subr.mxu0 0.0
        %3792 = vmatpush2.msra.mxu0 0.0
        %3793 = vmatprep.mubr.f32.mxu0 0.0
        %3794 = vmatmul.mubr.f32.gmra.mxu0 %v3724
        %v3795 = vpop.f32.mrf.mxu0
        %v3796 = vadd.f32 %v3720, %v3795
        %v3797 = vpop.f32.mrf.mxu0
        %3798 = vmatprep.mubr.f32.mxu0 0.0
        %3799 = vmatmul.mubr.f32.gmra.mxu0 %v3727
        %v3800 = vpop.f32.mrf.mxu0
        %v3801 = vadd.f32 %v3720, %v3800
        %v3802 = vpop.f32.mrf.mxu0
        %3803 = vdwg.mxu0
        %v3804 = vadd.f32 %v3551, %v3796
        %v3805 = vadd.f32 %v3552, %v3801
        %p3806 = scmp.lt.s32.totalorder %s31, 1
        // Predicated region
        $region101: #{encoder_forward.1} parent=95 // pred_check
          %p3807 = pneg %p3806
        $region102: #{encoder_forward.1} parent=95 // pred_check_branch
          %3809 = sbr.rel (%p3807) target = $region104
        $region103: #{encoder_forward.1} parent=95 // pred_region
          %3810 = vst.msk [vmem:[#allocation2] sm:$0xff] %vm851, %v3804
          %3811 = vst.msk [vmem:[#allocation2 + $0x8] sm:$0xff] %vm851, %v3805
        $region104: #{encoder_forward.1} parent=95 // pred_fallthru
          _
        %p3812 = scmp.eq.s32.totalorder %s31, 1
        // Predicated region
        $region105: #{encoder_forward.1} parent=95 // pred_check
          %p3813 = pneg %p3812
        $region106: #{encoder_forward.1} parent=95 // pred_check_branch
          %3815 = sbr.rel (%p3813) target = $region108
        $region107: #{encoder_forward.1} parent=95 // pred_region
          %v3816 = vld [vmem:[%s17] sm:$0x1]
          %v3817 = vld [vmem:[%s18] sm:$0x1]
          %v3818 = vsel %vm851, %v3804, 0.0
          %3819 = vadd.xlane.f32.xlu0 %v3818
          %v3820 = vpop.xlane.xlu0 %3819
          %v3821 = vsel %vm851, %v3805, 0.0
          %3822 = vadd.xlane.f32.xlu0 %v3821
          %v3823 = vpop.xlane.xlu0 %3822
          %v3824 = vmul.f32 %v3820, %v858
          %v3825 = vmul.f32 %v3823, %v858
          %v3826 = vsub.f32 %v3804, %v3824
          %v3827 = vsub.f32 %v3805, %v3825
          %v3828 = vmul.f32 %v3826, %v3826
          %v3829 = vmul.f32 %v3827, %v3827
          %v3830 = vsel %vm851, %v3828, 0.0
          %3831 = vadd.xlane.f32.xlu0 %v3830
          %v3832 = vpop.xlane.xlu0 %3831
          %v3833 = vsel %vm851, %v3829, 0.0
          %3834 = vadd.xlane.f32.xlu0 %v3833
          %v3835 = vpop.xlane.xlu0 %3834
          %v3836 = vmul.f32 %v3832, %v858
          %v3837 = vmul.f32 %v3835, %v858
          %v3838 = vadd.f32 %v3836, 1e-06
          %v3839 = vadd.f32 %v3837, 1e-06
          %v3840 = vrsqrt.pop %v3838
          %v3841 = vrsqrt.pop %v3839
          %v3842 = vmul.f32 %v3826, %v3840
          %v3843 = vmul.f32 %v3827, %v3841
          %v3845 = vlaneseq
          %v3846 = vshrl.u32 %v3845, 7
          %v3847 = vsub.s32 0, %v3846
          %v3848 = vrot.slane %v3816, %v3847
          %v3850 = vmul.f32 %v3842, %v3848
          %v3851 = vmul.f32 %v3843, %v3848
          %v3853 = vlaneseq
          %v3854 = vshrl.u32 %v3853, 7
          %v3855 = vsub.s32 0, %v3854
          %v3856 = vrot.slane %v3817, %v3855
          %v3858 = vadd.f32 %v3850, %v3856
          %v3859 = vadd.f32 %v3851, %v3856
          %3860 = vst.msk [vmem:[#allocation2] sm:$0xff] %vm851, %v3858
          %3861 = vst.msk [vmem:[#allocation2 + $0x8] sm:$0xff] %vm851, %v3859
        $region108: #{encoder_forward.1} parent=95 // pred_fallthru
          _
        // Predicated region
        $region109: #{encoder_forward.1} parent=95 // pred_check
          %p3862 = pneg %p523
        $region110: #{encoder_forward.1} parent=95 // pred_check_branch
          %3864 = sbr.rel (%p3862) target = $region112
        $region111: #{encoder_forward.1} parent=95 // pred_region
          %s3866 = ssub.s32 256, 256
          %3867 = vsyncadd [#allocation3], %s3866
          %s3868 = sshll.u32 [#allocation2], 4
          %s3869 = int_to_ptr.vmem [resolvable:$true] %s3868
          %3874 = dma.vmem_to_hbm [thread:$0]  %s3869, 256, %s19, [#allocation3], 128, 128, 8
        $region112: #{encoder_forward.1} parent=95 // pred_fallthru
          _
        // Predicated region
        $region113: #{encoder_forward.1} parent=95 // pred_check
          %p3875 = pneg %p523
        $region114: #{encoder_forward.1} parent=95 // pred_check_branch
          %3877 = sbr.rel (%p3875) target = $region116
        $region115: #{encoder_forward.1} parent=95 // pred_region
          %3878 = dma.done [#allocation3], 256
        $region116: #{encoder_forward.1} parent=95 // pred_fallthru
          _
      $region96: #{encoder_forward.1} parent=5 // pred_fallthru
        _
      %p3879 = scmp.le.s32.totalorder 2, %s26
      // Predicated region
      $region117: #{encoder_forward.1} parent=5 // pred_check
        %p3880 = pneg %p3879
      $region118: #{encoder_forward.1} parent=5 // pred_check_branch
        %3882 = sbr.rel (%p3880) target = $region120
      $region119: #{encoder_forward.1} parent=5 // pred_region
        %s3883 = ssub.s32 %s26, 2
      $region120: #{encoder_forward.1} parent=5 // pred_fallthru
        _
    $region6: #{encoder_forward.1} parent=1 // loop_footer
      %s30 = sadd.s32 1, %s26
    $region7: #{encoder_forward.1} parent=1 // loop_footer_branch
      %25 = sbr.rel target = $region3
    $region8: #{encoder_forward.1} parent=1 // loop_exit
      _
    %3884 = vsyncpa [#allocation3], 1
    %s3885 = scalar_lea.sflag [#allocation3], 1
    %3886 = vsyncpa %s3885, 1

</llo_original>
